<compile_context>
chip_gen: v6e
topology: v6e:2x2x1
jax: 0.10.0
libtpu: 0.0.40
codegen_flags: <defaults>
</compile_context>

<pallas_src>
import math
import functools

import jax
import jax.numpy as jnp
from jax.experimental import pallas as pl
from jax.experimental.pallas import tpu as pltpu

LN_EPS = 1e-5  # PyTorch LayerNorm default eps


def _layer_norm(x, w, b):
    # x: (M, E) f32; w, b: (1, E) -> broadcast over rows
    mu = jnp.mean(x, axis=-1, keepdims=True)
    var = jnp.mean(jnp.square(x - mu), axis=-1, keepdims=True)
    return (x - mu) * jax.lax.rsqrt(var + LN_EPS) * w + b


def encoder_layer_kernel(x_ref,
                         wqkv_ref, bqkv_ref,     # (1, E, 3E) bf16 / (1, 1, 3E) f32
                         wo_ref, bo_ref,         # (1, E, E) bf16 / (1, 1, E) f32
                         ln1w_ref, ln1b_ref,     # (1, 1, E) f32
                         ln2w_ref, ln2b_ref,     # (1, 1, E) f32
                         w1_ref, b1_ref,         # (1, E, F) bf16 / (1, 1, F) f32
                         w2_ref, b2_ref,         # (1, F, E) bf16 / (1, 1, E) f32
                         nw_ref, nb_ref,         # (1, E) f32   (final LayerNorm)
                         o_ref,                  # (M, E) f32   (carried activation)
                         *, num_heads, batch, seq_len):
    H, B, S = num_heads, batch, seq_len
    M, E = x_ref.shape                      # M = B * S (flat token dim)
    Dh = E // H

    l = pl.program_id(0)
    n_layers = pl.num_programs(0)

    # Layer 0: seed the carried activation.  o_ref's block index is constant,
    # so this block stays VMEM-resident across all layer iterations.
    @pl.when(l == 0)
    def _():
        o_ref[...] = x_ref[...]

    x = o_ref[...]                          # (M, E) f32 carry

    # ---- multi-head self-attention --------------------------------------
    # Single fused QKV matmul (scale already folded into the q weights/bias).
    xb = x.astype(jnp.bfloat16)
    qkv = jnp.dot(xb, wqkv_ref[0],
                  preferred_element_type=jnp.float32) + bqkv_ref[0]   # (M, 3E)

    ctx_parts = []
    for h in range(H):                      # static, H=4
        q = qkv[:, h * Dh:(h + 1) * Dh].reshape(B, S, Dh)
        k = qkv[:, E + h * Dh:E + (h + 1) * Dh].reshape(B, S, Dh)
        v = qkv[:, 2 * E + h * Dh:2 * E + (h + 1) * Dh].reshape(B, S, Dh)

        s = jnp.einsum('bqd,bkd->bqk',
                       q.astype(jnp.bfloat16), k.astype(jnp.bfloat16),
                       preferred_element_type=jnp.float32)            # (B, S, S)
        s = s - jnp.max(s, axis=-1, keepdims=True)                    # f32 softmax
        p = jnp.exp(s)
        p = p * pl.reciprocal(jnp.sum(p, axis=-1, keepdims=True), approx=True)
        ctx = jnp.einsum('bqk,bkd->bqd',
                         p.astype(jnp.bfloat16), v.astype(jnp.bfloat16),
                         preferred_element_type=jnp.float32)          # (B, S, Dh)
        ctx_parts.append(ctx.reshape(M, Dh))

    # Head merge: lane concat -> one K=256 output-projection matmul.
    ctx_cat = jnp.concatenate(ctx_parts, axis=-1)                     # (M, E)
    attn = jnp.dot(ctx_cat.astype(jnp.bfloat16), wo_ref[0],
                   preferred_element_type=jnp.float32) + bo_ref[0]    # (M, E)

    # residual + post-LayerNorm (dropout == identity in eval)
    x = _layer_norm(x + attn, ln1w_ref[0], ln1b_ref[0])

    # ---- feed-forward: Linear(E->F) -> ReLU -> Linear(F->E) -------------
    h1 = jnp.dot(x.astype(jnp.bfloat16), w1_ref[0],
                 preferred_element_type=jnp.float32) + b1_ref[0]
    h1 = jnp.maximum(h1, 0.0)
    ff = jnp.dot(h1.astype(jnp.bfloat16), w2_ref[0],
                 preferred_element_type=jnp.float32) + b2_ref[0]
    x = _layer_norm(x + ff, ln2w_ref[0], ln2b_ref[0])

    # ---- write back carry; apply the module's final LayerNorm on the last
    # layer only -----------------------------------------------------------
    @pl.when(l < n_layers - 1)
    def _():
        o_ref[...] = x

    @pl.when(l == n_layers - 1)
    def _():
        o_ref[...] = _layer_norm(x, nw_ref[...], nb_ref[...]).astype(o_ref.dtype)


def _per_layer_spec(tail):
    """BlockSpec selecting layer `l` of a (L, *tail) stacked parameter."""
    nz = len(tail)
    return pl.BlockSpec((1,) + tuple(tail), lambda l, _nz=nz: (l,) + (0,) * _nz)


def _shared_spec(shape):
    """BlockSpec for a parameter shared across all layer iterations."""
    nz = len(shape)
    return pl.BlockSpec(tuple(shape), lambda l, _nz=nz: (0,) * _nz)


def transformer_encoder(x, params, num_heads):
    """x: (B, S, E) float32 -> (B, S, E) float32."""
    B, S, E = x.shape
    M = B * S
    L = params['wqkv'].shape[0]
    F = params['w1'].shape[-1]

    kernel = functools.partial(encoder_layer_kernel,
                               num_heads=num_heads, batch=B, seq_len=S)

    in_specs = [
        _shared_spec((M, E)),                                   # x
        _per_layer_spec((E, 3 * E)), _per_layer_spec((1, 3 * E)),   # wqkv, bqkv
        _per_layer_spec((E, E)), _per_layer_spec((1, E)),            # wo, bo
        _per_layer_spec((1, E)), _per_layer_spec((1, E)),            # ln1 w, b
        _per_layer_spec((1, E)), _per_layer_spec((1, E)),            # ln2 w, b
        _per_layer_spec((E, F)), _per_layer_spec((1, F)),            # w1, b1
        _per_layer_spec((F, E)), _per_layer_spec((1, E)),            # w2, b2
        _shared_spec((1, E)), _shared_spec((1, E)),                  # final norm w, b
    ]

    out = pl.pallas_call(
        kernel,
        grid=(L,),
        out_shape=jax.ShapeDtypeStruct((M, E), x.dtype),
        in_specs=in_specs,
        out_specs=_shared_spec((M, E)),
        compiler_params=pltpu.CompilerParams(
            dimension_semantics=("arbitrary",)),
    )(x.reshape(M, E),
      params['wqkv'], params['bqkv'], params['wo'], params['bo'],
      params['ln1_w'], params['ln1_b'], params['ln2_w'], params['ln2_b'],
      params['w1'], params['b1'], params['w2'], params['b2'],
      params['norm_w'], params['norm_b'])
    return out.reshape(B, S, E)


def init_params(key, embed_dim, num_heads, num_layers, dim_ff):
    """Synthetic PyTorch-shaped parameters, converted to the kernel layout."""
    E, H, F = embed_dim, num_heads, dim_ff
    Dh = E // H
    scale = 1.0 / math.sqrt(Dh)

    def pt_w(k, out_f, in_f, s=0.02):
        return s * jax.random.normal(k, (out_f, in_f), dtype=jnp.float32)

    def pt_b(k, n, s=0.02):
        return s * jax.random.normal(k, (n,), dtype=jnp.float32)

    acc = {k: [] for k in ('wqkv', 'bqkv', 'wo', 'bo', 'ln1_w', 'ln1_b',
                           'ln2_w', 'ln2_b', 'w1', 'b1', 'w2', 'b2')}
    for i in range(num_layers):
        ks = jax.random.split(jax.random.fold_in(key, i), 8)
        in_w = pt_w(ks[0], 3 * E, E)          # MHA in_proj_weight (3E, E)
        in_b = pt_b(ks[1], 3 * E)
        out_w = pt_w(ks[2], E, E)             # MHA out_proj.weight (E, E)
        out_b = pt_b(ks[3], E)
        l1_w = pt_w(ks[4], F, E)              # linear1.weight (F, E)
        l1_b = pt_b(ks[5], F)
        l2_w = pt_w(ks[6], E, F)              # linear2.weight (E, F)
        l2_b = pt_b(ks[7], E)

        # Fold the 1/sqrt(Dh) attention scale into the q part of the weights.
        in_w_scaled = jnp.concatenate([in_w[:E] * scale, in_w[E:]], axis=0)
        in_b_scaled = jnp.concatenate([in_b[:E] * scale, in_b[E:]], axis=0)

        acc['wqkv'].append(jnp.transpose(in_w_scaled).astype(jnp.bfloat16))  # (E, 3E)
        acc['bqkv'].append(in_b_scaled.reshape(1, 3 * E))
        acc['wo'].append(jnp.transpose(out_w).astype(jnp.bfloat16))          # (E, E)
        acc['bo'].append(out_b.reshape(1, E))
        acc['ln1_w'].append(jnp.ones((1, E), jnp.float32))
        acc['ln1_b'].append(jnp.zeros((1, E), jnp.float32))
        acc['ln2_w'].append(jnp.ones((1, E), jnp.float32))
        acc['ln2_b'].append(jnp.zeros((1, E), jnp.float32))
        acc['w1'].append(jnp.transpose(l1_w).astype(jnp.bfloat16))           # (E, F)
        acc['b1'].append(l1_b.reshape(1, F))
        acc['w2'].append(jnp.transpose(l2_w).astype(jnp.bfloat16))           # (F, E)
        acc['b2'].append(l2_b.reshape(1, E))

    params = {k: jnp.stack(v, axis=0) for k, v in acc.items()}
    params['norm_w'] = jnp.ones((1, E), jnp.float32)
    params['norm_b'] = jnp.zeros((1, E), jnp.float32)
    return params


if __name__ == "__main__":
    # Module defaults: embed_dim=256 (lane-dense), nhead=4, num_layers=3,
    # dim_feedforward=512.  Small token count: B=2, S=8.
    B, S = 2, 8
    EMBED_DIM, NUM_HEADS, NUM_LAYERS, DIM_FF = 256, 4, 3, 512

    key = jax.random.PRNGKey(0)
    kx, kp = jax.random.split(key)
    x = jax.random.normal(kx, (B, S, EMBED_DIM), dtype=jnp.float32)
    params = init_params(kp, EMBED_DIM, NUM_HEADS, NUM_LAYERS, DIM_FF)

    out = transformer_encoder(x, params, NUM_HEADS)
    out = jax.block_until_ready(out)
    assert out.shape == (B, S, EMBED_DIM)
    assert bool(jnp.all(jnp.isfinite(out)))
    print("KERNEL_OK")
</pallas_src>

<mosaic_0001>
module attributes {stable_mosaic.version = 11 : i64} {
  func.func @encoder_layer_kernel(%arg0: i32, %arg1: memref<16x256xf32, #tpu.memory_space<vmem>>, %arg2: memref<1x256x768xbf16, #tpu.memory_space<vmem>>, %arg3: memref<1x1x768xf32, #tpu.memory_space<vmem>>, %arg4: memref<1x256x256xbf16, #tpu.memory_space<vmem>>, %arg5: memref<1x1x256xf32, #tpu.memory_space<vmem>>, %arg6: memref<1x1x256xf32, #tpu.memory_space<vmem>>, %arg7: memref<1x1x256xf32, #tpu.memory_space<vmem>>, %arg8: memref<1x1x256xf32, #tpu.memory_space<vmem>>, %arg9: memref<1x1x256xf32, #tpu.memory_space<vmem>>, %arg10: memref<1x256x512xbf16, #tpu.memory_space<vmem>>, %arg11: memref<1x1x512xf32, #tpu.memory_space<vmem>>, %arg12: memref<1x512x256xbf16, #tpu.memory_space<vmem>>, %arg13: memref<1x1x256xf32, #tpu.memory_space<vmem>>, %arg14: memref<1x256xf32, #tpu.memory_space<vmem>>, %arg15: memref<1x256xf32, #tpu.memory_space<vmem>>, %arg16: memref<16x256xf32, #tpu.memory_space<vmem>>) attributes {dimension_semantics = [#tpu.dimension_semantics<arbitrary>], iteration_bounds = array<i64: 3>, scalar_prefetch = 0 : i64, scratch_operands = 0 : i64, tpu.core_type = #tpu.core_type<tc>, window_params = [{pipeline_mode = #tpu.pipeline_mode<synchronous>, transform_indices = @transform_0, window_bounds = array<i64: 16, 256>}, {transform_indices = @transform_1, window_bounds = array<i64: 1, 256, 768>}, {transform_indices = @transform_2, window_bounds = array<i64: 1, 1, 768>}, {transform_indices = @transform_3, window_bounds = array<i64: 1, 256, 256>}, {transform_indices = @transform_4, window_bounds = array<i64: 1, 1, 256>}, {transform_indices = @transform_5, window_bounds = array<i64: 1, 1, 256>}, {transform_indices = @transform_6, window_bounds = array<i64: 1, 1, 256>}, {transform_indices = @transform_7, window_bounds = array<i64: 1, 1, 256>}, {transform_indices = @transform_8, window_bounds = array<i64: 1, 1, 256>}, {transform_indices = @transform_9, window_bounds = array<i64: 1, 256, 512>}, {transform_indices = @transform_10, window_bounds = array<i64: 1, 1, 512>}, {transform_indices = @transform_11, window_bounds = array<i64: 1, 512, 256>}, {transform_indices = @transform_12, window_bounds = array<i64: 1, 1, 256>}, {pipeline_mode = #tpu.pipeline_mode<synchronous>, transform_indices = @transform_13, window_bounds = array<i64: 1, 256>}, {pipeline_mode = #tpu.pipeline_mode<synchronous>, transform_indices = @transform_14, window_bounds = array<i64: 1, 256>}, {pipeline_mode = #tpu.pipeline_mode<synchronous>, transform_indices = @transform_15, window_bounds = array<i64: 16, 256>}]} {
    %c0_i32 = arith.constant 0 : i32
    %0 = arith.cmpi eq, %arg0, %c0_i32 : i32
    %1 = arith.extui %0 : i1 to i32
    %c0_i32_0 = arith.constant 0 : i32
    %2 = arith.cmpi ne, %1, %c0_i32_0 : i32
    scf.if %2 {
      %c0_71 = arith.constant 0 : index
      %c0_72 = arith.constant 0 : index
      %191 = vector.load %arg1[%c0_71, %c0_72] : memref<16x256xf32, #tpu.memory_space<vmem>>, vector<16x256xf32>
      %c0_73 = arith.constant 0 : index
      %c0_74 = arith.constant 0 : index
      %192 = vector.load %arg16[%c0_73, %c0_74] : memref<16x256xf32, #tpu.memory_space<vmem>>, vector<16x256xf32>
      tpu.vector_store %arg16[%c0_73, %c0_74], %191 {strides = array<i32>} : memref<16x256xf32, #tpu.memory_space<vmem>>, vector<16x256xf32>,
    } else {
    }
    %c0 = arith.constant 0 : index
    %c0_1 = arith.constant 0 : index
    %3 = vector.load %arg16[%c0, %c0_1] : memref<16x256xf32, #tpu.memory_space<vmem>>, vector<16x256xf32>
    %4 = arith.truncf %3 : vector<16x256xf32> to vector<16x256xbf16>
    %c0_2 = arith.constant 0 : index
    %c0_3 = arith.constant 0 : index
    %c0_4 = arith.constant 0 : index
    %5 = vector.load %arg2[%c0_2, %c0_3, %c0_4] : memref<1x256x768xbf16, #tpu.memory_space<vmem>>, vector<1x256x768xbf16>
    %6 = vector.shape_cast %5 : vector<1x256x768xbf16> to vector<256x768xbf16>
    %cst = arith.constant dense<0.000000e+00> : vector<16x768xf32>
    %7 = tpu.matmul %4, %6, %cst {dimension_numbers = #tpu.dot_dimension_numbers<[1], [0], [0], [1], [0, 0, 1, 1], [], []>} : vector<16x256xbf16>, vector<256x768xbf16>, vector<16x768xf32> -> vector<16x768xf32>
    %c0_5 = arith.constant 0 : index
    %c0_6 = arith.constant 0 : index
    %c0_7 = arith.constant 0 : index
    %8 = vector.load %arg3[%c0_5, %c0_6, %c0_7] : memref<1x1x768xf32, #tpu.memory_space<vmem>>, vector<1x1x768xf32>
    %9 = vector.shape_cast %8 : vector<1x1x768xf32> to vector<1x768xf32>
    %10 = vector.broadcast %9 : vector<1x768xf32> to vector<16x768xf32>
    %11 = arith.addf %7, %10 : vector<16x768xf32>
    %12 = vector.extract_strided_slice %11 {offsets = [0, 0], sizes = [16, 64], strides = [1, 1]} : vector<16x768xf32> to vector<16x64xf32>
    %13 = vector.shape_cast %12 : vector<16x64xf32> to vector<2x8x64xf32>
    %14 = vector.extract_strided_slice %11 {offsets = [0, 256], sizes = [16, 64], strides = [1, 1]} : vector<16x768xf32> to vector<16x64xf32>
    %15 = vector.shape_cast %14 : vector<16x64xf32> to vector<2x8x64xf32>
    %16 = vector.extract_strided_slice %11 {offsets = [0, 512], sizes = [16, 64], strides = [1, 1]} : vector<16x768xf32> to vector<16x64xf32>
    %17 = vector.shape_cast %16 : vector<16x64xf32> to vector<2x8x64xf32>
    %18 = arith.truncf %13 : vector<2x8x64xf32> to vector<2x8x64xbf16>
    %19 = arith.truncf %15 : vector<2x8x64xf32> to vector<2x8x64xbf16>
    "tpu.trace_start"() <{level = 10 : i32, message = "bqd,bkd->bqk"}> : () -> ()
    %cst_8 = arith.constant dense<0.000000e+00> : vector<2x8x8xf32>
    %20 = tpu.matmul %18, %19, %cst_8 {dimension_numbers = #tpu.dot_dimension_numbers<[2], [2], [1], [1], [0, 0, 0, 1, 1, 1], [0], [0]>} : vector<2x8x64xbf16>, vector<2x8x64xbf16>, vector<2x8x8xf32> -> vector<2x8x8xf32>
    "tpu.trace_stop"() : () -> ()
    %cst_9 = arith.constant dense<0xFF800000> : vector<2x8xf32>
    %21 = vector.multi_reduction <maximumf>, %20, %cst_9 [2] : vector<2x8x8xf32> to vector<2x8xf32>
    %22 = vector.shape_cast %21 : vector<2x8xf32> to vector<2x8x1xf32>
    %23 = vector.broadcast %22 : vector<2x8x1xf32> to vector<2x8x8xf32>
    %24 = arith.subf %20, %23 : vector<2x8x8xf32>
    %25 = math.exp %24 : vector<2x8x8xf32>
    %cst_10 = arith.constant dense<0.000000e+00> : vector<2x8xf32>
    %26 = vector.multi_reduction <add>, %25, %cst_10 [2] : vector<2x8x8xf32> to vector<2x8xf32>
    %27 = vector.shape_cast %26 : vector<2x8xf32> to vector<2x8x1xf32>
    %28 = tpu.reciprocal %27 {approx = true} : vector<2x8x1xf32> -> vector<2x8x1xf32>
    %29 = vector.broadcast %28 : vector<2x8x1xf32> to vector<2x8x8xf32>
    %30 = arith.mulf %25, %29 : vector<2x8x8xf32>
    %31 = arith.truncf %30 : vector<2x8x8xf32> to vector<2x8x8xbf16>
    %32 = arith.truncf %17 : vector<2x8x64xf32> to vector<2x8x64xbf16>
    "tpu.trace_start"() <{level = 10 : i32, message = "bqk,bkd->bqd"}> : () -> ()
    %cst_11 = arith.constant dense<0.000000e+00> : vector<2x8x64xf32>
    %33 = tpu.matmul %31, %32, %cst_11 {dimension_numbers = #tpu.dot_dimension_numbers<[2], [1], [1], [2], [0, 0, 0, 1, 1, 2], [0], [0]>} : vector<2x8x8xbf16>, vector<2x8x64xbf16>, vector<2x8x64xf32> -> vector<2x8x64xf32>
    "tpu.trace_stop"() : () -> ()
    %34 = vector.shape_cast %33 : vector<2x8x64xf32> to vector<16x64xf32>
    %35 = vector.extract_strided_slice %11 {offsets = [0, 64], sizes = [16, 64], strides = [1, 1]} : vector<16x768xf32> to vector<16x64xf32>
    %36 = vector.shape_cast %35 : vector<16x64xf32> to vector<2x8x64xf32>
    %37 = vector.extract_strided_slice %11 {offsets = [0, 320], sizes = [16, 64], strides = [1, 1]} : vector<16x768xf32> to vector<16x64xf32>
    %38 = vector.shape_cast %37 : vector<16x64xf32> to vector<2x8x64xf32>
    %39 = vector.extract_strided_slice %11 {offsets = [0, 576], sizes = [16, 64], strides = [1, 1]} : vector<16x768xf32> to vector<16x64xf32>
    %40 = vector.shape_cast %39 : vector<16x64xf32> to vector<2x8x64xf32>
    %41 = arith.truncf %36 : vector<2x8x64xf32> to vector<2x8x64xbf16>
    %42 = arith.truncf %38 : vector<2x8x64xf32> to vector<2x8x64xbf16>
    "tpu.trace_start"() <{level = 10 : i32, message = "bqd,bkd->bqk"}> : () -> ()
    %cst_12 = arith.constant dense<0.000000e+00> : vector<2x8x8xf32>
    %43 = tpu.matmul %41, %42, %cst_12 {dimension_numbers = #tpu.dot_dimension_numbers<[2], [2], [1], [1], [0, 0, 0, 1, 1, 1], [0], [0]>} : vector<2x8x64xbf16>, vector<2x8x64xbf16>, vector<2x8x8xf32> -> vector<2x8x8xf32>
    "tpu.trace_stop"() : () -> ()
    %cst_13 = arith.constant dense<0xFF800000> : vector<2x8xf32>
    %44 = vector.multi_reduction <maximumf>, %43, %cst_13 [2] : vector<2x8x8xf32> to vector<2x8xf32>
    %45 = vector.shape_cast %44 : vector<2x8xf32> to vector<2x8x1xf32>
    %46 = vector.broadcast %45 : vector<2x8x1xf32> to vector<2x8x8xf32>
    %47 = arith.subf %43, %46 : vector<2x8x8xf32>
    %48 = math.exp %47 : vector<2x8x8xf32>
    %cst_14 = arith.constant dense<0.000000e+00> : vector<2x8xf32>
    %49 = vector.multi_reduction <add>, %48, %cst_14 [2] : vector<2x8x8xf32> to vector<2x8xf32>
    %50 = vector.shape_cast %49 : vector<2x8xf32> to vector<2x8x1xf32>
    %51 = tpu.reciprocal %50 {approx = true} : vector<2x8x1xf32> -> vector<2x8x1xf32>
    %52 = vector.broadcast %51 : vector<2x8x1xf32> to vector<2x8x8xf32>
    %53 = arith.mulf %48, %52 : vector<2x8x8xf32>
    %54 = arith.truncf %53 : vector<2x8x8xf32> to vector<2x8x8xbf16>
    %55 = arith.truncf %40 : vector<2x8x64xf32> to vector<2x8x64xbf16>
    "tpu.trace_start"() <{level = 10 : i32, message = "bqk,bkd->bqd"}> : () -> ()
    %cst_15 = arith.constant dense<0.000000e+00> : vector<2x8x64xf32>
    %56 = tpu.matmul %54, %55, %cst_15 {dimension_numbers = #tpu.dot_dimension_numbers<[2], [1], [1], [2], [0, 0, 0, 1, 1, 2], [0], [0]>} : vector<2x8x8xbf16>, vector<2x8x64xbf16>, vector<2x8x64xf32> -> vector<2x8x64xf32>
    "tpu.trace_stop"() : () -> ()
    %57 = vector.shape_cast %56 : vector<2x8x64xf32> to vector<16x64xf32>
    %58 = vector.extract_strided_slice %11 {offsets = [0, 128], sizes = [16, 64], strides = [1, 1]} : vector<16x768xf32> to vector<16x64xf32>
    %59 = vector.shape_cast %58 : vector<16x64xf32> to vector<2x8x64xf32>
    %60 = vector.extract_strided_slice %11 {offsets = [0, 384], sizes = [16, 64], strides = [1, 1]} : vector<16x768xf32> to vector<16x64xf32>
    %61 = vector.shape_cast %60 : vector<16x64xf32> to vector<2x8x64xf32>
    %62 = vector.extract_strided_slice %11 {offsets = [0, 640], sizes = [16, 64], strides = [1, 1]} : vector<16x768xf32> to vector<16x64xf32>
    %63 = vector.shape_cast %62 : vector<16x64xf32> to vector<2x8x64xf32>
    %64 = arith.truncf %59 : vector<2x8x64xf32> to vector<2x8x64xbf16>
    %65 = arith.truncf %61 : vector<2x8x64xf32> to vector<2x8x64xbf16>
    "tpu.trace_start"() <{level = 10 : i32, message = "bqd,bkd->bqk"}> : () -> ()
    %cst_16 = arith.constant dense<0.000000e+00> : vector<2x8x8xf32>
    %66 = tpu.matmul %64, %65, %cst_16 {dimension_numbers = #tpu.dot_dimension_numbers<[2], [2], [1], [1], [0, 0, 0, 1, 1, 1], [0], [0]>} : vector<2x8x64xbf16>, vector<2x8x64xbf16>, vector<2x8x8xf32> -> vector<2x8x8xf32>
    "tpu.trace_stop"() : () -> ()
    %cst_17 = arith.constant dense<0xFF800000> : vector<2x8xf32>
    %67 = vector.multi_reduction <maximumf>, %66, %cst_17 [2] : vector<2x8x8xf32> to vector<2x8xf32>
    %68 = vector.shape_cast %67 : vector<2x8xf32> to vector<2x8x1xf32>
    %69 = vector.broadcast %68 : vector<2x8x1xf32> to vector<2x8x8xf32>
    %70 = arith.subf %66, %69 : vector<2x8x8xf32>
    %71 = math.exp %70 : vector<2x8x8xf32>
    %cst_18 = arith.constant dense<0.000000e+00> : vector<2x8xf32>
    %72 = vector.multi_reduction <add>, %71, %cst_18 [2] : vector<2x8x8xf32> to vector<2x8xf32>
    %73 = vector.shape_cast %72 : vector<2x8xf32> to vector<2x8x1xf32>
    %74 = tpu.reciprocal %73 {approx = true} : vector<2x8x1xf32> -> vector<2x8x1xf32>
    %75 = vector.broadcast %74 : vector<2x8x1xf32> to vector<2x8x8xf32>
    %76 = arith.mulf %71, %75 : vector<2x8x8xf32>
    %77 = arith.truncf %76 : vector<2x8x8xf32> to vector<2x8x8xbf16>
    %78 = arith.truncf %63 : vector<2x8x64xf32> to vector<2x8x64xbf16>
    "tpu.trace_start"() <{level = 10 : i32, message = "bqk,bkd->bqd"}> : () -> ()
    %cst_19 = arith.constant dense<0.000000e+00> : vector<2x8x64xf32>
    %79 = tpu.matmul %77, %78, %cst_19 {dimension_numbers = #tpu.dot_dimension_numbers<[2], [1], [1], [2], [0, 0, 0, 1, 1, 2], [0], [0]>} : vector<2x8x8xbf16>, vector<2x8x64xbf16>, vector<2x8x64xf32> -> vector<2x8x64xf32>
    "tpu.trace_stop"() : () -> ()
    %80 = vector.shape_cast %79 : vector<2x8x64xf32> to vector<16x64xf32>
    %81 = vector.extract_strided_slice %11 {offsets = [0, 192], sizes = [16, 64], strides = [1, 1]} : vector<16x768xf32> to vector<16x64xf32>
    %82 = vector.shape_cast %81 : vector<16x64xf32> to vector<2x8x64xf32>
    %83 = vector.extract_strided_slice %11 {offsets = [0, 448], sizes = [16, 64], strides = [1, 1]} : vector<16x768xf32> to vector<16x64xf32>
    %84 = vector.shape_cast %83 : vector<16x64xf32> to vector<2x8x64xf32>
    %85 = vector.extract_strided_slice %11 {offsets = [0, 704], sizes = [16, 64], strides = [1, 1]} : vector<16x768xf32> to vector<16x64xf32>
    %86 = vector.shape_cast %85 : vector<16x64xf32> to vector<2x8x64xf32>
    %87 = arith.truncf %82 : vector<2x8x64xf32> to vector<2x8x64xbf16>
    %88 = arith.truncf %84 : vector<2x8x64xf32> to vector<2x8x64xbf16>
    "tpu.trace_start"() <{level = 10 : i32, message = "bqd,bkd->bqk"}> : () -> ()
    %cst_20 = arith.constant dense<0.000000e+00> : vector<2x8x8xf32>
    %89 = tpu.matmul %87, %88, %cst_20 {dimension_numbers = #tpu.dot_dimension_numbers<[2], [2], [1], [1], [0, 0, 0, 1, 1, 1], [0], [0]>} : vector<2x8x64xbf16>, vector<2x8x64xbf16>, vector<2x8x8xf32> -> vector<2x8x8xf32>
    "tpu.trace_stop"() : () -> ()
    %cst_21 = arith.constant dense<0xFF800000> : vector<2x8xf32>
    %90 = vector.multi_reduction <maximumf>, %89, %cst_21 [2] : vector<2x8x8xf32> to vector<2x8xf32>
    %91 = vector.shape_cast %90 : vector<2x8xf32> to vector<2x8x1xf32>
    %92 = vector.broadcast %91 : vector<2x8x1xf32> to vector<2x8x8xf32>
    %93 = arith.subf %89, %92 : vector<2x8x8xf32>
    %94 = math.exp %93 : vector<2x8x8xf32>
    %cst_22 = arith.constant dense<0.000000e+00> : vector<2x8xf32>
    %95 = vector.multi_reduction <add>, %94, %cst_22 [2] : vector<2x8x8xf32> to vector<2x8xf32>
    %96 = vector.shape_cast %95 : vector<2x8xf32> to vector<2x8x1xf32>
    %97 = tpu.reciprocal %96 {approx = true} : vector<2x8x1xf32> -> vector<2x8x1xf32>
    %98 = vector.broadcast %97 : vector<2x8x1xf32> to vector<2x8x8xf32>
    %99 = arith.mulf %94, %98 : vector<2x8x8xf32>
    %100 = arith.truncf %99 : vector<2x8x8xf32> to vector<2x8x8xbf16>
    %101 = arith.truncf %86 : vector<2x8x64xf32> to vector<2x8x64xbf16>
    "tpu.trace_start"() <{level = 10 : i32, message = "bqk,bkd->bqd"}> : () -> ()
    %cst_23 = arith.constant dense<0.000000e+00> : vector<2x8x64xf32>
    %102 = tpu.matmul %100, %101, %cst_23 {dimension_numbers = #tpu.dot_dimension_numbers<[2], [1], [1], [2], [0, 0, 0, 1, 1, 2], [0], [0]>} : vector<2x8x8xbf16>, vector<2x8x64xbf16>, vector<2x8x64xf32> -> vector<2x8x64xf32>
    "tpu.trace_stop"() : () -> ()
    %103 = vector.shape_cast %102 : vector<2x8x64xf32> to vector<16x64xf32>
    %104 = tpu.concatenate %34, %57, %80, %103 in 1 : vector<16x64xf32>, vector<16x64xf32>, vector<16x64xf32>, vector<16x64xf32> -> vector<16x256xf32>
    %105 = arith.truncf %104 : vector<16x256xf32> to vector<16x256xbf16>
    %c0_24 = arith.constant 0 : index
    %c0_25 = arith.constant 0 : index
    %c0_26 = arith.constant 0 : index
    %106 = vector.load %arg4[%c0_24, %c0_25, %c0_26] : memref<1x256x256xbf16, #tpu.memory_space<vmem>>, vector<1x256x256xbf16>
    %107 = vector.shape_cast %106 : vector<1x256x256xbf16> to vector<256x256xbf16>
    %cst_27 = arith.constant dense<0.000000e+00> : vector<16x256xf32>
    %108 = tpu.matmul %105, %107, %cst_27 {dimension_numbers = #tpu.dot_dimension_numbers<[1], [0], [0], [1], [0, 0, 1, 1], [], []>} : vector<16x256xbf16>, vector<256x256xbf16>, vector<16x256xf32> -> vector<16x256xf32>
    %c0_28 = arith.constant 0 : index
    %c0_29 = arith.constant 0 : index
    %c0_30 = arith.constant 0 : index
    %109 = vector.load %arg5[%c0_28, %c0_29, %c0_30] : memref<1x1x256xf32, #tpu.memory_space<vmem>>, vector<1x1x256xf32>
    %110 = vector.shape_cast %109 : vector<1x1x256xf32> to vector<1x256xf32>
    %111 = vector.broadcast %110 : vector<1x256xf32> to vector<16x256xf32>
    %112 = arith.addf %108, %111 : vector<16x256xf32>
    %113 = arith.addf %3, %112 : vector<16x256xf32>
    %c0_31 = arith.constant 0 : index
    %c0_32 = arith.constant 0 : index
    %c0_33 = arith.constant 0 : index
    %114 = vector.load %arg6[%c0_31, %c0_32, %c0_33] : memref<1x1x256xf32, #tpu.memory_space<vmem>>, vector<1x1x256xf32>
    %115 = vector.shape_cast %114 : vector<1x1x256xf32> to vector<1x256xf32>
    %c0_34 = arith.constant 0 : index
    %c0_35 = arith.constant 0 : index
    %c0_36 = arith.constant 0 : index
    %116 = vector.load %arg7[%c0_34, %c0_35, %c0_36] : memref<1x1x256xf32, #tpu.memory_space<vmem>>, vector<1x1x256xf32>
    %117 = vector.shape_cast %116 : vector<1x1x256xf32> to vector<1x256xf32>
    %cst_37 = arith.constant dense<0.000000e+00> : vector<16xf32>
    %118 = vector.multi_reduction <add>, %113, %cst_37 [1] : vector<16x256xf32> to vector<16xf32>
    %119 = vector.shape_cast %118 : vector<16xf32> to vector<16x1xf32>
    %cst_38 = arith.constant 2.560000e+02 : f32
    %120 = vector.broadcast %cst_38 : f32 to vector<16x1xf32>
    %121 = arith.divf %119, %120 : vector<16x1xf32>
    %122 = vector.broadcast %121 : vector<16x1xf32> to vector<16x256xf32>
    %123 = arith.subf %113, %122 : vector<16x256xf32>
    %124 = arith.mulf %123, %123 : vector<16x256xf32>
    %cst_39 = arith.constant dense<0.000000e+00> : vector<16xf32>
    %125 = vector.multi_reduction <add>, %124, %cst_39 [1] : vector<16x256xf32> to vector<16xf32>
    %126 = vector.shape_cast %125 : vector<16xf32> to vector<16x1xf32>
    %cst_40 = arith.constant 2.560000e+02 : f32
    %127 = vector.broadcast %cst_40 : f32 to vector<16x1xf32>
    %128 = arith.divf %126, %127 : vector<16x1xf32>
    %129 = vector.broadcast %121 : vector<16x1xf32> to vector<16x256xf32>
    %130 = arith.subf %113, %129 : vector<16x256xf32>
    %cst_41 = arith.constant 9.99999974E-6 : f32
    %131 = vector.broadcast %cst_41 : f32 to vector<16x1xf32>
    %132 = arith.addf %128, %131 : vector<16x1xf32>
    %133 = math.rsqrt %132 : vector<16x1xf32>
    %134 = vector.broadcast %133 : vector<16x1xf32> to vector<16x256xf32>
    %135 = arith.mulf %130, %134 : vector<16x256xf32>
    %136 = vector.broadcast %115 : vector<1x256xf32> to vector<16x256xf32>
    %137 = arith.mulf %135, %136 : vector<16x256xf32>
    %138 = vector.broadcast %117 : vector<1x256xf32> to vector<16x256xf32>
    %139 = arith.addf %137, %138 : vector<16x256xf32>
    %140 = arith.truncf %139 : vector<16x256xf32> to vector<16x256xbf16>
    %c0_42 = arith.constant 0 : index
    %c0_43 = arith.constant 0 : index
    %c0_44 = arith.constant 0 : index
    %141 = vector.load %arg10[%c0_42, %c0_43, %c0_44] : memref<1x256x512xbf16, #tpu.memory_space<vmem>>, vector<1x256x512xbf16>
    %142 = vector.shape_cast %141 : vector<1x256x512xbf16> to vector<256x512xbf16>
    %cst_45 = arith.constant dense<0.000000e+00> : vector<16x512xf32>
    %143 = tpu.matmul %140, %142, %cst_45 {dimension_numbers = #tpu.dot_dimension_numbers<[1], [0], [0], [1], [0, 0, 1, 1], [], []>} : vector<16x256xbf16>, vector<256x512xbf16>, vector<16x512xf32> -> vector<16x512xf32>
    %c0_46 = arith.constant 0 : index
    %c0_47 = arith.constant 0 : index
    %c0_48 = arith.constant 0 : index
    %144 = vector.load %arg11[%c0_46, %c0_47, %c0_48] : memref<1x1x512xf32, #tpu.memory_space<vmem>>, vector<1x1x512xf32>
    %145 = vector.shape_cast %144 : vector<1x1x512xf32> to vector<1x512xf32>
    %146 = vector.broadcast %145 : vector<1x512xf32> to vector<16x512xf32>
    %147 = arith.addf %143, %146 : vector<16x512xf32>
    %cst_49 = arith.constant 0.000000e+00 : f32
    %148 = vector.broadcast %cst_49 : f32 to vector<16x512xf32>
    %149 = arith.maximumf %147, %148 : vector<16x512xf32>
    %150 = arith.truncf %149 : vector<16x512xf32> to vector<16x512xbf16>
    %c0_50 = arith.constant 0 : index
    %c0_51 = arith.constant 0 : index
    %c0_52 = arith.constant 0 : index
    %151 = vector.load %arg12[%c0_50, %c0_51, %c0_52] : memref<1x512x256xbf16, #tpu.memory_space<vmem>>, vector<1x512x256xbf16>
    %152 = vector.shape_cast %151 : vector<1x512x256xbf16> to vector<512x256xbf16>
    %cst_53 = arith.constant dense<0.000000e+00> : vector<16x256xf32>
    %153 = tpu.matmul %150, %152, %cst_53 {dimension_numbers = #tpu.dot_dimension_numbers<[1], [0], [0], [1], [0, 0, 1, 1], [], []>} : vector<16x512xbf16>, vector<512x256xbf16>, vector<16x256xf32> -> vector<16x256xf32>
    %c0_54 = arith.constant 0 : index
    %c0_55 = arith.constant 0 : index
    %c0_56 = arith.constant 0 : index
    %154 = vector.load %arg13[%c0_54, %c0_55, %c0_56] : memref<1x1x256xf32, #tpu.memory_space<vmem>>, vector<1x1x256xf32>
    %155 = vector.shape_cast %154 : vector<1x1x256xf32> to vector<1x256xf32>
    %156 = vector.broadcast %155 : vector<1x256xf32> to vector<16x256xf32>
    %157 = arith.addf %153, %156 : vector<16x256xf32>
    %158 = arith.addf %139, %157 : vector<16x256xf32>
    %c0_57 = arith.constant 0 : index
    %c0_58 = arith.constant 0 : index
    %c0_59 = arith.constant 0 : index
    %159 = vector.load %arg8[%c0_57, %c0_58, %c0_59] : memref<1x1x256xf32, #tpu.memory_space<vmem>>, vector<1x1x256xf32>
    %160 = vector.shape_cast %159 : vector<1x1x256xf32> to vector<1x256xf32>
    %c0_60 = arith.constant 0 : index
    %c0_61 = arith.constant 0 : index
    %c0_62 = arith.constant 0 : index
    %161 = vector.load %arg9[%c0_60, %c0_61, %c0_62] : memref<1x1x256xf32, #tpu.memory_space<vmem>>, vector<1x1x256xf32>
    %162 = vector.shape_cast %161 : vector<1x1x256xf32> to vector<1x256xf32>
    %cst_63 = arith.constant dense<0.000000e+00> : vector<16xf32>
    %163 = vector.multi_reduction <add>, %158, %cst_63 [1] : vector<16x256xf32> to vector<16xf32>
    %164 = vector.shape_cast %163 : vector<16xf32> to vector<16x1xf32>
    %cst_64 = arith.constant 2.560000e+02 : f32
    %165 = vector.broadcast %cst_64 : f32 to vector<16x1xf32>
    %166 = arith.divf %164, %165 : vector<16x1xf32>
    %167 = vector.broadcast %166 : vector<16x1xf32> to vector<16x256xf32>
    %168 = arith.subf %158, %167 : vector<16x256xf32>
    %169 = arith.mulf %168, %168 : vector<16x256xf32>
    %cst_65 = arith.constant dense<0.000000e+00> : vector<16xf32>
    %170 = vector.multi_reduction <add>, %169, %cst_65 [1] : vector<16x256xf32> to vector<16xf32>
    %171 = vector.shape_cast %170 : vector<16xf32> to vector<16x1xf32>
    %cst_66 = arith.constant 2.560000e+02 : f32
    %172 = vector.broadcast %cst_66 : f32 to vector<16x1xf32>
    %173 = arith.divf %171, %172 : vector<16x1xf32>
    %174 = vector.broadcast %166 : vector<16x1xf32> to vector<16x256xf32>
    %175 = arith.subf %158, %174 : vector<16x256xf32>
    %cst_67 = arith.constant 9.99999974E-6 : f32
    %176 = vector.broadcast %cst_67 : f32 to vector<16x1xf32>
    %177 = arith.addf %173, %176 : vector<16x1xf32>
    %178 = math.rsqrt %177 : vector<16x1xf32>
    %179 = vector.broadcast %178 : vector<16x1xf32> to vector<16x256xf32>
    %180 = arith.mulf %175, %179 : vector<16x256xf32>
    %181 = vector.broadcast %160 : vector<1x256xf32> to vector<16x256xf32>
    %182 = arith.mulf %180, %181 : vector<16x256xf32>
    %183 = vector.broadcast %162 : vector<1x256xf32> to vector<16x256xf32>
    %184 = arith.addf %182, %183 : vector<16x256xf32>
    %c2_i32 = arith.constant 2 : i32
    %185 = arith.cmpi slt, %arg0, %c2_i32 : i32
    %186 = arith.extui %185 : i1 to i32
    %c0_i32_68 = arith.constant 0 : i32
    %187 = arith.cmpi ne, %186, %c0_i32_68 : i32
    scf.if %187 {
      %c0_71 = arith.constant 0 : index
      %c0_72 = arith.constant 0 : index
      %191 = vector.load %arg16[%c0_71, %c0_72] : memref<16x256xf32, #tpu.memory_space<vmem>>, vector<16x256xf32>
      tpu.vector_store %arg16[%c0_71, %c0_72], %184 {strides = array<i32>} : memref<16x256xf32, #tpu.memory_space<vmem>>, vector<16x256xf32>,
    } else {
    }
    %c2_i32_69 = arith.constant 2 : i32
    %188 = arith.cmpi eq, %arg0, %c2_i32_69 : i32
    %189 = arith.extui %188 : i1 to i32
    %c0_i32_70 = arith.constant 0 : i32
    %190 = arith.cmpi ne, %189, %c0_i32_70 : i32
    scf.if %190 {
      %c0_71 = arith.constant 0 : index
      %c0_72 = arith.constant 0 : index
      %191 = vector.load %arg14[%c0_71, %c0_72] : memref<1x256xf32, #tpu.memory_space<vmem>>, vector<1x256xf32>
      %c0_73 = arith.constant 0 : index
      %c0_74 = arith.constant 0 : index
      %192 = vector.load %arg15[%c0_73, %c0_74] : memref<1x256xf32, #tpu.memory_space<vmem>>, vector<1x256xf32>
      %cst_75 = arith.constant dense<0.000000e+00> : vector<16xf32>
      %193 = vector.multi_reduction <add>, %184, %cst_75 [1] : vector<16x256xf32> to vector<16xf32>
      %194 = vector.shape_cast %193 : vector<16xf32> to vector<16x1xf32>
      %cst_76 = arith.constant 2.560000e+02 : f32
      %195 = vector.broadcast %cst_76 : f32 to vector<16x1xf32>
      %196 = arith.divf %194, %195 : vector<16x1xf32>
      %197 = vector.broadcast %196 : vector<16x1xf32> to vector<16x256xf32>
      %198 = arith.subf %184, %197 : vector<16x256xf32>
      %199 = arith.mulf %198, %198 : vector<16x256xf32>
      %cst_77 = arith.constant dense<0.000000e+00> : vector<16xf32>
      %200 = vector.multi_reduction <add>, %199, %cst_77 [1] : vector<16x256xf32> to vector<16xf32>
      %201 = vector.shape_cast %200 : vector<16xf32> to vector<16x1xf32>
      %cst_78 = arith.constant 2.560000e+02 : f32
      %202 = vector.broadcast %cst_78 : f32 to vector<16x1xf32>
      %203 = arith.divf %201, %202 : vector<16x1xf32>
      %204 = vector.broadcast %196 : vector<16x1xf32> to vector<16x256xf32>
      %205 = arith.subf %184, %204 : vector<16x256xf32>
      %cst_79 = arith.constant 9.99999974E-6 : f32
      %206 = vector.broadcast %cst_79 : f32 to vector<16x1xf32>
      %207 = arith.addf %203, %206 : vector<16x1xf32>
      %208 = math.rsqrt %207 : vector<16x1xf32>
      %209 = vector.broadcast %208 : vector<16x1xf32> to vector<16x256xf32>
      %210 = arith.mulf %205, %209 : vector<16x256xf32>
      %211 = vector.broadcast %191 : vector<1x256xf32> to vector<16x256xf32>
      %212 = arith.mulf %210, %211 : vector<16x256xf32>
      %213 = vector.broadcast %192 : vector<1x256xf32> to vector<16x256xf32>
      %214 = arith.addf %212, %213 : vector<16x256xf32>
      %c0_80 = arith.constant 0 : index
      %c0_81 = arith.constant 0 : index
      %215 = vector.load %arg16[%c0_80, %c0_81] : memref<16x256xf32, #tpu.memory_space<vmem>>, vector<16x256xf32>
      tpu.vector_store %arg16[%c0_80, %c0_81], %214 {strides = array<i32>} : memref<16x256xf32, #tpu.memory_space<vmem>>, vector<16x256xf32>,
    } else {
    }
    return
  }
  func.func @transform_0(%arg0: i32) -> (i32, i32) {
    %c0_i32 = arith.constant 0 : i32
    %c0_i32_0 = arith.constant 0 : i32
    %c0_i32_1 = arith.constant 0 : i32
    return %c0_i32, %c0_i32_0 : i32, i32
  }
  func.func @transform_1(%arg0: i32) -> (i32, i32, i32) {
    %c0_i32 = arith.constant 0 : i32
    %c0_i32_0 = arith.constant 0 : i32
    %c0_i32_1 = arith.constant 0 : i32
    return %arg0, %c0_i32, %c0_i32_0 : i32, i32, i32
  }
  func.func @transform_2(%arg0: i32) -> (i32, i32, i32) {
    %c0_i32 = arith.constant 0 : i32
    %c0_i32_0 = arith.constant 0 : i32
    %c0_i32_1 = arith.constant 0 : i32
    return %arg0, %c0_i32, %c0_i32_0 : i32, i32, i32
  }
  func.func @transform_3(%arg0: i32) -> (i32, i32, i32) {
    %c0_i32 = arith.constant 0 : i32
    %c0_i32_0 = arith.constant 0 : i32
    %c0_i32_1 = arith.constant 0 : i32
    return %arg0, %c0_i32, %c0_i32_0 : i32, i32, i32
  }
  func.func @transform_4(%arg0: i32) -> (i32, i32, i32) {
    %c0_i32 = arith.constant 0 : i32
    %c0_i32_0 = arith.constant 0 : i32
    %c0_i32_1 = arith.constant 0 : i32
    return %arg0, %c0_i32, %c0_i32_0 : i32, i32, i32
  }
  func.func @transform_5(%arg0: i32) -> (i32, i32, i32) {
    %c0_i32 = arith.constant 0 : i32
    %c0_i32_0 = arith.constant 0 : i32
    %c0_i32_1 = arith.constant 0 : i32
    return %arg0, %c0_i32, %c0_i32_0 : i32, i32, i32
  }
  func.func @transform_6(%arg0: i32) -> (i32, i32, i32) {
    %c0_i32 = arith.constant 0 : i32
    %c0_i32_0 = arith.constant 0 : i32
    %c0_i32_1 = arith.constant 0 : i32
    return %arg0, %c0_i32, %c0_i32_0 : i32, i32, i32
  }
  func.func @transform_7(%arg0: i32) -> (i32, i32, i32) {
    %c0_i32 = arith.constant 0 : i32
    %c0_i32_0 = arith.constant 0 : i32
    %c0_i32_1 = arith.constant 0 : i32
    return %arg0, %c0_i32, %c0_i32_0 : i32, i32, i32
  }
  func.func @transform_8(%arg0: i32) -> (i32, i32, i32) {
    %c0_i32 = arith.constant 0 : i32
    %c0_i32_0 = arith.constant 0 : i32
    %c0_i32_1 = arith.constant 0 : i32
    return %arg0, %c0_i32, %c0_i32_0 : i32, i32, i32
  }
  func.func @transform_9(%arg0: i32) -> (i32, i32, i32) {
    %c0_i32 = arith.constant 0 : i32
    %c0_i32_0 = arith.constant 0 : i32
    %c0_i32_1 = arith.constant 0 : i32
    return %arg0, %c0_i32, %c0_i32_0 : i32, i32, i32
  }
  func.func @transform_10(%arg0: i32) -> (i32, i32, i32) {
    %c0_i32 = arith.constant 0 : i32
    %c0_i32_0 = arith.constant 0 : i32
    %c0_i32_1 = arith.constant 0 : i32
    return %arg0, %c0_i32, %c0_i32_0 : i32, i32, i32
  }
  func.func @transform_11(%arg0: i32) -> (i32, i32, i32) {
    %c0_i32 = arith.constant 0 : i32
    %c0_i32_0 = arith.constant 0 : i32
    %c0_i32_1 = arith.constant 0 : i32
    return %arg0, %c0_i32, %c0_i32_0 : i32, i32, i32
  }
  func.func @transform_12(%arg0: i32) -> (i32, i32, i32) {
    %c0_i32 = arith.constant 0 : i32
    %c0_i32_0 = arith.constant 0 : i32
    %c0_i32_1 = arith.constant 0 : i32
    return %arg0, %c0_i32, %c0_i32_0 : i32, i32, i32
  }
  func.func @transform_13(%arg0: i32) -> (i32, i32) {
    %c0_i32 = arith.constant 0 : i32
    %c0_i32_0 = arith.constant 0 : i32
    %c0_i32_1 = arith.constant 0 : i32
    return %c0_i32, %c0_i32_0 : i32, i32
  }
  func.func @transform_14(%arg0: i32) -> (i32, i32) {
    %c0_i32 = arith.constant 0 : i32
    %c0_i32_0 = arith.constant 0 : i32
    %c0_i32_1 = arith.constant 0 : i32
    return %c0_i32, %c0_i32_0 : i32, i32
  }
  func.func @transform_15(%arg0: i32) -> (i32, i32) {
    %c0_i32 = arith.constant 0 : i32
    %c0_i32_0 = arith.constant 0 : i32
    %c0_i32_1 = arith.constant 0 : i32
    return %c0_i32, %c0_i32_0 : i32, i32
  }
}

</mosaic_0001>

<llo_original>
// kernel: tpu_custom_call.1
$region0: #{tpu_custom_call.1}
  #allocation0 [shape = 'u32[]', space=smem, size = 0x4, offset = 0x4, fixed_abs, tag = 'smem constant byte address 0x4 - core index']
  #allocation1 [shape = 'u32[144,128]{1,0:T(1,128)}', space=vmem, size = 0x12000, scoped, tag = 'internal scratch']
  %s0 = inlined_call_operand.hbm [shape: f32[16,256], index: 0, kind: input, shape index: {}]
  %s1 = inlined_call_operand.hbm [shape: bf16[3,256,768], index: 1, kind: input, shape index: {}]
  %s2 = inlined_call_operand.hbm [shape: f32[3,1,768], index: 2, kind: input, shape index: {}]
  %s3 = inlined_call_operand.hbm [shape: bf16[3,256,256], index: 3, kind: input, shape index: {}]
  %s4 = inlined_call_operand.hbm [shape: f32[3,1,256], index: 4, kind: input, shape index: {}]
  %s5 = inlined_call_operand.hbm [shape: f32[3,1,256], index: 5, kind: input, shape index: {}]
  %s6 = inlined_call_operand.hbm [shape: f32[3,1,256], index: 6, kind: input, shape index: {}]
  %s7 = inlined_call_operand.hbm [shape: f32[3,1,256], index: 7, kind: input, shape index: {}]
  %s8 = inlined_call_operand.hbm [shape: f32[3,1,256], index: 8, kind: input, shape index: {}]
  %s9 = inlined_call_operand.hbm [shape: bf16[3,256,512], index: 9, kind: input, shape index: {}]
  %s10 = inlined_call_operand.hbm [shape: f32[3,1,512], index: 10, kind: input, shape index: {}]
  %s11 = inlined_call_operand.hbm [shape: bf16[3,512,256], index: 11, kind: input, shape index: {}]
  %s12 = inlined_call_operand.hbm [shape: f32[3,1,256], index: 12, kind: input, shape index: {}]
  %s13 = inlined_call_operand.hbm [shape: f32[1,256], index: 13, kind: input, shape index: {}]
  %s14 = inlined_call_operand.hbm [shape: f32[1,256], index: 14, kind: input, shape index: {}]
  %s15 = inlined_call_operand.hbm [shape: f32[16,256], index: 15, kind: output, shape index: {}]
  %s16 = sld [smem:[#allocation0]]
  $region165: #{tpu_custom_call.1} parent=0
    _
  %s18 = ssub.s32 1, %s16
  %s19 = scalar_select 0, %s18, %s16
  $region1: #{tpu_custom_call.1} parent=0
    #allocation2 [shape = 'u8[16384]{0}', space=vmem, size = 0x4000, scoped, tag = 'input window, operand 0, single buffered']
    #allocation3 [shape = 's32[2]{0}', space=sflag, size = 0x8, scoped, tag = 'scoped memory for tpu_custom_call.1']
    #allocation4 [shape = 's32[2]{0}', space=sflag, size = 0x8, scoped, tag = 'scoped memory for tpu_custom_call.1']
    #allocation5 [shape = 'u8[786432]{0}', space=vmem, size = 0xc0000, scoped, tag = 'input window, operand 1']
    #allocation6 [shape = 's32[2]{0}', space=sflag, size = 0x8, scoped, tag = 'scoped memory for tpu_custom_call.1']
    #allocation7 [shape = 'u8[6144]{0}', space=vmem, size = 0x1800, scoped, tag = 'input window, operand 2']
    #allocation8 [shape = 'u8[262144]{0}', space=vmem, size = 0x40000, scoped, tag = 'input window, operand 3']
    #allocation9 [shape = 's32[2]{0}', space=sflag, size = 0x8, scoped, tag = 'scoped memory for tpu_custom_call.1']
    #allocation10 [shape = 'u8[2048]{0}', space=vmem, size = 0x800, scoped, tag = 'input window, operand 4']
    #allocation11 [shape = 'u8[2048]{0}', space=vmem, size = 0x800, scoped, tag = 'input window, operand 5']
    #allocation12 [shape = 's32[2]{0}', space=sflag, size = 0x8, scoped, tag = 'scoped memory for tpu_custom_call.1']
    #allocation13 [shape = 'u8[2048]{0}', space=vmem, size = 0x800, scoped, tag = 'input window, operand 6']
    #allocation14 [shape = 'u8[2048]{0}', space=vmem, size = 0x800, scoped, tag = 'input window, operand 7']
    #allocation15 [shape = 's32[2]{0}', space=sflag, size = 0x8, scoped, tag = 'scoped memory for tpu_custom_call.1']
    #allocation16 [shape = 'u8[2048]{0}', space=vmem, size = 0x800, scoped, tag = 'input window, operand 8']
    #allocation17 [shape = 'u8[524288]{0}', space=vmem, size = 0x80000, scoped, tag = 'input window, operand 9']
    #allocation18 [shape = 's32[2]{0}', space=sflag, size = 0x8, scoped, tag = 'scoped memory for tpu_custom_call.1']
    #allocation19 [shape = 'u8[4096]{0}', space=vmem, size = 0x1000, scoped, tag = 'input window, operand 10']
    #allocation20 [shape = 'u8[524288]{0}', space=vmem, size = 0x80000, scoped, tag = 'input window, operand 11']
    #allocation21 [shape = 's32[2]{0}', space=sflag, size = 0x8, scoped, tag = 'scoped memory for tpu_custom_call.1']
    #allocation22 [shape = 'u8[2048]{0}', space=vmem, size = 0x800, scoped, tag = 'input window, operand 12']
    #allocation23 [shape = 'u8[1024]{0}', space=vmem, size = 0x400, scoped, tag = 'input window, operand 13, single buffered']
    #allocation24 [shape = 's32[1]{0}', space=sflag, size = 0x4, scoped, tag = 'scoped memory for tpu_custom_call.1']
    #allocation25 [shape = 'u8[1024]{0}', space=vmem, size = 0x400, scoped, tag = 'input window, operand 14, single buffered']
    #allocation26 [shape = 'u8[16384]{0}', space=vmem, size = 0x4000, scoped, tag = 'output window, operand 0, single buffered']
    %20 = vsyncpa [#allocation3], 0
    %21 = vsyncpa [#allocation6], 0
    %s22 = scalar_lea.sflag [#allocation6], 1
    %23 = vsyncpa %s22, 0
    %24 = vsyncpa [#allocation9], 0
    %s25 = scalar_lea.sflag [#allocation9], 1
    %26 = vsyncpa %s25, 0
    %27 = vsyncpa [#allocation12], 0
    %s28 = scalar_lea.sflag [#allocation12], 1
    %29 = vsyncpa %s28, 0
    %30 = vsyncpa [#allocation15], 0
    %s31 = scalar_lea.sflag [#allocation15], 1
    %32 = vsyncpa %s31, 0
    %33 = vsyncpa [#allocation18], 0
    %s34 = scalar_lea.sflag [#allocation18], 1
    %35 = vsyncpa %s34, 0
    %36 = vsyncpa [#allocation21], 0
    %s37 = scalar_lea.sflag [#allocation21], 1
    %38 = vsyncpa %s37, 0
    %39 = vsyncpa [#allocation24], 0
    %40 = vsyncpa [#allocation4], 0
    loop: start=0, step=1, limit=5
    $region2: #{tpu_custom_call.1} parent=1 // loop_pre_header
      _
    $region3: #{tpu_custom_call.1} parent=1 // loop_header
      %s42 = sphi 0, %s46
      %p43 = scmp.ge.s32.totalorder %s42, 5
      %s50 = sphi 0, %s50
      %s52 = sphi 0, %s50
      %s53 = sphi 0, %s52
      %s67 = sphi 0, %s53
      %s73 = sphi 0, %s75
      %s76 = sphi 0, %s73
      %s77 = sphi 0, %s76
      %s93 = sphi 0, %s77
      %s99 = sphi 0, %s101
      %s102 = sphi 0, %s99
      %s103 = sphi 0, %s102
      %s119 = sphi 0, %s103
      %s125 = sphi 0, %s127
      %s128 = sphi 0, %s125
      %s129 = sphi 0, %s128
      %s145 = sphi 0, %s129
      %s151 = sphi 0, %s153
      %s154 = sphi 0, %s151
      %s155 = sphi 0, %s154
      %s171 = sphi 0, %s155
      %s177 = sphi 0, %s179
      %s180 = sphi 0, %s177
      %s181 = sphi 0, %s180
      %s197 = sphi 0, %s181
      %s203 = sphi 0, %s205
      %s206 = sphi 0, %s203
      %s207 = sphi 0, %s206
      %s223 = sphi 0, %s207
      %s229 = sphi 0, %s231
      %s232 = sphi 0, %s229
      %s233 = sphi 0, %s232
      %s249 = sphi 0, %s233
      %s255 = sphi 0, %s257
      %s258 = sphi 0, %s255
      %s259 = sphi 0, %s258
      %s275 = sphi 0, %s259
      %s281 = sphi 0, %s283
      %s284 = sphi 0, %s281
      %s285 = sphi 0, %s284
      %s301 = sphi 0, %s285
      %s307 = sphi 0, %s309
      %s310 = sphi 0, %s307
      %s311 = sphi 0, %s310
      %s327 = sphi 0, %s311
      %s333 = sphi 0, %s335
      %s336 = sphi 0, %s333
      %s337 = sphi 0, %s336
      %s353 = sphi 0, %s337
      %s359 = sphi 0, %s361
      %s362 = sphi 0, %s359
      %s363 = sphi 0, %s362
      %s379 = sphi 0, %s363
      %s383 = sphi 0, %s383
      %s385 = sphi 0, %s383
      %s386 = sphi 0, %s385
      %s400 = sphi 0, %s386
      %s404 = sphi 0, %s404
      %s406 = sphi 0, %s404
      %s407 = sphi 0, %s406
      %s421 = sphi 0, %s407
      %s425 = sphi 0, %s425
      %s427 = sphi 0, %s425
      %s428 = sphi 0, %s427
      %s442 = sphi 0, %s428
    $region4: #{tpu_custom_call.1} parent=1 // loop_header_branch
      %45 = sbr.rel (%p43) target = $region8
    $region5: #{tpu_custom_call.1} parent=1 // loop_body
      %s47 = ssub.s32 %s42, 1
      %s48 = ssub.s32 %s42, 2
      %s49 = sadd.s32 %s42, 1
      %s51 = sadd.s32 %s50, 1
      %p54 = scmp.eq.s32.totalorder %s42, 2
      %p55 = scmp.ne.s32.totalorder %s50, %s52
      %p56 = scmp.eq.s32.totalorder %s42, 0
      %p57 = por %p55, %p56
      %p58 = scmp.ne.s32.totalorder %s50, %s52
      %p59 = scmp.eq.s32.totalorder %s47, 2
      %p60 = por %p58, %p59
      %p61 = scmp.ne.s32.totalorder %s52, %s53
      %p62 = scmp.eq.s32.totalorder %s47, 0
      %p63 = por %p61, %p62
      %p64 = scmp.ne.s32.totalorder %s52, %s53
      %p65 = scmp.eq.s32.totalorder %s48, 2
      %p66 = por %p64, %p65
      %p68 = scmp.ne.s32.totalorder %s53, %s67
      %p69 = scmp.eq.s32.totalorder %s48, 0
      %p70 = por %p68, %p69
      %s71 = ssub.s32 %s42, %s49
      %p72 = scmp.eq.s32.totalorder %s71, 0
      %s74 = sadd.s32 %s73, 1
      %s75 = scalar_select %p72, %s73, %s74
      %p78 = pneg %p72
      %p79 = scmp.eq.s32.totalorder %s42, 2
      %p80 = por %p78, %p79
      %p81 = scmp.ne.s32.totalorder %s73, %s76
      %p82 = scmp.eq.s32.totalorder %s42, 0
      %p83 = por %p81, %p82
      %p84 = scmp.ne.s32.totalorder %s73, %s76
      %p85 = scmp.eq.s32.totalorder %s47, 2
      %p86 = por %p84, %p85
      %p87 = scmp.ne.s32.totalorder %s76, %s77
      %p88 = scmp.eq.s32.totalorder %s47, 0
      %p89 = por %p87, %p88
      %p90 = scmp.ne.s32.totalorder %s76, %s77
      %p91 = scmp.eq.s32.totalorder %s48, 2
      %p92 = por %p90, %p91
      %p94 = scmp.ne.s32.totalorder %s77, %s93
      %p95 = scmp.eq.s32.totalorder %s48, 0
      %p96 = por %p94, %p95
      %s97 = ssub.s32 %s42, %s49
      %p98 = scmp.eq.s32.totalorder %s97, 0
      %s100 = sadd.s32 %s99, 1
      %s101 = scalar_select %p98, %s99, %s100
      %p104 = pneg %p98
      %p105 = scmp.eq.s32.totalorder %s42, 2
      %p106 = por %p104, %p105
      %p107 = scmp.ne.s32.totalorder %s99, %s102
      %p108 = scmp.eq.s32.totalorder %s42, 0
      %p109 = por %p107, %p108
      %p110 = scmp.ne.s32.totalorder %s99, %s102
      %p111 = scmp.eq.s32.totalorder %s47, 2
      %p112 = por %p110, %p111
      %p113 = scmp.ne.s32.totalorder %s102, %s103
      %p114 = scmp.eq.s32.totalorder %s47, 0
      %p115 = por %p113, %p114
      %p116 = scmp.ne.s32.totalorder %s102, %s103
      %p117 = scmp.eq.s32.totalorder %s48, 2
      %p118 = por %p116, %p117
      %p120 = scmp.ne.s32.totalorder %s103, %s119
      %p121 = scmp.eq.s32.totalorder %s48, 0
      %p122 = por %p120, %p121
      %s123 = ssub.s32 %s42, %s49
      %p124 = scmp.eq.s32.totalorder %s123, 0
      %s126 = sadd.s32 %s125, 1
      %s127 = scalar_select %p124, %s125, %s126
      %p130 = pneg %p124
      %p131 = scmp.eq.s32.totalorder %s42, 2
      %p132 = por %p130, %p131
      %p133 = scmp.ne.s32.totalorder %s125, %s128
      %p134 = scmp.eq.s32.totalorder %s42, 0
      %p135 = por %p133, %p134
      %p136 = scmp.ne.s32.totalorder %s125, %s128
      %p137 = scmp.eq.s32.totalorder %s47, 2
      %p138 = por %p136, %p137
      %p139 = scmp.ne.s32.totalorder %s128, %s129
      %p140 = scmp.eq.s32.totalorder %s47, 0
      %p141 = por %p139, %p140
      %p142 = scmp.ne.s32.totalorder %s128, %s129
      %p143 = scmp.eq.s32.totalorder %s48, 2
      %p144 = por %p142, %p143
      %p146 = scmp.ne.s32.totalorder %s129, %s145
      %p147 = scmp.eq.s32.totalorder %s48, 0
      %p148 = por %p146, %p147
      %s149 = ssub.s32 %s42, %s49
      %p150 = scmp.eq.s32.totalorder %s149, 0
      %s152 = sadd.s32 %s151, 1
      %s153 = scalar_select %p150, %s151, %s152
      %p156 = pneg %p150
      %p157 = scmp.eq.s32.totalorder %s42, 2
      %p158 = por %p156, %p157
      %p159 = scmp.ne.s32.totalorder %s151, %s154
      %p160 = scmp.eq.s32.totalorder %s42, 0
      %p161 = por %p159, %p160
      %p162 = scmp.ne.s32.totalorder %s151, %s154
      %p163 = scmp.eq.s32.totalorder %s47, 2
      %p164 = por %p162, %p163
      %p165 = scmp.ne.s32.totalorder %s154, %s155
      %p166 = scmp.eq.s32.totalorder %s47, 0
      %p167 = por %p165, %p166
      %p168 = scmp.ne.s32.totalorder %s154, %s155
      %p169 = scmp.eq.s32.totalorder %s48, 2
      %p170 = por %p168, %p169
      %p172 = scmp.ne.s32.totalorder %s155, %s171
      %p173 = scmp.eq.s32.totalorder %s48, 0
      %p174 = por %p172, %p173
      %s175 = ssub.s32 %s42, %s49
      %p176 = scmp.eq.s32.totalorder %s175, 0
      %s178 = sadd.s32 %s177, 1
      %s179 = scalar_select %p176, %s177, %s178
      %p182 = pneg %p176
      %p183 = scmp.eq.s32.totalorder %s42, 2
      %p184 = por %p182, %p183
      %p185 = scmp.ne.s32.totalorder %s177, %s180
      %p186 = scmp.eq.s32.totalorder %s42, 0
      %p187 = por %p185, %p186
      %p188 = scmp.ne.s32.totalorder %s177, %s180
      %p189 = scmp.eq.s32.totalorder %s47, 2
      %p190 = por %p188, %p189
      %p191 = scmp.ne.s32.totalorder %s180, %s181
      %p192 = scmp.eq.s32.totalorder %s47, 0
      %p193 = por %p191, %p192
      %p194 = scmp.ne.s32.totalorder %s180, %s181
      %p195 = scmp.eq.s32.totalorder %s48, 2
      %p196 = por %p194, %p195
      %p198 = scmp.ne.s32.totalorder %s181, %s197
      %p199 = scmp.eq.s32.totalorder %s48, 0
      %p200 = por %p198, %p199
      %s201 = ssub.s32 %s42, %s49
      %p202 = scmp.eq.s32.totalorder %s201, 0
      %s204 = sadd.s32 %s203, 1
      %s205 = scalar_select %p202, %s203, %s204
      %p208 = pneg %p202
      %p209 = scmp.eq.s32.totalorder %s42, 2
      %p210 = por %p208, %p209
      %p211 = scmp.ne.s32.totalorder %s203, %s206
      %p212 = scmp.eq.s32.totalorder %s42, 0
      %p213 = por %p211, %p212
      %p214 = scmp.ne.s32.totalorder %s203, %s206
      %p215 = scmp.eq.s32.totalorder %s47, 2
      %p216 = por %p214, %p215
      %p217 = scmp.ne.s32.totalorder %s206, %s207
      %p218 = scmp.eq.s32.totalorder %s47, 0
      %p219 = por %p217, %p218
      %p220 = scmp.ne.s32.totalorder %s206, %s207
      %p221 = scmp.eq.s32.totalorder %s48, 2
      %p222 = por %p220, %p221
      %p224 = scmp.ne.s32.totalorder %s207, %s223
      %p225 = scmp.eq.s32.totalorder %s48, 0
      %p226 = por %p224, %p225
      %s227 = ssub.s32 %s42, %s49
      %p228 = scmp.eq.s32.totalorder %s227, 0
      %s230 = sadd.s32 %s229, 1
      %s231 = scalar_select %p228, %s229, %s230
      %p234 = pneg %p228
      %p235 = scmp.eq.s32.totalorder %s42, 2
      %p236 = por %p234, %p235
      %p237 = scmp.ne.s32.totalorder %s229, %s232
      %p238 = scmp.eq.s32.totalorder %s42, 0
      %p239 = por %p237, %p238
      %p240 = scmp.ne.s32.totalorder %s229, %s232
      %p241 = scmp.eq.s32.totalorder %s47, 2
      %p242 = por %p240, %p241
      %p243 = scmp.ne.s32.totalorder %s232, %s233
      %p244 = scmp.eq.s32.totalorder %s47, 0
      %p245 = por %p243, %p244
      %p246 = scmp.ne.s32.totalorder %s232, %s233
      %p247 = scmp.eq.s32.totalorder %s48, 2
      %p248 = por %p246, %p247
      %p250 = scmp.ne.s32.totalorder %s233, %s249
      %p251 = scmp.eq.s32.totalorder %s48, 0
      %p252 = por %p250, %p251
      %s253 = ssub.s32 %s42, %s49
      %p254 = scmp.eq.s32.totalorder %s253, 0
      %s256 = sadd.s32 %s255, 1
      %s257 = scalar_select %p254, %s255, %s256
      %p260 = pneg %p254
      %p261 = scmp.eq.s32.totalorder %s42, 2
      %p262 = por %p260, %p261
      %p263 = scmp.ne.s32.totalorder %s255, %s258
      %p264 = scmp.eq.s32.totalorder %s42, 0
      %p265 = por %p263, %p264
      %p266 = scmp.ne.s32.totalorder %s255, %s258
      %p267 = scmp.eq.s32.totalorder %s47, 2
      %p268 = por %p266, %p267
      %p269 = scmp.ne.s32.totalorder %s258, %s259
      %p270 = scmp.eq.s32.totalorder %s47, 0
      %p271 = por %p269, %p270
      %p272 = scmp.ne.s32.totalorder %s258, %s259
      %p273 = scmp.eq.s32.totalorder %s48, 2
      %p274 = por %p272, %p273
      %p276 = scmp.ne.s32.totalorder %s259, %s275
      %p277 = scmp.eq.s32.totalorder %s48, 0
      %p278 = por %p276, %p277
      %s279 = ssub.s32 %s42, %s49
      %p280 = scmp.eq.s32.totalorder %s279, 0
      %s282 = sadd.s32 %s281, 1
      %s283 = scalar_select %p280, %s281, %s282
      %p286 = pneg %p280
      %p287 = scmp.eq.s32.totalorder %s42, 2
      %p288 = por %p286, %p287
      %p289 = scmp.ne.s32.totalorder %s281, %s284
      %p290 = scmp.eq.s32.totalorder %s42, 0
      %p291 = por %p289, %p290
      %p292 = scmp.ne.s32.totalorder %s281, %s284
      %p293 = scmp.eq.s32.totalorder %s47, 2
      %p294 = por %p292, %p293
      %p295 = scmp.ne.s32.totalorder %s284, %s285
      %p296 = scmp.eq.s32.totalorder %s47, 0
      %p297 = por %p295, %p296
      %p298 = scmp.ne.s32.totalorder %s284, %s285
      %p299 = scmp.eq.s32.totalorder %s48, 2
      %p300 = por %p298, %p299
      %p302 = scmp.ne.s32.totalorder %s285, %s301
      %p303 = scmp.eq.s32.totalorder %s48, 0
      %p304 = por %p302, %p303
      %s305 = ssub.s32 %s42, %s49
      %p306 = scmp.eq.s32.totalorder %s305, 0
      %s308 = sadd.s32 %s307, 1
      %s309 = scalar_select %p306, %s307, %s308
      %p312 = pneg %p306
      %p313 = scmp.eq.s32.totalorder %s42, 2
      %p314 = por %p312, %p313
      %p315 = scmp.ne.s32.totalorder %s307, %s310
      %p316 = scmp.eq.s32.totalorder %s42, 0
      %p317 = por %p315, %p316
      %p318 = scmp.ne.s32.totalorder %s307, %s310
      %p319 = scmp.eq.s32.totalorder %s47, 2
      %p320 = por %p318, %p319
      %p321 = scmp.ne.s32.totalorder %s310, %s311
      %p322 = scmp.eq.s32.totalorder %s47, 0
      %p323 = por %p321, %p322
      %p324 = scmp.ne.s32.totalorder %s310, %s311
      %p325 = scmp.eq.s32.totalorder %s48, 2
      %p326 = por %p324, %p325
      %p328 = scmp.ne.s32.totalorder %s311, %s327
      %p329 = scmp.eq.s32.totalorder %s48, 0
      %p330 = por %p328, %p329
      %s331 = ssub.s32 %s42, %s49
      %p332 = scmp.eq.s32.totalorder %s331, 0
      %s334 = sadd.s32 %s333, 1
      %s335 = scalar_select %p332, %s333, %s334
      %p338 = pneg %p332
      %p339 = scmp.eq.s32.totalorder %s42, 2
      %p340 = por %p338, %p339
      %p341 = scmp.ne.s32.totalorder %s333, %s336
      %p342 = scmp.eq.s32.totalorder %s42, 0
      %p343 = por %p341, %p342
      %p344 = scmp.ne.s32.totalorder %s333, %s336
      %p345 = scmp.eq.s32.totalorder %s47, 2
      %p346 = por %p344, %p345
      %p347 = scmp.ne.s32.totalorder %s336, %s337
      %p348 = scmp.eq.s32.totalorder %s47, 0
      %p349 = por %p347, %p348
      %p350 = scmp.ne.s32.totalorder %s336, %s337
      %p351 = scmp.eq.s32.totalorder %s48, 2
      %p352 = por %p350, %p351
      %p354 = scmp.ne.s32.totalorder %s337, %s353
      %p355 = scmp.eq.s32.totalorder %s48, 0
      %p356 = por %p354, %p355
      %s357 = ssub.s32 %s42, %s49
      %p358 = scmp.eq.s32.totalorder %s357, 0
      %s360 = sadd.s32 %s359, 1
      %s361 = scalar_select %p358, %s359, %s360
      %p364 = pneg %p358
      %p365 = scmp.eq.s32.totalorder %s42, 2
      %p366 = por %p364, %p365
      %p367 = scmp.ne.s32.totalorder %s359, %s362
      %p368 = scmp.eq.s32.totalorder %s42, 0
      %p369 = por %p367, %p368
      %p370 = scmp.ne.s32.totalorder %s359, %s362
      %p371 = scmp.eq.s32.totalorder %s47, 2
      %p372 = por %p370, %p371
      %p373 = scmp.ne.s32.totalorder %s362, %s363
      %p374 = scmp.eq.s32.totalorder %s47, 0
      %p375 = por %p373, %p374
      %p376 = scmp.ne.s32.totalorder %s362, %s363
      %p377 = scmp.eq.s32.totalorder %s48, 2
      %p378 = por %p376, %p377
      %p380 = scmp.ne.s32.totalorder %s363, %s379
      %p381 = scmp.eq.s32.totalorder %s48, 0
      %p382 = por %p380, %p381
      %s384 = sadd.s32 %s383, 1
      %p387 = scmp.eq.s32.totalorder %s42, 2
      %p388 = scmp.ne.s32.totalorder %s383, %s385
      %p389 = scmp.eq.s32.totalorder %s42, 0
      %p390 = por %p388, %p389
      %p391 = scmp.ne.s32.totalorder %s383, %s385
      %p392 = scmp.eq.s32.totalorder %s47, 2
      %p393 = por %p391, %p392
      %p394 = scmp.ne.s32.totalorder %s385, %s386
      %p395 = scmp.eq.s32.totalorder %s47, 0
      %p396 = por %p394, %p395
      %p397 = scmp.ne.s32.totalorder %s385, %s386
      %p398 = scmp.eq.s32.totalorder %s48, 2
      %p399 = por %p397, %p398
      %p401 = scmp.ne.s32.totalorder %s386, %s400
      %p402 = scmp.eq.s32.totalorder %s48, 0
      %p403 = por %p401, %p402
      %s405 = sadd.s32 %s404, 1
      %p408 = scmp.eq.s32.totalorder %s42, 2
      %p409 = scmp.ne.s32.totalorder %s404, %s406
      %p410 = scmp.eq.s32.totalorder %s42, 0
      %p411 = por %p409, %p410
      %p412 = scmp.ne.s32.totalorder %s404, %s406
      %p413 = scmp.eq.s32.totalorder %s47, 2
      %p414 = por %p412, %p413
      %p415 = scmp.ne.s32.totalorder %s406, %s407
      %p416 = scmp.eq.s32.totalorder %s47, 0
      %p417 = por %p415, %p416
      %p418 = scmp.ne.s32.totalorder %s406, %s407
      %p419 = scmp.eq.s32.totalorder %s48, 2
      %p420 = por %p418, %p419
      %p422 = scmp.ne.s32.totalorder %s407, %s421
      %p423 = scmp.eq.s32.totalorder %s48, 0
      %p424 = por %p422, %p423
      %s426 = sadd.s32 %s425, 1
      %p429 = scmp.eq.s32.totalorder %s42, 2
      %p430 = scmp.ne.s32.totalorder %s425, %s427
      %p431 = scmp.eq.s32.totalorder %s42, 0
      %p432 = por %p430, %p431
      %p433 = scmp.ne.s32.totalorder %s425, %s427
      %p434 = scmp.eq.s32.totalorder %s47, 2
      %p435 = por %p433, %p434
      %p436 = scmp.ne.s32.totalorder %s427, %s428
      %p437 = scmp.eq.s32.totalorder %s47, 0
      %p438 = por %p436, %p437
      %p439 = scmp.ne.s32.totalorder %s427, %s428
      %p440 = scmp.eq.s32.totalorder %s48, 2
      %p441 = por %p439, %p440
      %p443 = scmp.ne.s32.totalorder %s428, %s442
      %p444 = scmp.eq.s32.totalorder %s48, 0
      %p445 = por %p443, %p444
      %p446 = scmp.le.s32.totalorder 1, %s42
      %p447 = scmp.lt.s32.totalorder %s42, 4
      %p448 = pnand %p446, %p447
      %p449 = pneg %p448
      // Predicated region
      $region9: #{tpu_custom_call.1} parent=5 // pred_check
        _
      $region10: #{tpu_custom_call.1} parent=5 // pred_check_branch
        %451 = sbr.rel (%p448) target = $region12
      $region11: #{tpu_custom_call.1} parent=5 // pred_region
        %s452 = ssub.s32 %s42, 1
        // Predicated region
        $region13: #{tpu_custom_call.1} parent=11 // pred_check
          %p453 = pneg %p63
        $region14: #{tpu_custom_call.1} parent=11 // pred_check_branch
          %455 = sbr.rel (%p453) target = $region16
        $region15: #{tpu_custom_call.1} parent=11 // pred_region
          %s457 = ssub.s32 512, 512
          %458 = vsyncadd [#allocation3], %s457
          %s459 = sshll.u32 [#allocation2], 4
          %s460 = int_to_ptr.vmem [resolvable:$true] %s459
          %465 = dma.hbm_to_vmem [thread:$0]  %s0, 512, %s460, [#allocation3], 256, 256, 16
        $region16: #{tpu_custom_call.1} parent=11 // pred_fallthru
          _
        // Predicated region
        $region17: #{tpu_custom_call.1} parent=11 // pred_check
          %p466 = pneg %p396
        $region18: #{tpu_custom_call.1} parent=11 // pred_check_branch
          %468 = sbr.rel (%p466) target = $region20
        $region19: #{tpu_custom_call.1} parent=11 // pred_region
          %s470 = ssub.s32 32, 32
          %471 = vsyncadd [#allocation24], %s470
          %s473 = sshll.u32 [#allocation23], 4
          %s474 = int_to_ptr.vmem [resolvable:$true] %s473
          %476 = dma.hbm_to_vmem [thread:$0]  %s13, 32, %s474, [#allocation24]
        $region20: #{tpu_custom_call.1} parent=11 // pred_fallthru
          _
        // Predicated region
        $region21: #{tpu_custom_call.1} parent=11 // pred_check
          %p477 = pneg %p417
        $region22: #{tpu_custom_call.1} parent=11 // pred_check_branch
          %479 = sbr.rel (%p477) target = $region24
        $region23: #{tpu_custom_call.1} parent=11 // pred_region
          %s481 = ssub.s32 32, 32
          %482 = vsyncadd [#allocation24], %s481
          %s484 = sshll.u32 [#allocation25], 4
          %s485 = int_to_ptr.vmem [resolvable:$true] %s484
          %487 = dma.hbm_to_vmem [thread:$0]  %s14, 32, %s485, [#allocation24]
        $region24: #{tpu_custom_call.1} parent=11 // pred_fallthru
          _
      $region12: #{tpu_custom_call.1} parent=5 // pred_fallthru
        _
      %p488 = scmp.lt.s32.totalorder %s42, 3
      // Predicated region
      $region25: #{tpu_custom_call.1} parent=5 // pred_check
        %p489 = pneg %p488
      $region26: #{tpu_custom_call.1} parent=5 // pred_check_branch
        %491 = sbr.rel (%p489) target = $region28
      $region27: #{tpu_custom_call.1} parent=5 // pred_region
        // Predicated region
        $region29: #{tpu_custom_call.1} parent=27 // pred_check
          %p492 = pneg %p83
        $region30: #{tpu_custom_call.1} parent=27 // pred_check_branch
          %494 = sbr.rel (%p492) target = $region32
        $region31: #{tpu_custom_call.1} parent=27 // pred_region
          %s495 = sand.u32 %s42, 1
          %s496 = scalar_lea.sflag [#allocation6], %s495
          %s497 = sand.u32 %s73, 1
          %s498 = smul.addr %s497, 768
          %s499 = scalar_lea.vmem [#allocation5], %s498
          %s501 = ssub.s32 12288, 12288
          %502 = vsyncadd %s496, %s501
          %s503 = smul.addr %s42, 192
          %s504 = smul.addr %s503, 64
          %s505 = scalar_lea.hbm %s1, %s504
          %s506 = sshll.u32 %s499, 4
          %s507 = int_to_ptr.vmem [resolvable:$true] %s506
          %512 = dma.hbm_to_vmem [thread:$0]  %s505, 12288, %s507, %s496, 384, 384, 24
        $region32: #{tpu_custom_call.1} parent=27 // pred_fallthru
          _
        // Predicated region
        $region33: #{tpu_custom_call.1} parent=27 // pred_check
          %p513 = pneg %p109
        $region34: #{tpu_custom_call.1} parent=27 // pred_check_branch
          %515 = sbr.rel (%p513) target = $region36
        $region35: #{tpu_custom_call.1} parent=27 // pred_region
          %s516 = sand.u32 %s42, 1
          %s517 = scalar_lea.sflag [#allocation6], %s516
          %s518 = sand.u32 %s99, 1
          %s519 = smul.addr %s518, 6
          %s520 = scalar_lea.vmem [#allocation7], %s519
          %s522 = ssub.s32 96, 96
          %523 = vsyncadd %s517, %s522
          %s524 = smul.addr %s42, 6
          %s525 = smul.addr %s524, 16
          %s526 = scalar_lea.hbm %s2, %s525
          %s528 = sshll.u32 %s520, 4
          %s529 = int_to_ptr.vmem [resolvable:$true] %s528
          %531 = dma.hbm_to_vmem [thread:$0]  %s526, 96, %s529, %s517
        $region36: #{tpu_custom_call.1} parent=27 // pred_fallthru
          _
        // Predicated region
        $region37: #{tpu_custom_call.1} parent=27 // pred_check
          %p532 = pneg %p135
        $region38: #{tpu_custom_call.1} parent=27 // pred_check_branch
          %534 = sbr.rel (%p532) target = $region40
        $region39: #{tpu_custom_call.1} parent=27 // pred_region
          %s535 = sand.u32 %s42, 1
          %s536 = scalar_lea.sflag [#allocation9], %s535
          %s537 = sand.u32 %s125, 1
          %s538 = smul.addr %s537, 256
          %s539 = scalar_lea.vmem [#allocation8], %s538
          %s541 = ssub.s32 4096, 4096
          %542 = vsyncadd %s536, %s541
          %s543 = smul.addr %s42, 64
          %s544 = smul.addr %s543, 64
          %s545 = scalar_lea.hbm %s3, %s544
          %s546 = sshll.u32 %s539, 4
          %s547 = int_to_ptr.vmem [resolvable:$true] %s546
          %552 = dma.hbm_to_vmem [thread:$0]  %s545, 4096, %s547, %s536, 128, 128, 8
        $region40: #{tpu_custom_call.1} parent=27 // pred_fallthru
          _
        // Predicated region
        $region41: #{tpu_custom_call.1} parent=27 // pred_check
          %p553 = pneg %p161
        $region42: #{tpu_custom_call.1} parent=27 // pred_check_branch
          %555 = sbr.rel (%p553) target = $region44
        $region43: #{tpu_custom_call.1} parent=27 // pred_region
          %s556 = sand.u32 %s42, 1
          %s557 = scalar_lea.sflag [#allocation9], %s556
          %s558 = sand.u32 %s151, 1
          %s559 = smul.addr %s558, 2
          %s560 = scalar_lea.vmem [#allocation10], %s559
          %s562 = ssub.s32 32, 32
          %563 = vsyncadd %s557, %s562
          %s564 = smul.addr %s42, 2
          %s565 = smul.addr %s564, 16
          %s566 = scalar_lea.hbm %s4, %s565
          %s568 = sshll.u32 %s560, 4
          %s569 = int_to_ptr.vmem [resolvable:$true] %s568
          %571 = dma.hbm_to_vmem [thread:$0]  %s566, 32, %s569, %s557
        $region44: #{tpu_custom_call.1} parent=27 // pred_fallthru
          _
        // Predicated region
        $region45: #{tpu_custom_call.1} parent=27 // pred_check
          %p572 = pneg %p187
        $region46: #{tpu_custom_call.1} parent=27 // pred_check_branch
          %574 = sbr.rel (%p572) target = $region48
        $region47: #{tpu_custom_call.1} parent=27 // pred_region
          %s575 = sand.u32 %s42, 1
          %s576 = scalar_lea.sflag [#allocation12], %s575
          %s577 = sand.u32 %s177, 1
          %s578 = smul.addr %s577, 2
          %s579 = scalar_lea.vmem [#allocation11], %s578
          %s581 = ssub.s32 32, 32
          %582 = vsyncadd %s576, %s581
          %s583 = smul.addr %s42, 2
          %s584 = smul.addr %s583, 16
          %s585 = scalar_lea.hbm %s5, %s584
          %s587 = sshll.u32 %s579, 4
          %s588 = int_to_ptr.vmem [resolvable:$true] %s587
          %590 = dma.hbm_to_vmem [thread:$0]  %s585, 32, %s588, %s576
        $region48: #{tpu_custom_call.1} parent=27 // pred_fallthru
          _
        // Predicated region
        $region49: #{tpu_custom_call.1} parent=27 // pred_check
          %p591 = pneg %p213
        $region50: #{tpu_custom_call.1} parent=27 // pred_check_branch
          %593 = sbr.rel (%p591) target = $region52
        $region51: #{tpu_custom_call.1} parent=27 // pred_region
          %s594 = sand.u32 %s42, 1
          %s595 = scalar_lea.sflag [#allocation12], %s594
          %s596 = sand.u32 %s203, 1
          %s597 = smul.addr %s596, 2
          %s598 = scalar_lea.vmem [#allocation13], %s597
          %s600 = ssub.s32 32, 32
          %601 = vsyncadd %s595, %s600
          %s602 = smul.addr %s42, 2
          %s603 = smul.addr %s602, 16
          %s604 = scalar_lea.hbm %s6, %s603
          %s606 = sshll.u32 %s598, 4
          %s607 = int_to_ptr.vmem [resolvable:$true] %s606
          %609 = dma.hbm_to_vmem [thread:$0]  %s604, 32, %s607, %s595
        $region52: #{tpu_custom_call.1} parent=27 // pred_fallthru
          _
        // Predicated region
        $region53: #{tpu_custom_call.1} parent=27 // pred_check
          %p610 = pneg %p239
        $region54: #{tpu_custom_call.1} parent=27 // pred_check_branch
          %612 = sbr.rel (%p610) target = $region56
        $region55: #{tpu_custom_call.1} parent=27 // pred_region
          %s613 = sand.u32 %s42, 1
          %s614 = scalar_lea.sflag [#allocation15], %s613
          %s615 = sand.u32 %s229, 1
          %s616 = smul.addr %s615, 2
          %s617 = scalar_lea.vmem [#allocation14], %s616
          %s619 = ssub.s32 32, 32
          %620 = vsyncadd %s614, %s619
          %s621 = smul.addr %s42, 2
          %s622 = smul.addr %s621, 16
          %s623 = scalar_lea.hbm %s7, %s622
          %s625 = sshll.u32 %s617, 4
          %s626 = int_to_ptr.vmem [resolvable:$true] %s625
          %628 = dma.hbm_to_vmem [thread:$0]  %s623, 32, %s626, %s614
        $region56: #{tpu_custom_call.1} parent=27 // pred_fallthru
          _
        // Predicated region
        $region57: #{tpu_custom_call.1} parent=27 // pred_check
          %p629 = pneg %p265
        $region58: #{tpu_custom_call.1} parent=27 // pred_check_branch
          %631 = sbr.rel (%p629) target = $region60
        $region59: #{tpu_custom_call.1} parent=27 // pred_region
          %s632 = sand.u32 %s42, 1
          %s633 = scalar_lea.sflag [#allocation15], %s632
          %s634 = sand.u32 %s255, 1
          %s635 = smul.addr %s634, 2
          %s636 = scalar_lea.vmem [#allocation16], %s635
          %s638 = ssub.s32 32, 32
          %639 = vsyncadd %s633, %s638
          %s640 = smul.addr %s42, 2
          %s641 = smul.addr %s640, 16
          %s642 = scalar_lea.hbm %s8, %s641
          %s644 = sshll.u32 %s636, 4
          %s645 = int_to_ptr.vmem [resolvable:$true] %s644
          %647 = dma.hbm_to_vmem [thread:$0]  %s642, 32, %s645, %s633
        $region60: #{tpu_custom_call.1} parent=27 // pred_fallthru
          _
        // Predicated region
        $region61: #{tpu_custom_call.1} parent=27 // pred_check
          %p648 = pneg %p291
        $region62: #{tpu_custom_call.1} parent=27 // pred_check_branch
          %650 = sbr.rel (%p648) target = $region64
        $region63: #{tpu_custom_call.1} parent=27 // pred_region
          %s651 = sand.u32 %s42, 1
          %s652 = scalar_lea.sflag [#allocation18], %s651
          %s653 = sand.u32 %s281, 1
          %s654 = smul.addr %s653, 512
          %s655 = scalar_lea.vmem [#allocation17], %s654
          %s657 = ssub.s32 8192, 8192
          %658 = vsyncadd %s652, %s657
          %s659 = smul.addr %s42, 128
          %s660 = smul.addr %s659, 64
          %s661 = scalar_lea.hbm %s9, %s660
          %s662 = sshll.u32 %s655, 4
          %s663 = int_to_ptr.vmem [resolvable:$true] %s662
          %668 = dma.hbm_to_vmem [thread:$0]  %s661, 8192, %s663, %s652, 256, 256, 16
        $region64: #{tpu_custom_call.1} parent=27 // pred_fallthru
          _
        // Predicated region
        $region65: #{tpu_custom_call.1} parent=27 // pred_check
          %p669 = pneg %p317
        $region66: #{tpu_custom_call.1} parent=27 // pred_check_branch
          %671 = sbr.rel (%p669) target = $region68
        $region67: #{tpu_custom_call.1} parent=27 // pred_region
          %s672 = sand.u32 %s42, 1
          %s673 = scalar_lea.sflag [#allocation18], %s672
          %s674 = sand.u32 %s307, 1
          %s675 = smul.addr %s674, 4
          %s676 = scalar_lea.vmem [#allocation19], %s675
          %s678 = ssub.s32 64, 64
          %679 = vsyncadd %s673, %s678
          %s680 = smul.addr %s42, 4
          %s681 = smul.addr %s680, 16
          %s682 = scalar_lea.hbm %s10, %s681
          %s684 = sshll.u32 %s676, 4
          %s685 = int_to_ptr.vmem [resolvable:$true] %s684
          %687 = dma.hbm_to_vmem [thread:$0]  %s682, 64, %s685, %s673
        $region68: #{tpu_custom_call.1} parent=27 // pred_fallthru
          _
        // Predicated region
        $region69: #{tpu_custom_call.1} parent=27 // pred_check
          %p688 = pneg %p343
        $region70: #{tpu_custom_call.1} parent=27 // pred_check_branch
          %690 = sbr.rel (%p688) target = $region72
        $region71: #{tpu_custom_call.1} parent=27 // pred_region
          %s691 = sand.u32 %s42, 1
          %s692 = scalar_lea.sflag [#allocation21], %s691
          %s693 = sand.u32 %s333, 1
          %s694 = smul.addr %s693, 512
          %s695 = scalar_lea.vmem [#allocation20], %s694
          %s697 = ssub.s32 8192, 8192
          %698 = vsyncadd %s692, %s697
          %s699 = smul.addr %s42, 128
          %s700 = smul.addr %s699, 64
          %s701 = scalar_lea.hbm %s11, %s700
          %s702 = sshll.u32 %s695, 4
          %s703 = int_to_ptr.vmem [resolvable:$true] %s702
          %708 = dma.hbm_to_vmem [thread:$0]  %s701, 8192, %s703, %s692, 128, 128, 8
        $region72: #{tpu_custom_call.1} parent=27 // pred_fallthru
          _
        // Predicated region
        $region73: #{tpu_custom_call.1} parent=27 // pred_check
          %p709 = pneg %p369
        $region74: #{tpu_custom_call.1} parent=27 // pred_check_branch
          %711 = sbr.rel (%p709) target = $region76
        $region75: #{tpu_custom_call.1} parent=27 // pred_region
          %s712 = sand.u32 %s42, 1
          %s713 = scalar_lea.sflag [#allocation21], %s712
          %s714 = sand.u32 %s359, 1
          %s715 = smul.addr %s714, 2
          %s716 = scalar_lea.vmem [#allocation22], %s715
          %s718 = ssub.s32 32, 32
          %719 = vsyncadd %s713, %s718
          %s720 = smul.addr %s42, 2
          %s721 = smul.addr %s720, 16
          %s722 = scalar_lea.hbm %s12, %s721
          %s724 = sshll.u32 %s716, 4
          %s725 = int_to_ptr.vmem [resolvable:$true] %s724
          %727 = dma.hbm_to_vmem [thread:$0]  %s722, 32, %s725, %s713
        $region76: #{tpu_custom_call.1} parent=27 // pred_fallthru
          _
      $region28: #{tpu_custom_call.1} parent=5 // pred_fallthru
        _
      %p728 = scmp.le.s32.totalorder 1, %s42
      %p729 = scmp.lt.s32.totalorder %s42, 4
      %p730 = pnand %p728, %p729
      %p731 = pneg %p730
      // Predicated region
      $region77: #{tpu_custom_call.1} parent=5 // pred_check
        _
      $region78: #{tpu_custom_call.1} parent=5 // pred_check_branch
        %733 = sbr.rel (%p730) target = $region80
      $region79: #{tpu_custom_call.1} parent=5 // pred_region
        %s734 = ssub.s32 %s42, 1
        // Predicated region
        $region81: #{tpu_custom_call.1} parent=79 // pred_check
          %p735 = pneg %p63
        $region82: #{tpu_custom_call.1} parent=79 // pred_check_branch
          %737 = sbr.rel (%p735) target = $region84
        $region83: #{tpu_custom_call.1} parent=79 // pred_region
          %738 = dma.done [#allocation3], 512
        $region84: #{tpu_custom_call.1} parent=79 // pred_fallthru
          _
        %s739 = sand.u32 %s47, 1
        %s740 = scalar_lea.sflag [#allocation6], %s739
        %s741 = sand.u32 %s76, 1
        %s742 = smul.addr %s741, 768
        %s743 = scalar_lea.vmem [#allocation5], %s742
        // Predicated region
        $region85: #{tpu_custom_call.1} parent=79 // pred_check
          %p744 = pneg %p89
        $region86: #{tpu_custom_call.1} parent=79 // pred_check_branch
          %746 = sbr.rel (%p744) target = $region88
        $region87: #{tpu_custom_call.1} parent=79 // pred_region
          %747 = dma.done %s740, 12288
        $region88: #{tpu_custom_call.1} parent=79 // pred_fallthru
          _
        %s748 = sand.u32 %s47, 1
        %s749 = scalar_lea.sflag [#allocation6], %s748
        %s750 = sand.u32 %s102, 1
        %s751 = smul.addr %s750, 6
        %s752 = scalar_lea.vmem [#allocation7], %s751
        // Predicated region
        $region89: #{tpu_custom_call.1} parent=79 // pred_check
          %p753 = pneg %p115
        $region90: #{tpu_custom_call.1} parent=79 // pred_check_branch
          %755 = sbr.rel (%p753) target = $region92
        $region91: #{tpu_custom_call.1} parent=79 // pred_region
          %756 = dma.done %s749, 96
        $region92: #{tpu_custom_call.1} parent=79 // pred_fallthru
          _
        %s757 = sand.u32 %s47, 1
        %s758 = scalar_lea.sflag [#allocation9], %s757
        %s759 = sand.u32 %s128, 1
        %s760 = smul.addr %s759, 256
        %s761 = scalar_lea.vmem [#allocation8], %s760
        // Predicated region
        $region93: #{tpu_custom_call.1} parent=79 // pred_check
          %p762 = pneg %p141
        $region94: #{tpu_custom_call.1} parent=79 // pred_check_branch
          %764 = sbr.rel (%p762) target = $region96
        $region95: #{tpu_custom_call.1} parent=79 // pred_region
          %765 = dma.done %s758, 4096
        $region96: #{tpu_custom_call.1} parent=79 // pred_fallthru
          _
        %s766 = sand.u32 %s47, 1
        %s767 = scalar_lea.sflag [#allocation9], %s766
        %s768 = sand.u32 %s154, 1
        %s769 = smul.addr %s768, 2
        %s770 = scalar_lea.vmem [#allocation10], %s769
        // Predicated region
        $region97: #{tpu_custom_call.1} parent=79 // pred_check
          %p771 = pneg %p167
        $region98: #{tpu_custom_call.1} parent=79 // pred_check_branch
          %773 = sbr.rel (%p771) target = $region100
        $region99: #{tpu_custom_call.1} parent=79 // pred_region
          %774 = dma.done %s767, 32
        $region100: #{tpu_custom_call.1} parent=79 // pred_fallthru
          _
        %s775 = sand.u32 %s47, 1
        %s776 = scalar_lea.sflag [#allocation12], %s775
        %s777 = sand.u32 %s180, 1
        %s778 = smul.addr %s777, 2
        %s779 = scalar_lea.vmem [#allocation11], %s778
        // Predicated region
        $region101: #{tpu_custom_call.1} parent=79 // pred_check
          %p780 = pneg %p193
        $region102: #{tpu_custom_call.1} parent=79 // pred_check_branch
          %782 = sbr.rel (%p780) target = $region104
        $region103: #{tpu_custom_call.1} parent=79 // pred_region
          %783 = dma.done %s776, 32
        $region104: #{tpu_custom_call.1} parent=79 // pred_fallthru
          _
        %s784 = sand.u32 %s47, 1
        %s785 = scalar_lea.sflag [#allocation12], %s784
        %s786 = sand.u32 %s206, 1
        %s787 = smul.addr %s786, 2
        %s788 = scalar_lea.vmem [#allocation13], %s787
        // Predicated region
        $region105: #{tpu_custom_call.1} parent=79 // pred_check
          %p789 = pneg %p219
        $region106: #{tpu_custom_call.1} parent=79 // pred_check_branch
          %791 = sbr.rel (%p789) target = $region108
        $region107: #{tpu_custom_call.1} parent=79 // pred_region
          %792 = dma.done %s785, 32
        $region108: #{tpu_custom_call.1} parent=79 // pred_fallthru
          _
        %s793 = sand.u32 %s47, 1
        %s794 = scalar_lea.sflag [#allocation15], %s793
        %s795 = sand.u32 %s232, 1
        %s796 = smul.addr %s795, 2
        %s797 = scalar_lea.vmem [#allocation14], %s796
        // Predicated region
        $region109: #{tpu_custom_call.1} parent=79 // pred_check
          %p798 = pneg %p245
        $region110: #{tpu_custom_call.1} parent=79 // pred_check_branch
          %800 = sbr.rel (%p798) target = $region112
        $region111: #{tpu_custom_call.1} parent=79 // pred_region
          %801 = dma.done %s794, 32
        $region112: #{tpu_custom_call.1} parent=79 // pred_fallthru
          _
        %s802 = sand.u32 %s47, 1
        %s803 = scalar_lea.sflag [#allocation15], %s802
        %s804 = sand.u32 %s258, 1
        %s805 = smul.addr %s804, 2
        %s806 = scalar_lea.vmem [#allocation16], %s805
        // Predicated region
        $region113: #{tpu_custom_call.1} parent=79 // pred_check
          %p807 = pneg %p271
        $region114: #{tpu_custom_call.1} parent=79 // pred_check_branch
          %809 = sbr.rel (%p807) target = $region116
        $region115: #{tpu_custom_call.1} parent=79 // pred_region
          %810 = dma.done %s803, 32
        $region116: #{tpu_custom_call.1} parent=79 // pred_fallthru
          _
        %s811 = sand.u32 %s47, 1
        %s812 = scalar_lea.sflag [#allocation18], %s811
        %s813 = sand.u32 %s284, 1
        %s814 = smul.addr %s813, 512
        %s815 = scalar_lea.vmem [#allocation17], %s814
        // Predicated region
        $region117: #{tpu_custom_call.1} parent=79 // pred_check
          %p816 = pneg %p297
        $region118: #{tpu_custom_call.1} parent=79 // pred_check_branch
          %818 = sbr.rel (%p816) target = $region120
        $region119: #{tpu_custom_call.1} parent=79 // pred_region
          %819 = dma.done %s812, 8192
        $region120: #{tpu_custom_call.1} parent=79 // pred_fallthru
          _
        %s820 = sand.u32 %s47, 1
        %s821 = scalar_lea.sflag [#allocation18], %s820
        %s822 = sand.u32 %s310, 1
        %s823 = smul.addr %s822, 4
        %s824 = scalar_lea.vmem [#allocation19], %s823
        // Predicated region
        $region121: #{tpu_custom_call.1} parent=79 // pred_check
          %p825 = pneg %p323
        $region122: #{tpu_custom_call.1} parent=79 // pred_check_branch
          %827 = sbr.rel (%p825) target = $region124
        $region123: #{tpu_custom_call.1} parent=79 // pred_region
          %828 = dma.done %s821, 64
        $region124: #{tpu_custom_call.1} parent=79 // pred_fallthru
          _
        %s829 = sand.u32 %s47, 1
        %s830 = scalar_lea.sflag [#allocation21], %s829
        %s831 = sand.u32 %s336, 1
        %s832 = smul.addr %s831, 512
        %s833 = scalar_lea.vmem [#allocation20], %s832
        // Predicated region
        $region125: #{tpu_custom_call.1} parent=79 // pred_check
          %p834 = pneg %p349
        $region126: #{tpu_custom_call.1} parent=79 // pred_check_branch
          %836 = sbr.rel (%p834) target = $region128
        $region127: #{tpu_custom_call.1} parent=79 // pred_region
          %837 = dma.done %s830, 8192
        $region128: #{tpu_custom_call.1} parent=79 // pred_fallthru
          _
        %s838 = sand.u32 %s47, 1
        %s839 = scalar_lea.sflag [#allocation21], %s838
        %s840 = sand.u32 %s362, 1
        %s841 = smul.addr %s840, 2
        %s842 = scalar_lea.vmem [#allocation22], %s841
        // Predicated region
        $region129: #{tpu_custom_call.1} parent=79 // pred_check
          %p843 = pneg %p375
        $region130: #{tpu_custom_call.1} parent=79 // pred_check_branch
          %845 = sbr.rel (%p843) target = $region132
        $region131: #{tpu_custom_call.1} parent=79 // pred_region
          %846 = dma.done %s839, 32
        $region132: #{tpu_custom_call.1} parent=79 // pred_fallthru
          _
        // Predicated region
        $region133: #{tpu_custom_call.1} parent=79 // pred_check
          %p847 = pneg %p396
        $region134: #{tpu_custom_call.1} parent=79 // pred_check_branch
          %849 = sbr.rel (%p847) target = $region136
        $region135: #{tpu_custom_call.1} parent=79 // pred_region
          %850 = dma.done [#allocation24], 32
        $region136: #{tpu_custom_call.1} parent=79 // pred_fallthru
          _
        // Predicated region
        $region137: #{tpu_custom_call.1} parent=79 // pred_check
          %p851 = pneg %p417
        $region138: #{tpu_custom_call.1} parent=79 // pred_check_branch
          %853 = sbr.rel (%p851) target = $region140
        $region139: #{tpu_custom_call.1} parent=79 // pred_region
          %854 = dma.done [#allocation24], 32
        $region140: #{tpu_custom_call.1} parent=79 // pred_fallthru
          _
        %p855 = pneg %p63
        %p856 = pneg %p60
        %s857 = sand.u32 %s47, 1
        %s858 = scalar_lea.sflag [#allocation6], %s857
        %s859 = sand.u32 %s76, 1
        %s860 = smul.addr %s859, 768
        %s861 = scalar_lea.vmem [#allocation5], %s860
        %p862 = pneg %p89
        %p863 = pneg %p86
        %s864 = sand.u32 %s47, 1
        %s865 = scalar_lea.sflag [#allocation6], %s864
        %s866 = sand.u32 %s102, 1
        %s867 = smul.addr %s866, 6
        %s868 = scalar_lea.vmem [#allocation7], %s867
        %p869 = pneg %p115
        %p870 = pneg %p112
        %s871 = sand.u32 %s47, 1
        %s872 = scalar_lea.sflag [#allocation9], %s871
        %s873 = sand.u32 %s128, 1
        %s874 = smul.addr %s873, 256
        %s875 = scalar_lea.vmem [#allocation8], %s874
        %p876 = pneg %p141
        %p877 = pneg %p138
        %s878 = sand.u32 %s47, 1
        %s879 = scalar_lea.sflag [#allocation9], %s878
        %s880 = sand.u32 %s154, 1
        %s881 = smul.addr %s880, 2
        %s882 = scalar_lea.vmem [#allocation10], %s881
        %p883 = pneg %p167
        %p884 = pneg %p164
        %s885 = sand.u32 %s47, 1
        %s886 = scalar_lea.sflag [#allocation12], %s885
        %s887 = sand.u32 %s180, 1
        %s888 = smul.addr %s887, 2
        %s889 = scalar_lea.vmem [#allocation11], %s888
        %p890 = pneg %p193
        %p891 = pneg %p190
        %s892 = sand.u32 %s47, 1
        %s893 = scalar_lea.sflag [#allocation12], %s892
        %s894 = sand.u32 %s206, 1
        %s895 = smul.addr %s894, 2
        %s896 = scalar_lea.vmem [#allocation13], %s895
        %p897 = pneg %p219
        %p898 = pneg %p216
        %s899 = sand.u32 %s47, 1
        %s900 = scalar_lea.sflag [#allocation15], %s899
        %s901 = sand.u32 %s232, 1
        %s902 = smul.addr %s901, 2
        %s903 = scalar_lea.vmem [#allocation14], %s902
        %p904 = pneg %p245
        %p905 = pneg %p242
        %s906 = sand.u32 %s47, 1
        %s907 = scalar_lea.sflag [#allocation15], %s906
        %s908 = sand.u32 %s258, 1
        %s909 = smul.addr %s908, 2
        %s910 = scalar_lea.vmem [#allocation16], %s909
        %p911 = pneg %p271
        %p912 = pneg %p268
        %s913 = sand.u32 %s47, 1
        %s914 = scalar_lea.sflag [#allocation18], %s913
        %s915 = sand.u32 %s284, 1
        %s916 = smul.addr %s915, 512
        %s917 = scalar_lea.vmem [#allocation17], %s916
        %p918 = pneg %p297
        %p919 = pneg %p294
        %s920 = sand.u32 %s47, 1
        %s921 = scalar_lea.sflag [#allocation18], %s920
        %s922 = sand.u32 %s310, 1
        %s923 = smul.addr %s922, 4
        %s924 = scalar_lea.vmem [#allocation19], %s923
        %p925 = pneg %p323
        %p926 = pneg %p320
        %s927 = sand.u32 %s47, 1
        %s928 = scalar_lea.sflag [#allocation21], %s927
        %s929 = sand.u32 %s336, 1
        %s930 = smul.addr %s929, 512
        %s931 = scalar_lea.vmem [#allocation20], %s930
        %p932 = pneg %p349
        %p933 = pneg %p346
        %s934 = sand.u32 %s47, 1
        %s935 = scalar_lea.sflag [#allocation21], %s934
        %s936 = sand.u32 %s362, 1
        %s937 = smul.addr %s936, 2
        %s938 = scalar_lea.vmem [#allocation22], %s937
        %p939 = pneg %p375
        %p940 = pneg %p372
        %p941 = pneg %p396
        %p942 = pneg %p393
        %p943 = pneg %p417
        %p944 = pneg %p414
        %p945 = pneg %p438
        %p946 = pneg %p435
        %p948 = scmp.eq.s32.totalorder %s47, 0
        // Predicated region
        $region141: #{tpu_custom_call.1} parent=79 // pred_check
          %p949 = pneg %p948
        $region142: #{tpu_custom_call.1} parent=79 // pred_check_branch
          %951 = sbr.rel (%p949) target = $region144
        $region143: #{tpu_custom_call.1} parent=79 // pred_region
          %v952 = vld [vmem:[#allocation2] sm:$0xff]
          %v953 = vld [vmem:[#allocation2 + $0x8] sm:$0xff]
          %v954 = vld [vmem:[#allocation2 + $0x10] sm:$0xff]
          %v955 = vld [vmem:[#allocation2 + $0x18] sm:$0xff]
          %956 = vst [vmem:[#allocation26] sm:$0xff] %v952
          %957 = vst [vmem:[#allocation26 + $0x8] sm:$0xff] %v953
          %958 = vst [vmem:[#allocation26 + $0x10] sm:$0xff] %v954
          %959 = vst [vmem:[#allocation26 + $0x18] sm:$0xff] %v955
        $region144: #{tpu_custom_call.1} parent=79 // pred_fallthru
          _
        %v960 = vld [vmem:[#allocation26] sm:$0xff]
        %v961 = vld [vmem:[#allocation26 + $0x8] sm:$0xff]
        %v962 = vld [vmem:[#allocation26 + $0x10] sm:$0xff]
        %v963 = vld [vmem:[#allocation26 + $0x18] sm:$0xff]
        %v964 = vpack.c.bf16 %v962, %v960
        %v965 = vpack.c.bf16 %v963, %v961
        %v966 = vld [vmem:[%s743] sm:$0xff]
        %v967 = vld [vmem:[%s743 + $0x8] sm:$0xff]
        %v968 = vld [vmem:[%s743 + $0x10] sm:$0xff]
        %v969 = vld [vmem:[%s743 + $0x18] sm:$0xff]
        %v970 = vld [vmem:[%s743 + $0x20] sm:$0xff]
        %v971 = vld [vmem:[%s743 + $0x28] sm:$0xff]
        %v972 = vld [vmem:[%s743 + $0x30] sm:$0xff]
        %v973 = vld [vmem:[%s743 + $0x38] sm:$0xff]
        %v974 = vld [vmem:[%s743 + $0x40] sm:$0xff]
        %v975 = vld [vmem:[%s743 + $0x48] sm:$0xff]
        %v976 = vld [vmem:[%s743 + $0x50] sm:$0xff]
        %v977 = vld [vmem:[%s743 + $0x58] sm:$0xff]
        %v978 = vld [vmem:[%s743 + $0x60] sm:$0xff]
        %v979 = vld [vmem:[%s743 + $0x68] sm:$0xff]
        %v980 = vld [vmem:[%s743 + $0x70] sm:$0xff]
        %v981 = vld [vmem:[%s743 + $0x78] sm:$0xff]
        %v982 = vld [vmem:[%s743 + $0x80] sm:$0xff]
        %v983 = vld [vmem:[%s743 + $0x88] sm:$0xff]
        %v984 = vld [vmem:[%s743 + $0x90] sm:$0xff]
        %v985 = vld [vmem:[%s743 + $0x98] sm:$0xff]
        %v986 = vld [vmem:[%s743 + $0xa0] sm:$0xff]
        %v987 = vld [vmem:[%s743 + $0xa8] sm:$0xff]
        %v988 = vld [vmem:[%s743 + $0xb0] sm:$0xff]
        %v989 = vld [vmem:[%s743 + $0xb8] sm:$0xff]
        %v990 = vld [vmem:[%s743 + $0xc0] sm:$0xff]
        %v991 = vld [vmem:[%s743 + $0xc8] sm:$0xff]
        %v992 = vld [vmem:[%s743 + $0xd0] sm:$0xff]
        %v993 = vld [vmem:[%s743 + $0xd8] sm:$0xff]
        %v994 = vld [vmem:[%s743 + $0xe0] sm:$0xff]
        %v995 = vld [vmem:[%s743 + $0xe8] sm:$0xff]
        %v996 = vld [vmem:[%s743 + $0xf0] sm:$0xff]
        %v997 = vld [vmem:[%s743 + $0xf8] sm:$0xff]
        %v998 = vld [vmem:[%s743 + $0x100] sm:$0xff]
        %v999 = vld [vmem:[%s743 + $0x108] sm:$0xff]
        %v1000 = vld [vmem:[%s743 + $0x110] sm:$0xff]
        %v1001 = vld [vmem:[%s743 + $0x118] sm:$0xff]
        %v1002 = vld [vmem:[%s743 + $0x120] sm:$0xff]
        %v1003 = vld [vmem:[%s743 + $0x128] sm:$0xff]
        %v1004 = vld [vmem:[%s743 + $0x130] sm:$0xff]
        %v1005 = vld [vmem:[%s743 + $0x138] sm:$0xff]
        %v1006 = vld [vmem:[%s743 + $0x140] sm:$0xff]
        %v1007 = vld [vmem:[%s743 + $0x148] sm:$0xff]
        %v1008 = vld [vmem:[%s743 + $0x150] sm:$0xff]
        %v1009 = vld [vmem:[%s743 + $0x158] sm:$0xff]
        %v1010 = vld [vmem:[%s743 + $0x160] sm:$0xff]
        %v1011 = vld [vmem:[%s743 + $0x168] sm:$0xff]
        %v1012 = vld [vmem:[%s743 + $0x170] sm:$0xff]
        %v1013 = vld [vmem:[%s743 + $0x178] sm:$0xff]
        %v1014 = vld [vmem:[%s743 + $0x180] sm:$0xff]
        %v1015 = vld [vmem:[%s743 + $0x188] sm:$0xff]
        %v1016 = vld [vmem:[%s743 + $0x190] sm:$0xff]
        %v1017 = vld [vmem:[%s743 + $0x198] sm:$0xff]
        %v1018 = vld [vmem:[%s743 + $0x1a0] sm:$0xff]
        %v1019 = vld [vmem:[%s743 + $0x1a8] sm:$0xff]
        %v1020 = vld [vmem:[%s743 + $0x1b0] sm:$0xff]
        %v1021 = vld [vmem:[%s743 + $0x1b8] sm:$0xff]
        %v1022 = vld [vmem:[%s743 + $0x1c0] sm:$0xff]
        %v1023 = vld [vmem:[%s743 + $0x1c8] sm:$0xff]
        %v1024 = vld [vmem:[%s743 + $0x1d0] sm:$0xff]
        %v1025 = vld [vmem:[%s743 + $0x1d8] sm:$0xff]
        %v1026 = vld [vmem:[%s743 + $0x1e0] sm:$0xff]
        %v1027 = vld [vmem:[%s743 + $0x1e8] sm:$0xff]
        %v1028 = vld [vmem:[%s743 + $0x1f0] sm:$0xff]
        %v1029 = vld [vmem:[%s743 + $0x1f8] sm:$0xff]
        %v1030 = vld [vmem:[%s743 + $0x200] sm:$0xff]
        %v1031 = vld [vmem:[%s743 + $0x208] sm:$0xff]
        %v1032 = vld [vmem:[%s743 + $0x210] sm:$0xff]
        %v1033 = vld [vmem:[%s743 + $0x218] sm:$0xff]
        %v1034 = vld [vmem:[%s743 + $0x220] sm:$0xff]
        %v1035 = vld [vmem:[%s743 + $0x228] sm:$0xff]
        %v1036 = vld [vmem:[%s743 + $0x230] sm:$0xff]
        %v1037 = vld [vmem:[%s743 + $0x238] sm:$0xff]
        %v1038 = vld [vmem:[%s743 + $0x240] sm:$0xff]
        %v1039 = vld [vmem:[%s743 + $0x248] sm:$0xff]
        %v1040 = vld [vmem:[%s743 + $0x250] sm:$0xff]
        %v1041 = vld [vmem:[%s743 + $0x258] sm:$0xff]
        %v1042 = vld [vmem:[%s743 + $0x260] sm:$0xff]
        %v1043 = vld [vmem:[%s743 + $0x268] sm:$0xff]
        %v1044 = vld [vmem:[%s743 + $0x270] sm:$0xff]
        %v1045 = vld [vmem:[%s743 + $0x278] sm:$0xff]
        %v1046 = vld [vmem:[%s743 + $0x280] sm:$0xff]
        %v1047 = vld [vmem:[%s743 + $0x288] sm:$0xff]
        %v1048 = vld [vmem:[%s743 + $0x290] sm:$0xff]
        %v1049 = vld [vmem:[%s743 + $0x298] sm:$0xff]
        %v1050 = vld [vmem:[%s743 + $0x2a0] sm:$0xff]
        %v1051 = vld [vmem:[%s743 + $0x2a8] sm:$0xff]
        %v1052 = vld [vmem:[%s743 + $0x2b0] sm:$0xff]
        %v1053 = vld [vmem:[%s743 + $0x2b8] sm:$0xff]
        %v1054 = vld [vmem:[%s743 + $0x2c0] sm:$0xff]
        %v1055 = vld [vmem:[%s743 + $0x2c8] sm:$0xff]
        %v1056 = vld [vmem:[%s743 + $0x2d0] sm:$0xff]
        %v1057 = vld [vmem:[%s743 + $0x2d8] sm:$0xff]
        %v1058 = vld [vmem:[%s743 + $0x2e0] sm:$0xff]
        %v1059 = vld [vmem:[%s743 + $0x2e8] sm:$0xff]
        %v1060 = vld [vmem:[%s743 + $0x2f0] sm:$0xff]
        %v1061 = vld [vmem:[%s743 + $0x2f8] sm:$0xff]
        %v1062 = vld [vmem:[%s752] sm:$0x3f]
        %v1064 = vlaneseq
        %v1065 = vshrl.u32 %v1064, 7
        %v1066 = vsub.s32 0, %v1065
        %v1067 = vrot.slane %v1062, %v1066
        %v1068 = vlaneseq
        %v1069 = vshrl.u32 %v1068, 7
        %v1070 = vsub.s32 1, %v1069
        %v1071 = vrot.slane %v1062, %v1070
        %v1072 = vlaneseq
        %v1073 = vshrl.u32 %v1072, 7
        %v1074 = vsub.s32 2, %v1073
        %v1075 = vrot.slane %v1062, %v1074
        %v1076 = vlaneseq
        %v1077 = vshrl.u32 %v1076, 7
        %v1078 = vsub.s32 3, %v1077
        %v1079 = vrot.slane %v1062, %v1078
        %v1080 = vlaneseq
        %v1081 = vshrl.u32 %v1080, 7
        %v1082 = vsub.s32 4, %v1081
        %v1083 = vrot.slane %v1062, %v1082
        %v1084 = vlaneseq
        %v1085 = vshrl.u32 %v1084, 7
        %v1086 = vsub.s32 5, %v1085
        %v1087 = vrot.slane %v1062, %v1086
        %v1190 = vunpack.c.l.b16 %v966
        %v1191 = vunpack.c.h.b16 %v966
        %v1192 = vunpack.c.l.b16 %v967
        %v1193 = vunpack.c.h.b16 %v967
        %v1194 = vunpack.c.l.b16 %v968
        %v1195 = vunpack.c.h.b16 %v968
        %v1196 = vunpack.c.l.b16 %v969
        %v1197 = vunpack.c.h.b16 %v969
        %v1198 = vunpack.c.l.b16 %v970
        %v1199 = vunpack.c.h.b16 %v970
        %v1200 = vunpack.c.l.b16 %v971
        %v1201 = vunpack.c.h.b16 %v971
        %v1202 = vunpack.c.l.b16 %v972
        %v1203 = vunpack.c.h.b16 %v972
        %v1204 = vunpack.c.l.b16 %v973
        %v1205 = vunpack.c.h.b16 %v973
        %v1206 = vunpack.c.l.b16 %v974
        %v1207 = vunpack.c.h.b16 %v974
        %v1208 = vunpack.c.l.b16 %v975
        %v1209 = vunpack.c.h.b16 %v975
        %v1210 = vunpack.c.l.b16 %v976
        %v1211 = vunpack.c.h.b16 %v976
        %v1212 = vunpack.c.l.b16 %v977
        %v1213 = vunpack.c.h.b16 %v977
        %v1214 = vunpack.c.l.b16 %v978
        %v1215 = vunpack.c.h.b16 %v978
        %v1216 = vunpack.c.l.b16 %v979
        %v1217 = vunpack.c.h.b16 %v979
        %v1218 = vunpack.c.l.b16 %v980
        %v1219 = vunpack.c.h.b16 %v980
        %v1220 = vunpack.c.l.b16 %v981
        %v1221 = vunpack.c.h.b16 %v981
        %v1222 = vunpack.c.l.b16 %v982
        %v1223 = vunpack.c.h.b16 %v982
        %v1224 = vunpack.c.l.b16 %v983
        %v1225 = vunpack.c.h.b16 %v983
        %v1226 = vunpack.c.l.b16 %v984
        %v1227 = vunpack.c.h.b16 %v984
        %v1228 = vunpack.c.l.b16 %v985
        %v1229 = vunpack.c.h.b16 %v985
        %v1230 = vunpack.c.l.b16 %v986
        %v1231 = vunpack.c.h.b16 %v986
        %v1232 = vunpack.c.l.b16 %v987
        %v1233 = vunpack.c.h.b16 %v987
        %v1234 = vunpack.c.l.b16 %v988
        %v1235 = vunpack.c.h.b16 %v988
        %v1236 = vunpack.c.l.b16 %v989
        %v1237 = vunpack.c.h.b16 %v989
        %v1238 = vunpack.c.l.b16 %v990
        %v1239 = vunpack.c.h.b16 %v990
        %v1240 = vunpack.c.l.b16 %v991
        %v1241 = vunpack.c.h.b16 %v991
        %v1242 = vunpack.c.l.b16 %v992
        %v1243 = vunpack.c.h.b16 %v992
        %v1244 = vunpack.c.l.b16 %v993
        %v1245 = vunpack.c.h.b16 %v993
        %v1246 = vunpack.c.l.b16 %v994
        %v1247 = vunpack.c.h.b16 %v994
        %v1248 = vunpack.c.l.b16 %v995
        %v1249 = vunpack.c.h.b16 %v995
        %v1250 = vunpack.c.l.b16 %v996
        %v1251 = vunpack.c.h.b16 %v996
        %v1252 = vunpack.c.l.b16 %v997
        %v1253 = vunpack.c.h.b16 %v997
        %v1254 = vunpack.c.l.b16 %v998
        %v1255 = vunpack.c.h.b16 %v998
        %v1256 = vunpack.c.l.b16 %v999
        %v1257 = vunpack.c.h.b16 %v999
        %v1258 = vunpack.c.l.b16 %v1000
        %v1259 = vunpack.c.h.b16 %v1000
        %v1260 = vunpack.c.l.b16 %v1001
        %v1261 = vunpack.c.h.b16 %v1001
        %v1262 = vunpack.c.l.b16 %v1002
        %v1263 = vunpack.c.h.b16 %v1002
        %v1264 = vunpack.c.l.b16 %v1003
        %v1265 = vunpack.c.h.b16 %v1003
        %v1266 = vunpack.c.l.b16 %v1004
        %v1267 = vunpack.c.h.b16 %v1004
        %v1268 = vunpack.c.l.b16 %v1005
        %v1269 = vunpack.c.h.b16 %v1005
        %v1270 = vunpack.c.l.b16 %v1006
        %v1271 = vunpack.c.h.b16 %v1006
        %v1272 = vunpack.c.l.b16 %v1007
        %v1273 = vunpack.c.h.b16 %v1007
        %v1274 = vunpack.c.l.b16 %v1008
        %v1275 = vunpack.c.h.b16 %v1008
        %v1276 = vunpack.c.l.b16 %v1009
        %v1277 = vunpack.c.h.b16 %v1009
        %v1278 = vunpack.c.l.b16 %v1010
        %v1279 = vunpack.c.h.b16 %v1010
        %v1280 = vunpack.c.l.b16 %v1011
        %v1281 = vunpack.c.h.b16 %v1011
        %v1282 = vunpack.c.l.b16 %v1012
        %v1283 = vunpack.c.h.b16 %v1012
        %v1284 = vunpack.c.l.b16 %v1013
        %v1285 = vunpack.c.h.b16 %v1013
        %v1286 = vunpack.c.l.b16 %v1014
        %v1287 = vunpack.c.h.b16 %v1014
        %v1288 = vunpack.c.l.b16 %v1015
        %v1289 = vunpack.c.h.b16 %v1015
        %v1290 = vunpack.c.l.b16 %v1016
        %v1291 = vunpack.c.h.b16 %v1016
        %v1292 = vunpack.c.l.b16 %v1017
        %v1293 = vunpack.c.h.b16 %v1017
        %v1294 = vunpack.c.l.b16 %v1018
        %v1295 = vunpack.c.h.b16 %v1018
        %v1296 = vunpack.c.l.b16 %v1019
        %v1297 = vunpack.c.h.b16 %v1019
        %v1298 = vunpack.c.l.b16 %v1020
        %v1299 = vunpack.c.h.b16 %v1020
        %v1300 = vunpack.c.l.b16 %v1021
        %v1301 = vunpack.c.h.b16 %v1021
        %v1302 = vunpack.c.l.b16 %v1022
        %v1303 = vunpack.c.h.b16 %v1022
        %v1304 = vunpack.c.l.b16 %v1023
        %v1305 = vunpack.c.h.b16 %v1023
        %v1306 = vunpack.c.l.b16 %v1024
        %v1307 = vunpack.c.h.b16 %v1024
        %v1308 = vunpack.c.l.b16 %v1025
        %v1309 = vunpack.c.h.b16 %v1025
        %v1310 = vunpack.c.l.b16 %v1026
        %v1311 = vunpack.c.h.b16 %v1026
        %v1312 = vunpack.c.l.b16 %v1027
        %v1313 = vunpack.c.h.b16 %v1027
        %v1314 = vunpack.c.l.b16 %v1028
        %v1315 = vunpack.c.h.b16 %v1028
        %v1316 = vunpack.c.l.b16 %v1029
        %v1317 = vunpack.c.h.b16 %v1029
        %v1318 = vunpack.c.l.b16 %v1030
        %v1319 = vunpack.c.h.b16 %v1030
        %v1320 = vunpack.c.l.b16 %v1031
        %v1321 = vunpack.c.h.b16 %v1031
        %v1322 = vunpack.c.l.b16 %v1032
        %v1323 = vunpack.c.h.b16 %v1032
        %v1324 = vunpack.c.l.b16 %v1033
        %v1325 = vunpack.c.h.b16 %v1033
        %v1326 = vunpack.c.l.b16 %v1034
        %v1327 = vunpack.c.h.b16 %v1034
        %v1328 = vunpack.c.l.b16 %v1035
        %v1329 = vunpack.c.h.b16 %v1035
        %v1330 = vunpack.c.l.b16 %v1036
        %v1331 = vunpack.c.h.b16 %v1036
        %v1332 = vunpack.c.l.b16 %v1037
        %v1333 = vunpack.c.h.b16 %v1037
        %v1334 = vunpack.c.l.b16 %v1038
        %v1335 = vunpack.c.h.b16 %v1038
        %v1336 = vunpack.c.l.b16 %v1039
        %v1337 = vunpack.c.h.b16 %v1039
        %v1338 = vunpack.c.l.b16 %v1040
        %v1339 = vunpack.c.h.b16 %v1040
        %v1340 = vunpack.c.l.b16 %v1041
        %v1341 = vunpack.c.h.b16 %v1041
        %v1342 = vunpack.c.l.b16 %v1042
        %v1343 = vunpack.c.h.b16 %v1042
        %v1344 = vunpack.c.l.b16 %v1043
        %v1345 = vunpack.c.h.b16 %v1043
        %v1346 = vunpack.c.l.b16 %v1044
        %v1347 = vunpack.c.h.b16 %v1044
        %v1348 = vunpack.c.l.b16 %v1045
        %v1349 = vunpack.c.h.b16 %v1045
        %v1350 = vunpack.c.l.b16 %v1046
        %v1351 = vunpack.c.h.b16 %v1046
        %v1352 = vunpack.c.l.b16 %v1047
        %v1353 = vunpack.c.h.b16 %v1047
        %v1354 = vunpack.c.l.b16 %v1048
        %v1355 = vunpack.c.h.b16 %v1048
        %v1356 = vunpack.c.l.b16 %v1049
        %v1357 = vunpack.c.h.b16 %v1049
        %v1358 = vunpack.c.l.b16 %v1050
        %v1359 = vunpack.c.h.b16 %v1050
        %v1360 = vunpack.c.l.b16 %v1051
        %v1361 = vunpack.c.h.b16 %v1051
        %v1362 = vunpack.c.l.b16 %v1052
        %v1363 = vunpack.c.h.b16 %v1052
        %v1364 = vunpack.c.l.b16 %v1053
        %v1365 = vunpack.c.h.b16 %v1053
        %v1366 = vunpack.c.l.b16 %v1054
        %v1367 = vunpack.c.h.b16 %v1054
        %v1368 = vunpack.c.l.b16 %v1055
        %v1369 = vunpack.c.h.b16 %v1055
        %v1370 = vunpack.c.l.b16 %v1056
        %v1371 = vunpack.c.h.b16 %v1056
        %v1372 = vunpack.c.l.b16 %v1057
        %v1373 = vunpack.c.h.b16 %v1057
        %v1374 = vunpack.c.l.b16 %v1058
        %v1375 = vunpack.c.h.b16 %v1058
        %v1376 = vunpack.c.l.b16 %v1059
        %v1377 = vunpack.c.h.b16 %v1059
        %v1378 = vunpack.c.l.b16 %v1060
        %v1379 = vunpack.c.h.b16 %v1060
        %v1380 = vunpack.c.l.b16 %v1061
        %v1381 = vunpack.c.h.b16 %v1061
        %v1382 = vpack.c.b16 %v1196, %v1190
        %v1383 = vpack.c.b16 %v1197, %v1191
        %v1384 = vpack.c.b16 %v1198, %v1192
        %v1385 = vpack.c.b16 %v1199, %v1193
        %v1386 = vpack.c.b16 %v1200, %v1194
        %v1387 = vpack.c.b16 %v1201, %v1195
        %v1388 = vpack.c.b16 %v1208, %v1202
        %v1389 = vpack.c.b16 %v1209, %v1203
        %v1390 = vpack.c.b16 %v1210, %v1204
        %v1391 = vpack.c.b16 %v1211, %v1205
        %v1392 = vpack.c.b16 %v1212, %v1206
        %v1393 = vpack.c.b16 %v1213, %v1207
        %v1394 = vpack.c.b16 %v1220, %v1214
        %v1395 = vpack.c.b16 %v1221, %v1215
        %v1396 = vpack.c.b16 %v1222, %v1216
        %v1397 = vpack.c.b16 %v1223, %v1217
        %v1398 = vpack.c.b16 %v1224, %v1218
        %v1399 = vpack.c.b16 %v1225, %v1219
        %v1400 = vpack.c.b16 %v1232, %v1226
        %v1401 = vpack.c.b16 %v1233, %v1227
        %v1402 = vpack.c.b16 %v1234, %v1228
        %v1403 = vpack.c.b16 %v1235, %v1229
        %v1404 = vpack.c.b16 %v1236, %v1230
        %v1405 = vpack.c.b16 %v1237, %v1231
        %v1406 = vpack.c.b16 %v1244, %v1238
        %v1407 = vpack.c.b16 %v1245, %v1239
        %v1408 = vpack.c.b16 %v1246, %v1240
        %v1409 = vpack.c.b16 %v1247, %v1241
        %v1410 = vpack.c.b16 %v1248, %v1242
        %v1411 = vpack.c.b16 %v1249, %v1243
        %v1412 = vpack.c.b16 %v1256, %v1250
        %v1413 = vpack.c.b16 %v1257, %v1251
        %v1414 = vpack.c.b16 %v1258, %v1252
        %v1415 = vpack.c.b16 %v1259, %v1253
        %v1416 = vpack.c.b16 %v1260, %v1254
        %v1417 = vpack.c.b16 %v1261, %v1255
        %v1418 = vpack.c.b16 %v1268, %v1262
        %v1419 = vpack.c.b16 %v1269, %v1263
        %v1420 = vpack.c.b16 %v1270, %v1264
        %v1421 = vpack.c.b16 %v1271, %v1265
        %v1422 = vpack.c.b16 %v1272, %v1266
        %v1423 = vpack.c.b16 %v1273, %v1267
        %v1424 = vpack.c.b16 %v1280, %v1274
        %v1425 = vpack.c.b16 %v1281, %v1275
        %v1426 = vpack.c.b16 %v1282, %v1276
        %v1427 = vpack.c.b16 %v1283, %v1277
        %v1428 = vpack.c.b16 %v1284, %v1278
        %v1429 = vpack.c.b16 %v1285, %v1279
        %v1430 = vpack.c.b16 %v1292, %v1286
        %v1431 = vpack.c.b16 %v1293, %v1287
        %v1432 = vpack.c.b16 %v1294, %v1288
        %v1433 = vpack.c.b16 %v1295, %v1289
        %v1434 = vpack.c.b16 %v1296, %v1290
        %v1435 = vpack.c.b16 %v1297, %v1291
        %v1436 = vpack.c.b16 %v1304, %v1298
        %v1437 = vpack.c.b16 %v1305, %v1299
        %v1438 = vpack.c.b16 %v1306, %v1300
        %v1439 = vpack.c.b16 %v1307, %v1301
        %v1440 = vpack.c.b16 %v1308, %v1302
        %v1441 = vpack.c.b16 %v1309, %v1303
        %v1442 = vpack.c.b16 %v1316, %v1310
        %v1443 = vpack.c.b16 %v1317, %v1311
        %v1444 = vpack.c.b16 %v1318, %v1312
        %v1445 = vpack.c.b16 %v1319, %v1313
        %v1446 = vpack.c.b16 %v1320, %v1314
        %v1447 = vpack.c.b16 %v1321, %v1315
        %v1448 = vpack.c.b16 %v1328, %v1322
        %v1449 = vpack.c.b16 %v1329, %v1323
        %v1450 = vpack.c.b16 %v1330, %v1324
        %v1451 = vpack.c.b16 %v1331, %v1325
        %v1452 = vpack.c.b16 %v1332, %v1326
        %v1453 = vpack.c.b16 %v1333, %v1327
        %v1454 = vpack.c.b16 %v1340, %v1334
        %v1455 = vpack.c.b16 %v1341, %v1335
        %v1456 = vpack.c.b16 %v1342, %v1336
        %v1457 = vpack.c.b16 %v1343, %v1337
        %v1458 = vpack.c.b16 %v1344, %v1338
        %v1459 = vpack.c.b16 %v1345, %v1339
        %v1460 = vpack.c.b16 %v1352, %v1346
        %v1461 = vpack.c.b16 %v1353, %v1347
        %v1462 = vpack.c.b16 %v1354, %v1348
        %v1463 = vpack.c.b16 %v1355, %v1349
        %v1464 = vpack.c.b16 %v1356, %v1350
        %v1465 = vpack.c.b16 %v1357, %v1351
        %v1466 = vpack.c.b16 %v1364, %v1358
        %v1467 = vpack.c.b16 %v1365, %v1359
        %v1468 = vpack.c.b16 %v1366, %v1360
        %v1469 = vpack.c.b16 %v1367, %v1361
        %v1470 = vpack.c.b16 %v1368, %v1362
        %v1471 = vpack.c.b16 %v1369, %v1363
        %v1472 = vpack.c.b16 %v1376, %v1370
        %v1473 = vpack.c.b16 %v1377, %v1371
        %v1474 = vpack.c.b16 %v1378, %v1372
        %v1475 = vpack.c.b16 %v1379, %v1373
        %v1476 = vpack.c.b16 %v1380, %v1374
        %v1477 = vpack.c.b16 %v1381, %v1375
        %1574 = vmatprep.subr.bf16.mxu0 %v1425
        %1575 = vmatpush1.bf16.msra.mxu0 %v1424
        %1576 = vmatprep.subr.bf16.mxu0 %v1419
        %1577 = vmatpush1.bf16.msra.mxu0 %v1418
        %1578 = vmatprep.subr.bf16.mxu0 %v1413
        %1579 = vmatpush1.bf16.msra.mxu0 %v1412
        %1580 = vmatprep.subr.bf16.mxu0 %v1407
        %1581 = vmatpush1.bf16.msra.mxu0 %v1406
        %1582 = vmatprep.subr.bf16.mxu0 %v1401
        %1583 = vmatpush1.bf16.msra.mxu0 %v1400
        %1584 = vmatprep.subr.bf16.mxu0 %v1395
        %1585 = vmatpush1.bf16.msra.mxu0 %v1394
        %1586 = vmatprep.subr.bf16.mxu0 %v1389
        %1587 = vmatpush1.bf16.msra.mxu0 %v1388
        %1588 = vmatprep.subr.bf16.mxu0 %v1383
        %1589 = vmatpush1.bf16.msra.mxu0 %v1382
        %1590 = vmatprep.subr.bf16.mxu0 %v1473
        %1591 = vmatpush2.bf16.msra.mxu0 %v1472
        %1592 = vmatprep.subr.bf16.mxu0 %v1467
        %1593 = vmatpush2.bf16.msra.mxu0 %v1466
        %1594 = vmatprep.subr.bf16.mxu0 %v1461
        %1595 = vmatpush2.bf16.msra.mxu0 %v1460
        %1596 = vmatprep.subr.bf16.mxu0 %v1455
        %1597 = vmatpush2.bf16.msra.mxu0 %v1454
        %1598 = vmatprep.subr.bf16.mxu0 %v1449
        %1599 = vmatpush2.bf16.msra.mxu0 %v1448
        %1600 = vmatprep.subr.bf16.mxu0 %v1443
        %1601 = vmatpush2.bf16.msra.mxu0 %v1442
        %1602 = vmatprep.subr.bf16.mxu0 %v1437
        %1603 = vmatpush2.bf16.msra.mxu0 %v1436
        %1604 = vmatprep.subr.bf16.mxu0 %v1431
        %1605 = vmatpush2.bf16.msra.mxu0 %v1430
        %1606 = vmatprep.mubr.bf16.mxu0 %v965
        %1607 = vmatmul.mubr.bf16.gmra.mxu0 %v964
        %v1608 = vpop.f32.mrf.mxu0
        %v1609 = vadd.f32 %v1067, %v1608
        %v1610 = vpop.f32.mrf.mxu0
        %v1611 = vadd.f32 %v1071, %v1610
        %v1612 = vpop.f32.mrf.mxu0
        %v1613 = vadd.f32 %v1067, %v1612
        %v1614 = vpop.f32.mrf.mxu0
        %v1615 = vadd.f32 %v1071, %v1614
        %1616 = vdwg.mxu0
        %1617 = vmatprep.subr.bf16.mxu0 %v1427
        %1618 = vmatpush1.bf16.msra.mxu0 %v1426
        %1619 = vmatprep.subr.bf16.mxu0 %v1421
        %1620 = vmatpush1.bf16.msra.mxu0 %v1420
        %1621 = vmatprep.subr.bf16.mxu0 %v1415
        %1622 = vmatpush1.bf16.msra.mxu0 %v1414
        %1623 = vmatprep.subr.bf16.mxu0 %v1409
        %1624 = vmatpush1.bf16.msra.mxu0 %v1408
        %1625 = vmatprep.subr.bf16.mxu0 %v1403
        %1626 = vmatpush1.bf16.msra.mxu0 %v1402
        %1627 = vmatprep.subr.bf16.mxu0 %v1397
        %1628 = vmatpush1.bf16.msra.mxu0 %v1396
        %1629 = vmatprep.subr.bf16.mxu0 %v1391
        %1630 = vmatpush1.bf16.msra.mxu0 %v1390
        %1631 = vmatprep.subr.bf16.mxu0 %v1385
        %1632 = vmatpush1.bf16.msra.mxu0 %v1384
        %1633 = vmatprep.subr.bf16.mxu0 %v1475
        %1634 = vmatpush2.bf16.msra.mxu0 %v1474
        %1635 = vmatprep.subr.bf16.mxu0 %v1469
        %1636 = vmatpush2.bf16.msra.mxu0 %v1468
        %1637 = vmatprep.subr.bf16.mxu0 %v1463
        %1638 = vmatpush2.bf16.msra.mxu0 %v1462
        %1639 = vmatprep.subr.bf16.mxu0 %v1457
        %1640 = vmatpush2.bf16.msra.mxu0 %v1456
        %1641 = vmatprep.subr.bf16.mxu0 %v1451
        %1642 = vmatpush2.bf16.msra.mxu0 %v1450
        %1643 = vmatprep.subr.bf16.mxu0 %v1445
        %1644 = vmatpush2.bf16.msra.mxu0 %v1444
        %1645 = vmatprep.subr.bf16.mxu0 %v1439
        %1646 = vmatpush2.bf16.msra.mxu0 %v1438
        %1647 = vmatprep.subr.bf16.mxu0 %v1433
        %1648 = vmatpush2.bf16.msra.mxu0 %v1432
        %1649 = vmatprep.mubr.bf16.mxu0 %v965
        %1650 = vmatmul.mubr.bf16.gmra.mxu0 %v964
        %v1651 = vpop.f32.mrf.mxu0
        %v1652 = vadd.f32 %v1075, %v1651
        %v1653 = vpop.f32.mrf.mxu0
        %v1654 = vadd.f32 %v1079, %v1653
        %v1655 = vpop.f32.mrf.mxu0
        %v1656 = vadd.f32 %v1075, %v1655
        %v1657 = vpop.f32.mrf.mxu0
        %v1658 = vadd.f32 %v1079, %v1657
        %1659 = vdwg.mxu0
        %1660 = vmatprep.subr.bf16.mxu0 %v1429
        %1661 = vmatpush1.bf16.msra.mxu0 %v1428
        %1662 = vmatprep.subr.bf16.mxu0 %v1423
        %1663 = vmatpush1.bf16.msra.mxu0 %v1422
        %1664 = vmatprep.subr.bf16.mxu0 %v1417
        %1665 = vmatpush1.bf16.msra.mxu0 %v1416
        %1666 = vmatprep.subr.bf16.mxu0 %v1411
        %1667 = vmatpush1.bf16.msra.mxu0 %v1410
        %1668 = vmatprep.subr.bf16.mxu0 %v1405
        %1669 = vmatpush1.bf16.msra.mxu0 %v1404
        %1670 = vmatprep.subr.bf16.mxu0 %v1399
        %1671 = vmatpush1.bf16.msra.mxu0 %v1398
        %1672 = vmatprep.subr.bf16.mxu0 %v1393
        %1673 = vmatpush1.bf16.msra.mxu0 %v1392
        %1674 = vmatprep.subr.bf16.mxu0 %v1387
        %1675 = vmatpush1.bf16.msra.mxu0 %v1386
        %1676 = vmatprep.subr.bf16.mxu0 %v1477
        %1677 = vmatpush2.bf16.msra.mxu0 %v1476
        %1678 = vmatprep.subr.bf16.mxu0 %v1471
        %1679 = vmatpush2.bf16.msra.mxu0 %v1470
        %1680 = vmatprep.subr.bf16.mxu0 %v1465
        %1681 = vmatpush2.bf16.msra.mxu0 %v1464
        %1682 = vmatprep.subr.bf16.mxu0 %v1459
        %1683 = vmatpush2.bf16.msra.mxu0 %v1458
        %1684 = vmatprep.subr.bf16.mxu0 %v1453
        %1685 = vmatpush2.bf16.msra.mxu0 %v1452
        %1686 = vmatprep.subr.bf16.mxu0 %v1447
        %1687 = vmatpush2.bf16.msra.mxu0 %v1446
        %1688 = vmatprep.subr.bf16.mxu0 %v1441
        %1689 = vmatpush2.bf16.msra.mxu0 %v1440
        %1690 = vmatprep.subr.bf16.mxu0 %v1435
        %1691 = vmatpush2.bf16.msra.mxu0 %v1434
        %1692 = vmatprep.mubr.bf16.mxu0 %v965
        %1693 = vmatmul.mubr.bf16.gmra.mxu0 %v964
        %v1694 = vpop.f32.mrf.mxu0
        %v1695 = vadd.f32 %v1083, %v1694
        %v1696 = vpop.f32.mrf.mxu0
        %v1697 = vadd.f32 %v1087, %v1696
        %v1698 = vpop.f32.mrf.mxu0
        %v1699 = vadd.f32 %v1083, %v1698
        %v1700 = vpop.f32.mrf.mxu0
        %v1701 = vadd.f32 %v1087, %v1700
        %1702 = vdwg.mxu0
        %v1703 = vpack.c.bf16 %v1609, %v1609
        %v1704 = vpack.c.bf16 %v1613, %v1613
        %v1705 = vpack.c.bf16 %v1652, %v1652
        %v1706 = vpack.c.bf16 %v1656, %v1656
        %vm1707 = vcmask 523264
        %v1709 = vsel %vm1707, %v1703, 0
        %v1712 = vsel %vm1707, %v1705, 0
        %1714 = vmatprep.subr.bf16.mxu0 0
        %1715 = vmatpush1.bf16.xpose.msra.mxu0 0
        %1716 = vmatprep.subr.bf16.mxu0 0
        %1717 = vmatpush1.bf16.xpose.msra.mxu0 0
        %1718 = vmatprep.subr.bf16.mxu0 0
        %1719 = vmatpush1.bf16.xpose.msra.mxu0 0
        %1720 = vmatprep.subr.bf16.mxu0 0
        %1721 = vmatpush1.bf16.xpose.msra.mxu0 0
        %1722 = vmatprep.subr.bf16.mxu0 0
        %1723 = vmatpush1.bf16.xpose.msra.mxu0 0
        %1724 = vmatprep.subr.bf16.mxu0 0
        %1725 = vmatpush1.bf16.xpose.msra.mxu0 0
        %1726 = vmatprep.subr.bf16.mxu0 0
        %1727 = vmatpush1.bf16.xpose.msra.mxu0 0
        %1728 = vmatprep.subr.bf16.mxu0 0
        %1729 = vmatpush1.bf16.xpose.msra.mxu0 %v1712
        %1730 = vmatprep.subr.bf16.mxu0 0
        %1731 = vmatpush2.bf16.xpose.msra.mxu0 0
        %1732 = vmatprep.subr.bf16.mxu0 0
        %1733 = vmatpush2.bf16.xpose.msra.mxu0 0
        %1734 = vmatprep.subr.bf16.mxu0 0
        %1735 = vmatpush2.bf16.xpose.msra.mxu0 0
        %1736 = vmatprep.subr.bf16.mxu0 0
        %1737 = vmatpush2.bf16.xpose.msra.mxu0 0
        %1738 = vmatprep.subr.bf16.mxu0 0
        %1739 = vmatpush2.bf16.xpose.msra.mxu0 0
        %1740 = vmatprep.subr.bf16.mxu0 0
        %1741 = vmatpush2.bf16.xpose.msra.mxu0 0
        %1742 = vmatprep.subr.bf16.mxu0 0
        %1743 = vmatpush2.bf16.xpose.msra.mxu0 0
        %1744 = vmatprep.subr.bf16.mxu0 0
        %1745 = vmatpush2.bf16.xpose.msra.mxu0 0
        %1746 = vmatprep.mubr.bf16.mxu0 0
        %1747 = vmatmul.mubr.bf16.gmra.mxu0 %v1709
        %v1748 = vpop.f32.mrf.mxu0
        %v1749 = vadd.f32 0.0, %v1748
        %v1750 = vpop.f32.mrf.mxu0
        %v1751 = vpop.f32.mrf.mxu0
        %v1752 = vpop.f32.mrf.mxu0
        %1753 = vdwg.mxu0
        %v1755 = vsel %vm1707, %v1704, 0
        %v1758 = vsel %vm1707, %v1706, 0
        %1760 = vmatprep.subr.bf16.mxu0 0
        %1761 = vmatpush1.bf16.xpose.msra.mxu0 0
        %1762 = vmatprep.subr.bf16.mxu0 0
        %1763 = vmatpush1.bf16.xpose.msra.mxu0 0
        %1764 = vmatprep.subr.bf16.mxu0 0
        %1765 = vmatpush1.bf16.xpose.msra.mxu0 0
        %1766 = vmatprep.subr.bf16.mxu0 0
        %1767 = vmatpush1.bf16.xpose.msra.mxu0 0
        %1768 = vmatprep.subr.bf16.mxu0 0
        %1769 = vmatpush1.bf16.xpose.msra.mxu0 0
        %1770 = vmatprep.subr.bf16.mxu0 0
        %1771 = vmatpush1.bf16.xpose.msra.mxu0 0
        %1772 = vmatprep.subr.bf16.mxu0 0
        %1773 = vmatpush1.bf16.xpose.msra.mxu0 0
        %1774 = vmatprep.subr.bf16.mxu0 0
        %1775 = vmatpush1.bf16.xpose.msra.mxu0 %v1758
        %1776 = vmatprep.subr.bf16.mxu0 0
        %1777 = vmatpush2.bf16.xpose.msra.mxu0 0
        %1778 = vmatprep.subr.bf16.mxu0 0
        %1779 = vmatpush2.bf16.xpose.msra.mxu0 0
        %1780 = vmatprep.subr.bf16.mxu0 0
        %1781 = vmatpush2.bf16.xpose.msra.mxu0 0
        %1782 = vmatprep.subr.bf16.mxu0 0
        %1783 = vmatpush2.bf16.xpose.msra.mxu0 0
        %1784 = vmatprep.subr.bf16.mxu0 0
        %1785 = vmatpush2.bf16.xpose.msra.mxu0 0
        %1786 = vmatprep.subr.bf16.mxu0 0
        %1787 = vmatpush2.bf16.xpose.msra.mxu0 0
        %1788 = vmatprep.subr.bf16.mxu0 0
        %1789 = vmatpush2.bf16.xpose.msra.mxu0 0
        %1790 = vmatprep.subr.bf16.mxu0 0
        %1791 = vmatpush2.bf16.xpose.msra.mxu0 0
        %1792 = vmatprep.mubr.bf16.mxu0 0
        %1793 = vmatmul.mubr.bf16.gmra.mxu0 %v1755
        %v1794 = vpop.f32.mrf.mxu0
        %v1795 = vadd.f32 0.0, %v1794
        %v1796 = vpop.f32.mrf.mxu0
        %v1797 = vpop.f32.mrf.mxu0
        %v1798 = vpop.f32.mrf.mxu0
        %1799 = vdwg.mxu0
        %vm1800 = vcmask 64512
        %v1801 = vsel %vm1800, %v1749, -inf
        %1802 = vmax.xlane.f32.xlu0 %v1801
        %v1803 = vpop.xlane.xlu0 %1802
        %v1804 = vsel %vm1800, %v1795, -inf
        %1805 = vmax.xlane.f32.xlu0 %v1804
        %v1806 = vpop.xlane.xlu0 %1805
        %v1807 = vsub.f32 %v1749, %v1803
        %v1808 = vsub.f32 %v1795, %v1806
        %v1809 = vmul.f32 %v1807, 1.442695
        %v1810 = vpow.pop %v1809
        %v1811 = vmul.f32 %v1808, 1.442695
        %v1812 = vpow.pop %v1811
        %v1813 = vsel %vm1800, %v1810, 0.0
        %1814 = vadd.xlane.f32.xlu0 %v1813
        %v1815 = vpop.xlane.xlu0 %1814
        %v1816 = vsel %vm1800, %v1812, 0.0
        %1817 = vadd.xlane.f32.xlu0 %v1816
        %v1818 = vpop.xlane.xlu0 %1817
        %v1819 = vrcp.pop %v1815
        %v1820 = vrcp.pop %v1818
        %v1821 = vmul.f32 %v1810, %v1819
        %v1822 = vmul.f32 %v1812, %v1820
        %v1823 = vpack.c.bf16 %v1821, %v1821
        %v1824 = vpack.c.bf16 %v1822, %v1822
        %v1825 = vpack.c.bf16 %v1695, %v1695
        %v1826 = vpack.c.bf16 %v1699, %v1699
        %v1828 = vsel %vm1800, %v1823, 0
        %vm1830 = vcmask 1043456
        %v1832 = vsel %vm1830, %v1825, 0
        %1834 = vmatprep.subr.bf16.mxu0 0
        %1835 = vmatpush1.bf16.msra.mxu0 0
        %1836 = vmatprep.subr.bf16.mxu0 0
        %1837 = vmatpush1.bf16.msra.mxu0 0
        %1838 = vmatprep.subr.bf16.mxu0 0
        %1839 = vmatpush1.bf16.msra.mxu0 0
        %1840 = vmatprep.subr.bf16.mxu0 0
        %1841 = vmatpush1.bf16.msra.mxu0 0
        %1842 = vmatprep.subr.bf16.mxu0 0
        %1843 = vmatpush1.bf16.msra.mxu0 0
        %1844 = vmatprep.subr.bf16.mxu0 0
        %1845 = vmatpush1.bf16.msra.mxu0 0
        %1846 = vmatprep.subr.bf16.mxu0 0
        %1847 = vmatpush1.bf16.msra.mxu0 0
        %1848 = vmatprep.subr.bf16.mxu0 0
        %1849 = vmatpush1.bf16.msra.mxu0 %v1832
        %1850 = vmatprep.subr.bf16.mxu0 0
        %1851 = vmatpush2.bf16.msra.mxu0 0
        %1852 = vmatprep.subr.bf16.mxu0 0
        %1853 = vmatpush2.bf16.msra.mxu0 0
        %1854 = vmatprep.subr.bf16.mxu0 0
        %1855 = vmatpush2.bf16.msra.mxu0 0
        %1856 = vmatprep.subr.bf16.mxu0 0
        %1857 = vmatpush2.bf16.msra.mxu0 0
        %1858 = vmatprep.subr.bf16.mxu0 0
        %1859 = vmatpush2.bf16.msra.mxu0 0
        %1860 = vmatprep.subr.bf16.mxu0 0
        %1861 = vmatpush2.bf16.msra.mxu0 0
        %1862 = vmatprep.subr.bf16.mxu0 0
        %1863 = vmatpush2.bf16.msra.mxu0 0
        %1864 = vmatprep.subr.bf16.mxu0 0
        %1865 = vmatpush2.bf16.msra.mxu0 0
        %1866 = vmatprep.mubr.bf16.mxu0 0
        %1867 = vmatmul.mubr.bf16.gmra.mxu0 %v1828
        %v1868 = vpop.f32.mrf.mxu0
        %v1869 = vadd.f32 0.0, %v1868
        %v1870 = vpop.f32.mrf.mxu0
        %v1871 = vpop.f32.mrf.mxu0
        %v1872 = vpop.f32.mrf.mxu0
        %1873 = vdwg.mxu0
        %v1875 = vsel %vm1800, %v1824, 0
        %v1878 = vsel %vm1830, %v1826, 0
        %1880 = vmatprep.subr.bf16.mxu0 0
        %1881 = vmatpush1.bf16.msra.mxu0 0
        %1882 = vmatprep.subr.bf16.mxu0 0
        %1883 = vmatpush1.bf16.msra.mxu0 0
        %1884 = vmatprep.subr.bf16.mxu0 0
        %1885 = vmatpush1.bf16.msra.mxu0 0
        %1886 = vmatprep.subr.bf16.mxu0 0
        %1887 = vmatpush1.bf16.msra.mxu0 0
        %1888 = vmatprep.subr.bf16.mxu0 0
        %1889 = vmatpush1.bf16.msra.mxu0 0
        %1890 = vmatprep.subr.bf16.mxu0 0
        %1891 = vmatpush1.bf16.msra.mxu0 0
        %1892 = vmatprep.subr.bf16.mxu0 0
        %1893 = vmatpush1.bf16.msra.mxu0 0
        %1894 = vmatprep.subr.bf16.mxu0 0
        %1895 = vmatpush1.bf16.msra.mxu0 %v1878
        %1896 = vmatprep.subr.bf16.mxu0 0
        %1897 = vmatpush2.bf16.msra.mxu0 0
        %1898 = vmatprep.subr.bf16.mxu0 0
        %1899 = vmatpush2.bf16.msra.mxu0 0
        %1900 = vmatprep.subr.bf16.mxu0 0
        %1901 = vmatpush2.bf16.msra.mxu0 0
        %1902 = vmatprep.subr.bf16.mxu0 0
        %1903 = vmatpush2.bf16.msra.mxu0 0
        %1904 = vmatprep.subr.bf16.mxu0 0
        %1905 = vmatpush2.bf16.msra.mxu0 0
        %1906 = vmatprep.subr.bf16.mxu0 0
        %1907 = vmatpush2.bf16.msra.mxu0 0
        %1908 = vmatprep.subr.bf16.mxu0 0
        %1909 = vmatpush2.bf16.msra.mxu0 0
        %1910 = vmatprep.subr.bf16.mxu0 0
        %1911 = vmatpush2.bf16.msra.mxu0 0
        %1912 = vmatprep.mubr.bf16.mxu0 0
        %1913 = vmatmul.mubr.bf16.gmra.mxu0 %v1875
        %v1914 = vpop.f32.mrf.mxu0
        %v1915 = vadd.f32 0.0, %v1914
        %v1916 = vpop.f32.mrf.mxu0
        %v1917 = vpop.f32.mrf.mxu0
        %v1918 = vpop.f32.mrf.mxu0
        %1919 = vdwg.mxu0
        %1921 = vrot.lane.b32.xlu0 %v1703, 64
        %v1922 = vpop.permute.xlu0 %1921
        %1924 = vrot.lane.b32.xlu0 %v1705, 64
        %v1925 = vpop.permute.xlu0 %1924
        %v1927 = vsel %vm1707, %v1922, 0
        %v1930 = vsel %vm1707, %v1925, 0
        %1932 = vmatprep.subr.bf16.mxu0 0
        %1933 = vmatpush1.bf16.xpose.msra.mxu0 0
        %1934 = vmatprep.subr.bf16.mxu0 0
        %1935 = vmatpush1.bf16.xpose.msra.mxu0 0
        %1936 = vmatprep.subr.bf16.mxu0 0
        %1937 = vmatpush1.bf16.xpose.msra.mxu0 0
        %1938 = vmatprep.subr.bf16.mxu0 0
        %1939 = vmatpush1.bf16.xpose.msra.mxu0 0
        %1940 = vmatprep.subr.bf16.mxu0 0
        %1941 = vmatpush1.bf16.xpose.msra.mxu0 0
        %1942 = vmatprep.subr.bf16.mxu0 0
        %1943 = vmatpush1.bf16.xpose.msra.mxu0 0
        %1944 = vmatprep.subr.bf16.mxu0 0
        %1945 = vmatpush1.bf16.xpose.msra.mxu0 0
        %1946 = vmatprep.subr.bf16.mxu0 0
        %1947 = vmatpush1.bf16.xpose.msra.mxu0 %v1930
        %1948 = vmatprep.subr.bf16.mxu0 0
        %1949 = vmatpush2.bf16.xpose.msra.mxu0 0
        %1950 = vmatprep.subr.bf16.mxu0 0
        %1951 = vmatpush2.bf16.xpose.msra.mxu0 0
        %1952 = vmatprep.subr.bf16.mxu0 0
        %1953 = vmatpush2.bf16.xpose.msra.mxu0 0
        %1954 = vmatprep.subr.bf16.mxu0 0
        %1955 = vmatpush2.bf16.xpose.msra.mxu0 0
        %1956 = vmatprep.subr.bf16.mxu0 0
        %1957 = vmatpush2.bf16.xpose.msra.mxu0 0
        %1958 = vmatprep.subr.bf16.mxu0 0
        %1959 = vmatpush2.bf16.xpose.msra.mxu0 0
        %1960 = vmatprep.subr.bf16.mxu0 0
        %1961 = vmatpush2.bf16.xpose.msra.mxu0 0
        %1962 = vmatprep.subr.bf16.mxu0 0
        %1963 = vmatpush2.bf16.xpose.msra.mxu0 0
        %1964 = vmatprep.mubr.bf16.mxu0 0
        %1965 = vmatmul.mubr.bf16.gmra.mxu0 %v1927
        %v1966 = vpop.f32.mrf.mxu0
        %v1967 = vadd.f32 0.0, %v1966
        %v1968 = vpop.f32.mrf.mxu0
        %v1969 = vpop.f32.mrf.mxu0
        %v1970 = vpop.f32.mrf.mxu0
        %1971 = vdwg.mxu0
        %1973 = vrot.lane.b32.xlu0 %v1704, 64
        %v1974 = vpop.permute.xlu0 %1973
        %1976 = vrot.lane.b32.xlu0 %v1706, 64
        %v1977 = vpop.permute.xlu0 %1976
        %v1979 = vsel %vm1707, %v1974, 0
        %v1982 = vsel %vm1707, %v1977, 0
        %1984 = vmatprep.subr.bf16.mxu0 0
        %1985 = vmatpush1.bf16.xpose.msra.mxu0 0
        %1986 = vmatprep.subr.bf16.mxu0 0
        %1987 = vmatpush1.bf16.xpose.msra.mxu0 0
        %1988 = vmatprep.subr.bf16.mxu0 0
        %1989 = vmatpush1.bf16.xpose.msra.mxu0 0
        %1990 = vmatprep.subr.bf16.mxu0 0
        %1991 = vmatpush1.bf16.xpose.msra.mxu0 0
        %1992 = vmatprep.subr.bf16.mxu0 0
        %1993 = vmatpush1.bf16.xpose.msra.mxu0 0
        %1994 = vmatprep.subr.bf16.mxu0 0
        %1995 = vmatpush1.bf16.xpose.msra.mxu0 0
        %1996 = vmatprep.subr.bf16.mxu0 0
        %1997 = vmatpush1.bf16.xpose.msra.mxu0 0
        %1998 = vmatprep.subr.bf16.mxu0 0
        %1999 = vmatpush1.bf16.xpose.msra.mxu0 %v1982
        %2000 = vmatprep.subr.bf16.mxu0 0
        %2001 = vmatpush2.bf16.xpose.msra.mxu0 0
        %2002 = vmatprep.subr.bf16.mxu0 0
        %2003 = vmatpush2.bf16.xpose.msra.mxu0 0
        %2004 = vmatprep.subr.bf16.mxu0 0
        %2005 = vmatpush2.bf16.xpose.msra.mxu0 0
        %2006 = vmatprep.subr.bf16.mxu0 0
        %2007 = vmatpush2.bf16.xpose.msra.mxu0 0
        %2008 = vmatprep.subr.bf16.mxu0 0
        %2009 = vmatpush2.bf16.xpose.msra.mxu0 0
        %2010 = vmatprep.subr.bf16.mxu0 0
        %2011 = vmatpush2.bf16.xpose.msra.mxu0 0
        %2012 = vmatprep.subr.bf16.mxu0 0
        %2013 = vmatpush2.bf16.xpose.msra.mxu0 0
        %2014 = vmatprep.subr.bf16.mxu0 0
        %2015 = vmatpush2.bf16.xpose.msra.mxu0 0
        %2016 = vmatprep.mubr.bf16.mxu0 0
        %2017 = vmatmul.mubr.bf16.gmra.mxu0 %v1979
        %v2018 = vpop.f32.mrf.mxu0
        %v2019 = vadd.f32 0.0, %v2018
        %v2020 = vpop.f32.mrf.mxu0
        %v2021 = vpop.f32.mrf.mxu0
        %v2022 = vpop.f32.mrf.mxu0
        %2023 = vdwg.mxu0
        %v2024 = vsel %vm1800, %v1967, -inf
        %2025 = vmax.xlane.f32.xlu0 %v2024
        %v2026 = vpop.xlane.xlu0 %2025
        %v2027 = vsel %vm1800, %v2019, -inf
        %2028 = vmax.xlane.f32.xlu0 %v2027
        %v2029 = vpop.xlane.xlu0 %2028
        %v2030 = vsub.f32 %v1967, %v2026
        %v2031 = vsub.f32 %v2019, %v2029
        %v2032 = vmul.f32 %v2030, 1.442695
        %v2033 = vpow.pop %v2032
        %v2034 = vmul.f32 %v2031, 1.442695
        %v2035 = vpow.pop %v2034
        %v2036 = vsel %vm1800, %v2033, 0.0
        %2037 = vadd.xlane.f32.xlu0 %v2036
        %v2038 = vpop.xlane.xlu0 %2037
        %v2039 = vsel %vm1800, %v2035, 0.0
        %2040 = vadd.xlane.f32.xlu0 %v2039
        %v2041 = vpop.xlane.xlu0 %2040
        %v2042 = vrcp.pop %v2038
        %v2043 = vrcp.pop %v2041
        %v2044 = vmul.f32 %v2033, %v2042
        %v2045 = vmul.f32 %v2035, %v2043
        %v2046 = vpack.c.bf16 %v2044, %v2044
        %v2047 = vpack.c.bf16 %v2045, %v2045
        %2049 = vrot.lane.b32.xlu0 %v1825, 64
        %v2050 = vpop.permute.xlu0 %2049
        %v2052 = vsel %vm1800, %v2046, 0
        %v2055 = vsel %vm1830, %v2050, 0
        %2057 = vmatprep.subr.bf16.mxu0 0
        %2058 = vmatpush1.bf16.msra.mxu0 0
        %2059 = vmatprep.subr.bf16.mxu0 0
        %2060 = vmatpush1.bf16.msra.mxu0 0
        %2061 = vmatprep.subr.bf16.mxu0 0
        %2062 = vmatpush1.bf16.msra.mxu0 0
        %2063 = vmatprep.subr.bf16.mxu0 0
        %2064 = vmatpush1.bf16.msra.mxu0 0
        %2065 = vmatprep.subr.bf16.mxu0 0
        %2066 = vmatpush1.bf16.msra.mxu0 0
        %2067 = vmatprep.subr.bf16.mxu0 0
        %2068 = vmatpush1.bf16.msra.mxu0 0
        %2069 = vmatprep.subr.bf16.mxu0 0
        %2070 = vmatpush1.bf16.msra.mxu0 0
        %2071 = vmatprep.subr.bf16.mxu0 0
        %2072 = vmatpush1.bf16.msra.mxu0 %v2055
        %2073 = vmatprep.subr.bf16.mxu0 0
        %2074 = vmatpush2.bf16.msra.mxu0 0
        %2075 = vmatprep.subr.bf16.mxu0 0
        %2076 = vmatpush2.bf16.msra.mxu0 0
        %2077 = vmatprep.subr.bf16.mxu0 0
        %2078 = vmatpush2.bf16.msra.mxu0 0
        %2079 = vmatprep.subr.bf16.mxu0 0
        %2080 = vmatpush2.bf16.msra.mxu0 0
        %2081 = vmatprep.subr.bf16.mxu0 0
        %2082 = vmatpush2.bf16.msra.mxu0 0
        %2083 = vmatprep.subr.bf16.mxu0 0
        %2084 = vmatpush2.bf16.msra.mxu0 0
        %2085 = vmatprep.subr.bf16.mxu0 0
        %2086 = vmatpush2.bf16.msra.mxu0 0
        %2087 = vmatprep.subr.bf16.mxu0 0
        %2088 = vmatpush2.bf16.msra.mxu0 0
        %2089 = vmatprep.mubr.bf16.mxu0 0
        %2090 = vmatmul.mubr.bf16.gmra.mxu0 %v2052
        %v2091 = vpop.f32.mrf.mxu0
        %v2092 = vadd.f32 0.0, %v2091
        %v2093 = vpop.f32.mrf.mxu0
        %v2094 = vpop.f32.mrf.mxu0
        %v2095 = vpop.f32.mrf.mxu0
        %2096 = vdwg.mxu0
        %2098 = vrot.lane.b32.xlu0 %v1826, 64
        %v2099 = vpop.permute.xlu0 %2098
        %v2101 = vsel %vm1800, %v2047, 0
        %v2104 = vsel %vm1830, %v2099, 0
        %2106 = vmatprep.subr.bf16.mxu0 0
        %2107 = vmatpush1.bf16.msra.mxu0 0
        %2108 = vmatprep.subr.bf16.mxu0 0
        %2109 = vmatpush1.bf16.msra.mxu0 0
        %2110 = vmatprep.subr.bf16.mxu0 0
        %2111 = vmatpush1.bf16.msra.mxu0 0
        %2112 = vmatprep.subr.bf16.mxu0 0
        %2113 = vmatpush1.bf16.msra.mxu0 0
        %2114 = vmatprep.subr.bf16.mxu0 0
        %2115 = vmatpush1.bf16.msra.mxu0 0
        %2116 = vmatprep.subr.bf16.mxu0 0
        %2117 = vmatpush1.bf16.msra.mxu0 0
        %2118 = vmatprep.subr.bf16.mxu0 0
        %2119 = vmatpush1.bf16.msra.mxu0 0
        %2120 = vmatprep.subr.bf16.mxu0 0
        %2121 = vmatpush1.bf16.msra.mxu0 %v2104
        %2122 = vmatprep.subr.bf16.mxu0 0
        %2123 = vmatpush2.bf16.msra.mxu0 0
        %2124 = vmatprep.subr.bf16.mxu0 0
        %2125 = vmatpush2.bf16.msra.mxu0 0
        %2126 = vmatprep.subr.bf16.mxu0 0
        %2127 = vmatpush2.bf16.msra.mxu0 0
        %2128 = vmatprep.subr.bf16.mxu0 0
        %2129 = vmatpush2.bf16.msra.mxu0 0
        %2130 = vmatprep.subr.bf16.mxu0 0
        %2131 = vmatpush2.bf16.msra.mxu0 0
        %2132 = vmatprep.subr.bf16.mxu0 0
        %2133 = vmatpush2.bf16.msra.mxu0 0
        %2134 = vmatprep.subr.bf16.mxu0 0
        %2135 = vmatpush2.bf16.msra.mxu0 0
        %2136 = vmatprep.subr.bf16.mxu0 0
        %2137 = vmatpush2.bf16.msra.mxu0 0
        %2138 = vmatprep.mubr.bf16.mxu0 0
        %2139 = vmatmul.mubr.bf16.gmra.mxu0 %v2101
        %v2140 = vpop.f32.mrf.mxu0
        %v2141 = vadd.f32 0.0, %v2140
        %v2142 = vpop.f32.mrf.mxu0
        %v2143 = vpop.f32.mrf.mxu0
        %v2144 = vpop.f32.mrf.mxu0
        %2145 = vdwg.mxu0
        %v2146 = vpack.c.bf16 %v1611, %v1611
        %v2147 = vpack.c.bf16 %v1615, %v1615
        %v2148 = vpack.c.bf16 %v1654, %v1654
        %v2149 = vpack.c.bf16 %v1658, %v1658
        %v2151 = vsel %vm1707, %v2146, 0
        %v2154 = vsel %vm1707, %v2148, 0
        %2156 = vmatprep.subr.bf16.mxu0 0
        %2157 = vmatpush1.bf16.xpose.msra.mxu0 0
        %2158 = vmatprep.subr.bf16.mxu0 0
        %2159 = vmatpush1.bf16.xpose.msra.mxu0 0
        %2160 = vmatprep.subr.bf16.mxu0 0
        %2161 = vmatpush1.bf16.xpose.msra.mxu0 0
        %2162 = vmatprep.subr.bf16.mxu0 0
        %2163 = vmatpush1.bf16.xpose.msra.mxu0 0
        %2164 = vmatprep.subr.bf16.mxu0 0
        %2165 = vmatpush1.bf16.xpose.msra.mxu0 0
        %2166 = vmatprep.subr.bf16.mxu0 0
        %2167 = vmatpush1.bf16.xpose.msra.mxu0 0
        %2168 = vmatprep.subr.bf16.mxu0 0
        %2169 = vmatpush1.bf16.xpose.msra.mxu0 0
        %2170 = vmatprep.subr.bf16.mxu0 0
        %2171 = vmatpush1.bf16.xpose.msra.mxu0 %v2154
        %2172 = vmatprep.subr.bf16.mxu0 0
        %2173 = vmatpush2.bf16.xpose.msra.mxu0 0
        %2174 = vmatprep.subr.bf16.mxu0 0
        %2175 = vmatpush2.bf16.xpose.msra.mxu0 0
        %2176 = vmatprep.subr.bf16.mxu0 0
        %2177 = vmatpush2.bf16.xpose.msra.mxu0 0
        %2178 = vmatprep.subr.bf16.mxu0 0
        %2179 = vmatpush2.bf16.xpose.msra.mxu0 0
        %2180 = vmatprep.subr.bf16.mxu0 0
        %2181 = vmatpush2.bf16.xpose.msra.mxu0 0
        %2182 = vmatprep.subr.bf16.mxu0 0
        %2183 = vmatpush2.bf16.xpose.msra.mxu0 0
        %2184 = vmatprep.subr.bf16.mxu0 0
        %2185 = vmatpush2.bf16.xpose.msra.mxu0 0
        %2186 = vmatprep.subr.bf16.mxu0 0
        %2187 = vmatpush2.bf16.xpose.msra.mxu0 0
        %2188 = vmatprep.mubr.bf16.mxu0 0
        %2189 = vmatmul.mubr.bf16.gmra.mxu0 %v2151
        %v2190 = vpop.f32.mrf.mxu0
        %v2191 = vadd.f32 0.0, %v2190
        %v2192 = vpop.f32.mrf.mxu0
        %v2193 = vpop.f32.mrf.mxu0
        %v2194 = vpop.f32.mrf.mxu0
        %2195 = vdwg.mxu0
        %v2197 = vsel %vm1707, %v2147, 0
        %v2200 = vsel %vm1707, %v2149, 0
        %2202 = vmatprep.subr.bf16.mxu0 0
        %2203 = vmatpush1.bf16.xpose.msra.mxu0 0
        %2204 = vmatprep.subr.bf16.mxu0 0
        %2205 = vmatpush1.bf16.xpose.msra.mxu0 0
        %2206 = vmatprep.subr.bf16.mxu0 0
        %2207 = vmatpush1.bf16.xpose.msra.mxu0 0
        %2208 = vmatprep.subr.bf16.mxu0 0
        %2209 = vmatpush1.bf16.xpose.msra.mxu0 0
        %2210 = vmatprep.subr.bf16.mxu0 0
        %2211 = vmatpush1.bf16.xpose.msra.mxu0 0
        %2212 = vmatprep.subr.bf16.mxu0 0
        %2213 = vmatpush1.bf16.xpose.msra.mxu0 0
        %2214 = vmatprep.subr.bf16.mxu0 0
        %2215 = vmatpush1.bf16.xpose.msra.mxu0 0
        %2216 = vmatprep.subr.bf16.mxu0 0
        %2217 = vmatpush1.bf16.xpose.msra.mxu0 %v2200
        %2218 = vmatprep.subr.bf16.mxu0 0
        %2219 = vmatpush2.bf16.xpose.msra.mxu0 0
        %2220 = vmatprep.subr.bf16.mxu0 0
        %2221 = vmatpush2.bf16.xpose.msra.mxu0 0
        %2222 = vmatprep.subr.bf16.mxu0 0
        %2223 = vmatpush2.bf16.xpose.msra.mxu0 0
        %2224 = vmatprep.subr.bf16.mxu0 0
        %2225 = vmatpush2.bf16.xpose.msra.mxu0 0
        %2226 = vmatprep.subr.bf16.mxu0 0
        %2227 = vmatpush2.bf16.xpose.msra.mxu0 0
        %2228 = vmatprep.subr.bf16.mxu0 0
        %2229 = vmatpush2.bf16.xpose.msra.mxu0 0
        %2230 = vmatprep.subr.bf16.mxu0 0
        %2231 = vmatpush2.bf16.xpose.msra.mxu0 0
        %2232 = vmatprep.subr.bf16.mxu0 0
        %2233 = vmatpush2.bf16.xpose.msra.mxu0 0
        %2234 = vmatprep.mubr.bf16.mxu0 0
        %2235 = vmatmul.mubr.bf16.gmra.mxu0 %v2197
        %v2236 = vpop.f32.mrf.mxu0
        %v2237 = vadd.f32 0.0, %v2236
        %v2238 = vpop.f32.mrf.mxu0
        %v2239 = vpop.f32.mrf.mxu0
        %v2240 = vpop.f32.mrf.mxu0
        %2241 = vdwg.mxu0
        %v2242 = vsel %vm1800, %v2191, -inf
        %2243 = vmax.xlane.f32.xlu0 %v2242
        %v2244 = vpop.xlane.xlu0 %2243
        %v2245 = vsel %vm1800, %v2237, -inf
        %2246 = vmax.xlane.f32.xlu0 %v2245
        %v2247 = vpop.xlane.xlu0 %2246
        %v2248 = vsub.f32 %v2191, %v2244
        %v2249 = vsub.f32 %v2237, %v2247
        %v2250 = vmul.f32 %v2248, 1.442695
        %v2251 = vpow.pop %v2250
        %v2252 = vmul.f32 %v2249, 1.442695
        %v2253 = vpow.pop %v2252
        %v2254 = vsel %vm1800, %v2251, 0.0
        %2255 = vadd.xlane.f32.xlu0 %v2254
        %v2256 = vpop.xlane.xlu0 %2255
        %v2257 = vsel %vm1800, %v2253, 0.0
        %2258 = vadd.xlane.f32.xlu0 %v2257
        %v2259 = vpop.xlane.xlu0 %2258
        %v2260 = vrcp.pop %v2256
        %v2261 = vrcp.pop %v2259
        %v2262 = vmul.f32 %v2251, %v2260
        %v2263 = vmul.f32 %v2253, %v2261
        %v2264 = vpack.c.bf16 %v2262, %v2262
        %v2265 = vpack.c.bf16 %v2263, %v2263
        %v2266 = vpack.c.bf16 %v1697, %v1697
        %v2267 = vpack.c.bf16 %v1701, %v1701
        %v2269 = vsel %vm1800, %v2264, 0
        %v2272 = vsel %vm1830, %v2266, 0
        %2274 = vmatprep.subr.bf16.mxu0 0
        %2275 = vmatpush1.bf16.msra.mxu0 0
        %2276 = vmatprep.subr.bf16.mxu0 0
        %2277 = vmatpush1.bf16.msra.mxu0 0
        %2278 = vmatprep.subr.bf16.mxu0 0
        %2279 = vmatpush1.bf16.msra.mxu0 0
        %2280 = vmatprep.subr.bf16.mxu0 0
        %2281 = vmatpush1.bf16.msra.mxu0 0
        %2282 = vmatprep.subr.bf16.mxu0 0
        %2283 = vmatpush1.bf16.msra.mxu0 0
        %2284 = vmatprep.subr.bf16.mxu0 0
        %2285 = vmatpush1.bf16.msra.mxu0 0
        %2286 = vmatprep.subr.bf16.mxu0 0
        %2287 = vmatpush1.bf16.msra.mxu0 0
        %2288 = vmatprep.subr.bf16.mxu0 0
        %2289 = vmatpush1.bf16.msra.mxu0 %v2272
        %2290 = vmatprep.subr.bf16.mxu0 0
        %2291 = vmatpush2.bf16.msra.mxu0 0
        %2292 = vmatprep.subr.bf16.mxu0 0
        %2293 = vmatpush2.bf16.msra.mxu0 0
        %2294 = vmatprep.subr.bf16.mxu0 0
        %2295 = vmatpush2.bf16.msra.mxu0 0
        %2296 = vmatprep.subr.bf16.mxu0 0
        %2297 = vmatpush2.bf16.msra.mxu0 0
        %2298 = vmatprep.subr.bf16.mxu0 0
        %2299 = vmatpush2.bf16.msra.mxu0 0
        %2300 = vmatprep.subr.bf16.mxu0 0
        %2301 = vmatpush2.bf16.msra.mxu0 0
        %2302 = vmatprep.subr.bf16.mxu0 0
        %2303 = vmatpush2.bf16.msra.mxu0 0
        %2304 = vmatprep.subr.bf16.mxu0 0
        %2305 = vmatpush2.bf16.msra.mxu0 0
        %2306 = vmatprep.mubr.bf16.mxu0 0
        %2307 = vmatmul.mubr.bf16.gmra.mxu0 %v2269
        %v2308 = vpop.f32.mrf.mxu0
        %v2309 = vadd.f32 0.0, %v2308
        %v2310 = vpop.f32.mrf.mxu0
        %v2311 = vpop.f32.mrf.mxu0
        %v2312 = vpop.f32.mrf.mxu0
        %2313 = vdwg.mxu0
        %v2315 = vsel %vm1800, %v2265, 0
        %v2318 = vsel %vm1830, %v2267, 0
        %2320 = vmatprep.subr.bf16.mxu0 0
        %2321 = vmatpush1.bf16.msra.mxu0 0
        %2322 = vmatprep.subr.bf16.mxu0 0
        %2323 = vmatpush1.bf16.msra.mxu0 0
        %2324 = vmatprep.subr.bf16.mxu0 0
        %2325 = vmatpush1.bf16.msra.mxu0 0
        %2326 = vmatprep.subr.bf16.mxu0 0
        %2327 = vmatpush1.bf16.msra.mxu0 0
        %2328 = vmatprep.subr.bf16.mxu0 0
        %2329 = vmatpush1.bf16.msra.mxu0 0
        %2330 = vmatprep.subr.bf16.mxu0 0
        %2331 = vmatpush1.bf16.msra.mxu0 0
        %2332 = vmatprep.subr.bf16.mxu0 0
        %2333 = vmatpush1.bf16.msra.mxu0 0
        %2334 = vmatprep.subr.bf16.mxu0 0
        %2335 = vmatpush1.bf16.msra.mxu0 %v2318
        %2336 = vmatprep.subr.bf16.mxu0 0
        %2337 = vmatpush2.bf16.msra.mxu0 0
        %2338 = vmatprep.subr.bf16.mxu0 0
        %2339 = vmatpush2.bf16.msra.mxu0 0
        %2340 = vmatprep.subr.bf16.mxu0 0
        %2341 = vmatpush2.bf16.msra.mxu0 0
        %2342 = vmatprep.subr.bf16.mxu0 0
        %2343 = vmatpush2.bf16.msra.mxu0 0
        %2344 = vmatprep.subr.bf16.mxu0 0
        %2345 = vmatpush2.bf16.msra.mxu0 0
        %2346 = vmatprep.subr.bf16.mxu0 0
        %2347 = vmatpush2.bf16.msra.mxu0 0
        %2348 = vmatprep.subr.bf16.mxu0 0
        %2349 = vmatpush2.bf16.msra.mxu0 0
        %2350 = vmatprep.subr.bf16.mxu0 0
        %2351 = vmatpush2.bf16.msra.mxu0 0
        %2352 = vmatprep.mubr.bf16.mxu0 0
        %2353 = vmatmul.mubr.bf16.gmra.mxu0 %v2315
        %v2354 = vpop.f32.mrf.mxu0
        %v2355 = vadd.f32 0.0, %v2354
        %v2356 = vpop.f32.mrf.mxu0
        %v2357 = vpop.f32.mrf.mxu0
        %v2358 = vpop.f32.mrf.mxu0
        %2359 = vdwg.mxu0
        %2361 = vrot.lane.b32.xlu0 %v2146, 64
        %v2362 = vpop.permute.xlu0 %2361
        %2364 = vrot.lane.b32.xlu0 %v2148, 64
        %v2365 = vpop.permute.xlu0 %2364
        %v2367 = vsel %vm1707, %v2362, 0
        %v2370 = vsel %vm1707, %v2365, 0
        %2372 = vmatprep.subr.bf16.mxu0 0
        %2373 = vmatpush1.bf16.xpose.msra.mxu0 0
        %2374 = vmatprep.subr.bf16.mxu0 0
        %2375 = vmatpush1.bf16.xpose.msra.mxu0 0
        %2376 = vmatprep.subr.bf16.mxu0 0
        %2377 = vmatpush1.bf16.xpose.msra.mxu0 0
        %2378 = vmatprep.subr.bf16.mxu0 0
        %2379 = vmatpush1.bf16.xpose.msra.mxu0 0
        %2380 = vmatprep.subr.bf16.mxu0 0
        %2381 = vmatpush1.bf16.xpose.msra.mxu0 0
        %2382 = vmatprep.subr.bf16.mxu0 0
        %2383 = vmatpush1.bf16.xpose.msra.mxu0 0
        %2384 = vmatprep.subr.bf16.mxu0 0
        %2385 = vmatpush1.bf16.xpose.msra.mxu0 0
        %2386 = vmatprep.subr.bf16.mxu0 0
        %2387 = vmatpush1.bf16.xpose.msra.mxu0 %v2370
        %2388 = vmatprep.subr.bf16.mxu0 0
        %2389 = vmatpush2.bf16.xpose.msra.mxu0 0
        %2390 = vmatprep.subr.bf16.mxu0 0
        %2391 = vmatpush2.bf16.xpose.msra.mxu0 0
        %2392 = vmatprep.subr.bf16.mxu0 0
        %2393 = vmatpush2.bf16.xpose.msra.mxu0 0
        %2394 = vmatprep.subr.bf16.mxu0 0
        %2395 = vmatpush2.bf16.xpose.msra.mxu0 0
        %2396 = vmatprep.subr.bf16.mxu0 0
        %2397 = vmatpush2.bf16.xpose.msra.mxu0 0
        %2398 = vmatprep.subr.bf16.mxu0 0
        %2399 = vmatpush2.bf16.xpose.msra.mxu0 0
        %2400 = vmatprep.subr.bf16.mxu0 0
        %2401 = vmatpush2.bf16.xpose.msra.mxu0 0
        %2402 = vmatprep.subr.bf16.mxu0 0
        %2403 = vmatpush2.bf16.xpose.msra.mxu0 0
        %2404 = vmatprep.mubr.bf16.mxu0 0
        %2405 = vmatmul.mubr.bf16.gmra.mxu0 %v2367
        %v2406 = vpop.f32.mrf.mxu0
        %v2407 = vadd.f32 0.0, %v2406
        %v2408 = vpop.f32.mrf.mxu0
        %v2409 = vpop.f32.mrf.mxu0
        %v2410 = vpop.f32.mrf.mxu0
        %2411 = vdwg.mxu0
        %2413 = vrot.lane.b32.xlu0 %v2147, 64
        %v2414 = vpop.permute.xlu0 %2413
        %2416 = vrot.lane.b32.xlu0 %v2149, 64
        %v2417 = vpop.permute.xlu0 %2416
        %v2419 = vsel %vm1707, %v2414, 0
        %v2422 = vsel %vm1707, %v2417, 0
        %2424 = vmatprep.subr.bf16.mxu0 0
        %2425 = vmatpush1.bf16.xpose.msra.mxu0 0
        %2426 = vmatprep.subr.bf16.mxu0 0
        %2427 = vmatpush1.bf16.xpose.msra.mxu0 0
        %2428 = vmatprep.subr.bf16.mxu0 0
        %2429 = vmatpush1.bf16.xpose.msra.mxu0 0
        %2430 = vmatprep.subr.bf16.mxu0 0
        %2431 = vmatpush1.bf16.xpose.msra.mxu0 0
        %2432 = vmatprep.subr.bf16.mxu0 0
        %2433 = vmatpush1.bf16.xpose.msra.mxu0 0
        %2434 = vmatprep.subr.bf16.mxu0 0
        %2435 = vmatpush1.bf16.xpose.msra.mxu0 0
        %2436 = vmatprep.subr.bf16.mxu0 0
        %2437 = vmatpush1.bf16.xpose.msra.mxu0 0
        %2438 = vmatprep.subr.bf16.mxu0 0
        %2439 = vmatpush1.bf16.xpose.msra.mxu0 %v2422
        %2440 = vmatprep.subr.bf16.mxu0 0
        %2441 = vmatpush2.bf16.xpose.msra.mxu0 0
        %2442 = vmatprep.subr.bf16.mxu0 0
        %2443 = vmatpush2.bf16.xpose.msra.mxu0 0
        %2444 = vmatprep.subr.bf16.mxu0 0
        %2445 = vmatpush2.bf16.xpose.msra.mxu0 0
        %2446 = vmatprep.subr.bf16.mxu0 0
        %2447 = vmatpush2.bf16.xpose.msra.mxu0 0
        %2448 = vmatprep.subr.bf16.mxu0 0
        %2449 = vmatpush2.bf16.xpose.msra.mxu0 0
        %2450 = vmatprep.subr.bf16.mxu0 0
        %2451 = vmatpush2.bf16.xpose.msra.mxu0 0
        %2452 = vmatprep.subr.bf16.mxu0 0
        %2453 = vmatpush2.bf16.xpose.msra.mxu0 0
        %2454 = vmatprep.subr.bf16.mxu0 0
        %2455 = vmatpush2.bf16.xpose.msra.mxu0 0
        %2456 = vmatprep.mubr.bf16.mxu0 0
        %2457 = vmatmul.mubr.bf16.gmra.mxu0 %v2419
        %v2458 = vpop.f32.mrf.mxu0
        %v2459 = vadd.f32 0.0, %v2458
        %v2460 = vpop.f32.mrf.mxu0
        %v2461 = vpop.f32.mrf.mxu0
        %v2462 = vpop.f32.mrf.mxu0
        %2463 = vdwg.mxu0
        %v2464 = vsel %vm1800, %v2407, -inf
        %2465 = vmax.xlane.f32.xlu0 %v2464
        %v2466 = vpop.xlane.xlu0 %2465
        %v2467 = vsel %vm1800, %v2459, -inf
        %2468 = vmax.xlane.f32.xlu0 %v2467
        %v2469 = vpop.xlane.xlu0 %2468
        %v2470 = vsub.f32 %v2407, %v2466
        %v2471 = vsub.f32 %v2459, %v2469
        %v2472 = vmul.f32 %v2470, 1.442695
        %v2473 = vpow.pop %v2472
        %v2474 = vmul.f32 %v2471, 1.442695
        %v2475 = vpow.pop %v2474
        %v2476 = vsel %vm1800, %v2473, 0.0
        %2477 = vadd.xlane.f32.xlu0 %v2476
        %v2478 = vpop.xlane.xlu0 %2477
        %v2479 = vsel %vm1800, %v2475, 0.0
        %2480 = vadd.xlane.f32.xlu0 %v2479
        %v2481 = vpop.xlane.xlu0 %2480
        %v2482 = vrcp.pop %v2478
        %v2483 = vrcp.pop %v2481
        %v2484 = vmul.f32 %v2473, %v2482
        %v2485 = vmul.f32 %v2475, %v2483
        %v2486 = vpack.c.bf16 %v2484, %v2484
        %v2487 = vpack.c.bf16 %v2485, %v2485
        %2489 = vrot.lane.b32.xlu0 %v2266, 64
        %v2490 = vpop.permute.xlu0 %2489
        %v2492 = vsel %vm1800, %v2486, 0
        %v2495 = vsel %vm1830, %v2490, 0
        %2497 = vmatprep.subr.bf16.mxu0 0
        %2498 = vmatpush1.bf16.msra.mxu0 0
        %2499 = vmatprep.subr.bf16.mxu0 0
        %2500 = vmatpush1.bf16.msra.mxu0 0
        %2501 = vmatprep.subr.bf16.mxu0 0
        %2502 = vmatpush1.bf16.msra.mxu0 0
        %2503 = vmatprep.subr.bf16.mxu0 0
        %2504 = vmatpush1.bf16.msra.mxu0 0
        %2505 = vmatprep.subr.bf16.mxu0 0
        %2506 = vmatpush1.bf16.msra.mxu0 0
        %2507 = vmatprep.subr.bf16.mxu0 0
        %2508 = vmatpush1.bf16.msra.mxu0 0
        %2509 = vmatprep.subr.bf16.mxu0 0
        %2510 = vmatpush1.bf16.msra.mxu0 0
        %2511 = vmatprep.subr.bf16.mxu0 0
        %2512 = vmatpush1.bf16.msra.mxu0 %v2495
        %2513 = vmatprep.subr.bf16.mxu0 0
        %2514 = vmatpush2.bf16.msra.mxu0 0
        %2515 = vmatprep.subr.bf16.mxu0 0
        %2516 = vmatpush2.bf16.msra.mxu0 0
        %2517 = vmatprep.subr.bf16.mxu0 0
        %2518 = vmatpush2.bf16.msra.mxu0 0
        %2519 = vmatprep.subr.bf16.mxu0 0
        %2520 = vmatpush2.bf16.msra.mxu0 0
        %2521 = vmatprep.subr.bf16.mxu0 0
        %2522 = vmatpush2.bf16.msra.mxu0 0
        %2523 = vmatprep.subr.bf16.mxu0 0
        %2524 = vmatpush2.bf16.msra.mxu0 0
        %2525 = vmatprep.subr.bf16.mxu0 0
        %2526 = vmatpush2.bf16.msra.mxu0 0
        %2527 = vmatprep.subr.bf16.mxu0 0
        %2528 = vmatpush2.bf16.msra.mxu0 0
        %2529 = vmatprep.mubr.bf16.mxu0 0
        %2530 = vmatmul.mubr.bf16.gmra.mxu0 %v2492
        %v2531 = vpop.f32.mrf.mxu0
        %v2532 = vadd.f32 0.0, %v2531
        %v2533 = vpop.f32.mrf.mxu0
        %v2534 = vpop.f32.mrf.mxu0
        %v2535 = vpop.f32.mrf.mxu0
        %2536 = vdwg.mxu0
        %2538 = vrot.lane.b32.xlu0 %v2267, 64
        %v2539 = vpop.permute.xlu0 %2538
        %v2541 = vsel %vm1800, %v2487, 0
        %v2544 = vsel %vm1830, %v2539, 0
        %2546 = vmatprep.subr.bf16.mxu0 0
        %2547 = vmatpush1.bf16.msra.mxu0 0
        %2548 = vmatprep.subr.bf16.mxu0 0
        %2549 = vmatpush1.bf16.msra.mxu0 0
        %2550 = vmatprep.subr.bf16.mxu0 0
        %2551 = vmatpush1.bf16.msra.mxu0 0
        %2552 = vmatprep.subr.bf16.mxu0 0
        %2553 = vmatpush1.bf16.msra.mxu0 0
        %2554 = vmatprep.subr.bf16.mxu0 0
        %2555 = vmatpush1.bf16.msra.mxu0 0
        %2556 = vmatprep.subr.bf16.mxu0 0
        %2557 = vmatpush1.bf16.msra.mxu0 0
        %2558 = vmatprep.subr.bf16.mxu0 0
        %2559 = vmatpush1.bf16.msra.mxu0 0
        %2560 = vmatprep.subr.bf16.mxu0 0
        %2561 = vmatpush1.bf16.msra.mxu0 %v2544
        %2562 = vmatprep.subr.bf16.mxu0 0
        %2563 = vmatpush2.bf16.msra.mxu0 0
        %2564 = vmatprep.subr.bf16.mxu0 0
        %2565 = vmatpush2.bf16.msra.mxu0 0
        %2566 = vmatprep.subr.bf16.mxu0 0
        %2567 = vmatpush2.bf16.msra.mxu0 0
        %2568 = vmatprep.subr.bf16.mxu0 0
        %2569 = vmatpush2.bf16.msra.mxu0 0
        %2570 = vmatprep.subr.bf16.mxu0 0
        %2571 = vmatpush2.bf16.msra.mxu0 0
        %2572 = vmatprep.subr.bf16.mxu0 0
        %2573 = vmatpush2.bf16.msra.mxu0 0
        %2574 = vmatprep.subr.bf16.mxu0 0
        %2575 = vmatpush2.bf16.msra.mxu0 0
        %2576 = vmatprep.subr.bf16.mxu0 0
        %2577 = vmatpush2.bf16.msra.mxu0 0
        %2578 = vmatprep.mubr.bf16.mxu0 0
        %2579 = vmatmul.mubr.bf16.gmra.mxu0 %v2541
        %v2580 = vpop.f32.mrf.mxu0
        %v2581 = vadd.f32 0.0, %v2580
        %v2582 = vpop.f32.mrf.mxu0
        %v2583 = vpop.f32.mrf.mxu0
        %v2584 = vpop.f32.mrf.mxu0
        %2585 = vdwg.mxu0
        %2588 = vrot.lane.b32.xlu0 %v2092, 64
        %v2589 = vpop.permute.xlu0 %2588
        %2590 = vrot.lane.b32.xlu0 %v2141, 64
        %v2591 = vpop.permute.xlu0 %2590
        %2596 = vrot.lane.b32.xlu0 %v2532, 64
        %v2597 = vpop.permute.xlu0 %2596
        %2598 = vrot.lane.b32.xlu0 %v2581, 64
        %v2599 = vpop.permute.xlu0 %2598
        %v2602 = vsel %vm1707, %v1869, %v2589
        %v2603 = vsel %vm1707, %v1915, %v2591
        %v2604 = vsel %vm1707, %v2309, %v2597
        %v2605 = vsel %vm1707, %v2355, %v2599
        %v2606 = vpack.c.bf16 %v2603, %v2602
        %v2607 = vpack.c.bf16 %v2605, %v2604
        %v2608 = vld [vmem:[%s761] sm:$0xff]
        %v2609 = vld [vmem:[%s761 + $0x8] sm:$0xff]
        %v2610 = vld [vmem:[%s761 + $0x10] sm:$0xff]
        %v2611 = vld [vmem:[%s761 + $0x18] sm:$0xff]
        %v2612 = vld [vmem:[%s761 + $0x20] sm:$0xff]
        %v2613 = vld [vmem:[%s761 + $0x28] sm:$0xff]
        %v2614 = vld [vmem:[%s761 + $0x30] sm:$0xff]
        %v2615 = vld [vmem:[%s761 + $0x38] sm:$0xff]
        %v2616 = vld [vmem:[%s761 + $0x40] sm:$0xff]
        %v2617 = vld [vmem:[%s761 + $0x48] sm:$0xff]
        %v2618 = vld [vmem:[%s761 + $0x50] sm:$0xff]
        %v2619 = vld [vmem:[%s761 + $0x58] sm:$0xff]
        %v2620 = vld [vmem:[%s761 + $0x60] sm:$0xff]
        %v2621 = vld [vmem:[%s761 + $0x68] sm:$0xff]
        %v2622 = vld [vmem:[%s761 + $0x70] sm:$0xff]
        %v2623 = vld [vmem:[%s761 + $0x78] sm:$0xff]
        %v2624 = vld [vmem:[%s761 + $0x80] sm:$0xff]
        %v2625 = vld [vmem:[%s761 + $0x88] sm:$0xff]
        %v2626 = vld [vmem:[%s761 + $0x90] sm:$0xff]
        %v2627 = vld [vmem:[%s761 + $0x98] sm:$0xff]
        %v2628 = vld [vmem:[%s761 + $0xa0] sm:$0xff]
        %v2629 = vld [vmem:[%s761 + $0xa8] sm:$0xff]
        %v2630 = vld [vmem:[%s761 + $0xb0] sm:$0xff]
        %v2631 = vld [vmem:[%s761 + $0xb8] sm:$0xff]
        %v2632 = vld [vmem:[%s761 + $0xc0] sm:$0xff]
        %v2633 = vld [vmem:[%s761 + $0xc8] sm:$0xff]
        %v2634 = vld [vmem:[%s761 + $0xd0] sm:$0xff]
        %v2635 = vld [vmem:[%s761 + $0xd8] sm:$0xff]
        %v2636 = vld [vmem:[%s761 + $0xe0] sm:$0xff]
        %v2637 = vld [vmem:[%s761 + $0xe8] sm:$0xff]
        %v2638 = vld [vmem:[%s761 + $0xf0] sm:$0xff]
        %v2639 = vld [vmem:[%s761 + $0xf8] sm:$0xff]
        %v2640 = vld [vmem:[%s770] sm:$0x3]
        %v2642 = vlaneseq
        %v2643 = vshrl.u32 %v2642, 7
        %v2644 = vsub.s32 0, %v2643
        %v2645 = vrot.slane %v2640, %v2644
        %v2646 = vlaneseq
        %v2647 = vshrl.u32 %v2646, 7
        %v2648 = vsub.s32 1, %v2647
        %v2649 = vrot.slane %v2640, %v2648
        %v2684 = vunpack.c.l.b16 %v2608
        %v2685 = vunpack.c.h.b16 %v2608
        %v2686 = vunpack.c.l.b16 %v2609
        %v2687 = vunpack.c.h.b16 %v2609
        %v2688 = vunpack.c.l.b16 %v2610
        %v2689 = vunpack.c.h.b16 %v2610
        %v2690 = vunpack.c.l.b16 %v2611
        %v2691 = vunpack.c.h.b16 %v2611
        %v2692 = vunpack.c.l.b16 %v2612
        %v2693 = vunpack.c.h.b16 %v2612
        %v2694 = vunpack.c.l.b16 %v2613
        %v2695 = vunpack.c.h.b16 %v2613
        %v2696 = vunpack.c.l.b16 %v2614
        %v2697 = vunpack.c.h.b16 %v2614
        %v2698 = vunpack.c.l.b16 %v2615
        %v2699 = vunpack.c.h.b16 %v2615
        %v2700 = vunpack.c.l.b16 %v2616
        %v2701 = vunpack.c.h.b16 %v2616
        %v2702 = vunpack.c.l.b16 %v2617
        %v2703 = vunpack.c.h.b16 %v2617
        %v2704 = vunpack.c.l.b16 %v2618
        %v2705 = vunpack.c.h.b16 %v2618
        %v2706 = vunpack.c.l.b16 %v2619
        %v2707 = vunpack.c.h.b16 %v2619
        %v2708 = vunpack.c.l.b16 %v2620
        %v2709 = vunpack.c.h.b16 %v2620
        %v2710 = vunpack.c.l.b16 %v2621
        %v2711 = vunpack.c.h.b16 %v2621
        %v2712 = vunpack.c.l.b16 %v2622
        %v2713 = vunpack.c.h.b16 %v2622
        %v2714 = vunpack.c.l.b16 %v2623
        %v2715 = vunpack.c.h.b16 %v2623
        %v2716 = vunpack.c.l.b16 %v2624
        %v2717 = vunpack.c.h.b16 %v2624
        %v2718 = vunpack.c.l.b16 %v2625
        %v2719 = vunpack.c.h.b16 %v2625
        %v2720 = vunpack.c.l.b16 %v2626
        %v2721 = vunpack.c.h.b16 %v2626
        %v2722 = vunpack.c.l.b16 %v2627
        %v2723 = vunpack.c.h.b16 %v2627
        %v2724 = vunpack.c.l.b16 %v2628
        %v2725 = vunpack.c.h.b16 %v2628
        %v2726 = vunpack.c.l.b16 %v2629
        %v2727 = vunpack.c.h.b16 %v2629
        %v2728 = vunpack.c.l.b16 %v2630
        %v2729 = vunpack.c.h.b16 %v2630
        %v2730 = vunpack.c.l.b16 %v2631
        %v2731 = vunpack.c.h.b16 %v2631
        %v2732 = vunpack.c.l.b16 %v2632
        %v2733 = vunpack.c.h.b16 %v2632
        %v2734 = vunpack.c.l.b16 %v2633
        %v2735 = vunpack.c.h.b16 %v2633
        %v2736 = vunpack.c.l.b16 %v2634
        %v2737 = vunpack.c.h.b16 %v2634
        %v2738 = vunpack.c.l.b16 %v2635
        %v2739 = vunpack.c.h.b16 %v2635
        %v2740 = vunpack.c.l.b16 %v2636
        %v2741 = vunpack.c.h.b16 %v2636
        %v2742 = vunpack.c.l.b16 %v2637
        %v2743 = vunpack.c.h.b16 %v2637
        %v2744 = vunpack.c.l.b16 %v2638
        %v2745 = vunpack.c.h.b16 %v2638
        %v2746 = vunpack.c.l.b16 %v2639
        %v2747 = vunpack.c.h.b16 %v2639
        %v2748 = vpack.c.b16 %v2686, %v2684
        %v2749 = vpack.c.b16 %v2687, %v2685
        %v2750 = vpack.c.b16 %v2690, %v2688
        %v2751 = vpack.c.b16 %v2691, %v2689
        %v2752 = vpack.c.b16 %v2694, %v2692
        %v2753 = vpack.c.b16 %v2695, %v2693
        %v2754 = vpack.c.b16 %v2698, %v2696
        %v2755 = vpack.c.b16 %v2699, %v2697
        %v2756 = vpack.c.b16 %v2702, %v2700
        %v2757 = vpack.c.b16 %v2703, %v2701
        %v2758 = vpack.c.b16 %v2706, %v2704
        %v2759 = vpack.c.b16 %v2707, %v2705
        %v2760 = vpack.c.b16 %v2710, %v2708
        %v2761 = vpack.c.b16 %v2711, %v2709
        %v2762 = vpack.c.b16 %v2714, %v2712
        %v2763 = vpack.c.b16 %v2715, %v2713
        %v2764 = vpack.c.b16 %v2718, %v2716
        %v2765 = vpack.c.b16 %v2719, %v2717
        %v2766 = vpack.c.b16 %v2722, %v2720
        %v2767 = vpack.c.b16 %v2723, %v2721
        %v2768 = vpack.c.b16 %v2726, %v2724
        %v2769 = vpack.c.b16 %v2727, %v2725
        %v2770 = vpack.c.b16 %v2730, %v2728
        %v2771 = vpack.c.b16 %v2731, %v2729
        %v2772 = vpack.c.b16 %v2734, %v2732
        %v2773 = vpack.c.b16 %v2735, %v2733
        %v2774 = vpack.c.b16 %v2738, %v2736
        %v2775 = vpack.c.b16 %v2739, %v2737
        %v2776 = vpack.c.b16 %v2742, %v2740
        %v2777 = vpack.c.b16 %v2743, %v2741
        %v2778 = vpack.c.b16 %v2746, %v2744
        %v2779 = vpack.c.b16 %v2747, %v2745
        %2812 = vmatprep.subr.bf16.mxu0 %v2763
        %2813 = vmatpush1.bf16.msra.mxu0 %v2762
        %2814 = vmatprep.subr.bf16.mxu0 %v2761
        %2815 = vmatpush1.bf16.msra.mxu0 %v2760
        %2816 = vmatprep.subr.bf16.mxu0 %v2759
        %2817 = vmatpush1.bf16.msra.mxu0 %v2758
        %2818 = vmatprep.subr.bf16.mxu0 %v2757
        %2819 = vmatpush1.bf16.msra.mxu0 %v2756
        %2820 = vmatprep.subr.bf16.mxu0 %v2755
        %2821 = vmatpush1.bf16.msra.mxu0 %v2754
        %2822 = vmatprep.subr.bf16.mxu0 %v2753
        %2823 = vmatpush1.bf16.msra.mxu0 %v2752
        %2824 = vmatprep.subr.bf16.mxu0 %v2751
        %2825 = vmatpush1.bf16.msra.mxu0 %v2750
        %2826 = vmatprep.subr.bf16.mxu0 %v2749
        %2827 = vmatpush1.bf16.msra.mxu0 %v2748
        %2828 = vmatprep.subr.bf16.mxu0 %v2779
        %2829 = vmatpush2.bf16.msra.mxu0 %v2778
        %2830 = vmatprep.subr.bf16.mxu0 %v2777
        %2831 = vmatpush2.bf16.msra.mxu0 %v2776
        %2832 = vmatprep.subr.bf16.mxu0 %v2775
        %2833 = vmatpush2.bf16.msra.mxu0 %v2774
        %2834 = vmatprep.subr.bf16.mxu0 %v2773
        %2835 = vmatpush2.bf16.msra.mxu0 %v2772
        %2836 = vmatprep.subr.bf16.mxu0 %v2771
        %2837 = vmatpush2.bf16.msra.mxu0 %v2770
        %2838 = vmatprep.subr.bf16.mxu0 %v2769
        %2839 = vmatpush2.bf16.msra.mxu0 %v2768
        %2840 = vmatprep.subr.bf16.mxu0 %v2767
        %2841 = vmatpush2.bf16.msra.mxu0 %v2766
        %2842 = vmatprep.subr.bf16.mxu0 %v2765
        %2843 = vmatpush2.bf16.msra.mxu0 %v2764
        %2844 = vmatprep.mubr.bf16.mxu0 %v2607
        %2845 = vmatmul.mubr.bf16.gmra.mxu0 %v2606
        %v2846 = vpop.f32.mrf.mxu0
        %v2847 = vadd.f32 %v2645, %v2846
        %v2848 = vpop.f32.mrf.mxu0
        %v2849 = vadd.f32 %v2649, %v2848
        %v2850 = vpop.f32.mrf.mxu0
        %v2851 = vadd.f32 %v2645, %v2850
        %v2852 = vpop.f32.mrf.mxu0
        %v2853 = vadd.f32 %v2649, %v2852
        %2854 = vdwg.mxu0
        %v2855 = vadd.f32 %v960, %v2847
        %v2856 = vadd.f32 %v961, %v2849
        %v2857 = vadd.f32 %v962, %v2851
        %v2858 = vadd.f32 %v963, %v2853
        %v2859 = vld [vmem:[%s779] sm:$0x3]
        %v2860 = vld [vmem:[%s788] sm:$0x3]
        %v2861 = vadd.f32 %v2855, %v2856
        %2862 = vadd.xlane.f32.xlu0 %v2861
        %v2863 = vpop.xlane.xlu0 %2862
        %v2864 = vadd.f32 %v2857, %v2858
        %2865 = vadd.xlane.f32.xlu0 %v2864
        %v2866 = vpop.xlane.xlu0 %2865
        %v2867 = vrcp.pop 256.0
        %v2868 = vmul.f32 %v2863, %v2867
        %v2869 = vmul.f32 %v2866, %v2867
        %v2870 = vsub.f32 %v2855, %v2868
        %v2871 = vsub.f32 %v2856, %v2868
        %v2872 = vsub.f32 %v2857, %v2869
        %v2873 = vsub.f32 %v2858, %v2869
        %v2874 = vmul.f32 %v2870, %v2870
        %v2875 = vmul.f32 %v2871, %v2871
        %v2876 = vmul.f32 %v2872, %v2872
        %v2877 = vmul.f32 %v2873, %v2873
        %v2878 = vadd.f32 %v2874, %v2875
        %2879 = vadd.xlane.f32.xlu0 %v2878
        %v2880 = vpop.xlane.xlu0 %2879
        %v2881 = vadd.f32 %v2876, %v2877
        %2882 = vadd.xlane.f32.xlu0 %v2881
        %v2883 = vpop.xlane.xlu0 %2882
        %v2884 = vmul.f32 %v2880, %v2867
        %v2885 = vmul.f32 %v2883, %v2867
        %v2886 = vadd.f32 %v2884, 1e-05
        %v2887 = vadd.f32 %v2885, 1e-05
        %v2888 = vrsqrt.pop %v2886
        %v2889 = vrsqrt.pop %v2887
        %v2890 = vmul.f32 %v2870, %v2888
        %v2891 = vmul.f32 %v2871, %v2888
        %v2892 = vmul.f32 %v2872, %v2889
        %v2893 = vmul.f32 %v2873, %v2889
        %v2895 = vlaneseq
        %v2896 = vshrl.u32 %v2895, 7
        %v2897 = vsub.s32 0, %v2896
        %v2898 = vrot.slane %v2859, %v2897
        %v2899 = vlaneseq
        %v2900 = vshrl.u32 %v2899, 7
        %v2901 = vsub.s32 1, %v2900
        %v2902 = vrot.slane %v2859, %v2901
        %v2905 = vmul.f32 %v2890, %v2898
        %v2906 = vmul.f32 %v2891, %v2902
        %v2907 = vmul.f32 %v2892, %v2898
        %v2908 = vmul.f32 %v2893, %v2902
        %v2910 = vlaneseq
        %v2911 = vshrl.u32 %v2910, 7
        %v2912 = vsub.s32 0, %v2911
        %v2913 = vrot.slane %v2860, %v2912
        %v2914 = vlaneseq
        %v2915 = vshrl.u32 %v2914, 7
        %v2916 = vsub.s32 1, %v2915
        %v2917 = vrot.slane %v2860, %v2916
        %v2920 = vadd.f32 %v2905, %v2913
        %v2921 = vadd.f32 %v2906, %v2917
        %v2922 = vadd.f32 %v2907, %v2913
        %v2923 = vadd.f32 %v2908, %v2917
        %v2924 = vpack.c.bf16 %v2922, %v2920
        %v2925 = vpack.c.bf16 %v2923, %v2921
        %v2926 = vld [vmem:[%s815] sm:$0xff]
        %v2927 = vld [vmem:[%s815 + $0x8] sm:$0xff]
        %v2928 = vld [vmem:[%s815 + $0x10] sm:$0xff]
        %v2929 = vld [vmem:[%s815 + $0x18] sm:$0xff]
        %v2930 = vld [vmem:[%s815 + $0x20] sm:$0xff]
        %v2931 = vld [vmem:[%s815 + $0x28] sm:$0xff]
        %v2932 = vld [vmem:[%s815 + $0x30] sm:$0xff]
        %v2933 = vld [vmem:[%s815 + $0x38] sm:$0xff]
        %v2934 = vld [vmem:[%s815 + $0x40] sm:$0xff]
        %v2935 = vld [vmem:[%s815 + $0x48] sm:$0xff]
        %v2936 = vld [vmem:[%s815 + $0x50] sm:$0xff]
        %v2937 = vld [vmem:[%s815 + $0x58] sm:$0xff]
        %v2938 = vld [vmem:[%s815 + $0x60] sm:$0xff]
        %v2939 = vld [vmem:[%s815 + $0x68] sm:$0xff]
        %v2940 = vld [vmem:[%s815 + $0x70] sm:$0xff]
        %v2941 = vld [vmem:[%s815 + $0x78] sm:$0xff]
        %v2942 = vld [vmem:[%s815 + $0x80] sm:$0xff]
        %v2943 = vld [vmem:[%s815 + $0x88] sm:$0xff]
        %v2944 = vld [vmem:[%s815 + $0x90] sm:$0xff]
        %v2945 = vld [vmem:[%s815 + $0x98] sm:$0xff]
        %v2946 = vld [vmem:[%s815 + $0xa0] sm:$0xff]
        %v2947 = vld [vmem:[%s815 + $0xa8] sm:$0xff]
        %v2948 = vld [vmem:[%s815 + $0xb0] sm:$0xff]
        %v2949 = vld [vmem:[%s815 + $0xb8] sm:$0xff]
        %v2950 = vld [vmem:[%s815 + $0xc0] sm:$0xff]
        %v2951 = vld [vmem:[%s815 + $0xc8] sm:$0xff]
        %v2952 = vld [vmem:[%s815 + $0xd0] sm:$0xff]
        %v2953 = vld [vmem:[%s815 + $0xd8] sm:$0xff]
        %v2954 = vld [vmem:[%s815 + $0xe0] sm:$0xff]
        %v2955 = vld [vmem:[%s815 + $0xe8] sm:$0xff]
        %v2956 = vld [vmem:[%s815 + $0xf0] sm:$0xff]
        %v2957 = vld [vmem:[%s815 + $0xf8] sm:$0xff]
        %v2958 = vld [vmem:[%s815 + $0x100] sm:$0xff]
        %v2959 = vld [vmem:[%s815 + $0x108] sm:$0xff]
        %v2960 = vld [vmem:[%s815 + $0x110] sm:$0xff]
        %v2961 = vld [vmem:[%s815 + $0x118] sm:$0xff]
        %v2962 = vld [vmem:[%s815 + $0x120] sm:$0xff]
        %v2963 = vld [vmem:[%s815 + $0x128] sm:$0xff]
        %v2964 = vld [vmem:[%s815 + $0x130] sm:$0xff]
        %v2965 = vld [vmem:[%s815 + $0x138] sm:$0xff]
        %v2966 = vld [vmem:[%s815 + $0x140] sm:$0xff]
        %v2967 = vld [vmem:[%s815 + $0x148] sm:$0xff]
        %v2968 = vld [vmem:[%s815 + $0x150] sm:$0xff]
        %v2969 = vld [vmem:[%s815 + $0x158] sm:$0xff]
        %v2970 = vld [vmem:[%s815 + $0x160] sm:$0xff]
        %v2971 = vld [vmem:[%s815 + $0x168] sm:$0xff]
        %v2972 = vld [vmem:[%s815 + $0x170] sm:$0xff]
        %v2973 = vld [vmem:[%s815 + $0x178] sm:$0xff]
        %v2974 = vld [vmem:[%s815 + $0x180] sm:$0xff]
        %v2975 = vld [vmem:[%s815 + $0x188] sm:$0xff]
        %v2976 = vld [vmem:[%s815 + $0x190] sm:$0xff]
        %v2977 = vld [vmem:[%s815 + $0x198] sm:$0xff]
        %v2978 = vld [vmem:[%s815 + $0x1a0] sm:$0xff]
        %v2979 = vld [vmem:[%s815 + $0x1a8] sm:$0xff]
        %v2980 = vld [vmem:[%s815 + $0x1b0] sm:$0xff]
        %v2981 = vld [vmem:[%s815 + $0x1b8] sm:$0xff]
        %v2982 = vld [vmem:[%s815 + $0x1c0] sm:$0xff]
        %v2983 = vld [vmem:[%s815 + $0x1c8] sm:$0xff]
        %v2984 = vld [vmem:[%s815 + $0x1d0] sm:$0xff]
        %v2985 = vld [vmem:[%s815 + $0x1d8] sm:$0xff]
        %v2986 = vld [vmem:[%s815 + $0x1e0] sm:$0xff]
        %v2987 = vld [vmem:[%s815 + $0x1e8] sm:$0xff]
        %v2988 = vld [vmem:[%s815 + $0x1f0] sm:$0xff]
        %v2989 = vld [vmem:[%s815 + $0x1f8] sm:$0xff]
        %v2990 = vld [vmem:[%s824] sm:$0xf]
        %v2992 = vlaneseq
        %v2993 = vshrl.u32 %v2992, 7
        %v2994 = vsub.s32 0, %v2993
        %v2995 = vrot.slane %v2990, %v2994
        %v2996 = vlaneseq
        %v2997 = vshrl.u32 %v2996, 7
        %v2998 = vsub.s32 1, %v2997
        %v2999 = vrot.slane %v2990, %v2998
        %v3000 = vlaneseq
        %v3001 = vshrl.u32 %v3000, 7
        %v3002 = vsub.s32 2, %v3001
        %v3003 = vrot.slane %v2990, %v3002
        %v3004 = vlaneseq
        %v3005 = vshrl.u32 %v3004, 7
        %v3006 = vsub.s32 3, %v3005
        %v3007 = vrot.slane %v2990, %v3006
        %v3076 = vunpack.c.l.b16 %v2926
        %v3077 = vunpack.c.h.b16 %v2926
        %v3078 = vunpack.c.l.b16 %v2927
        %v3079 = vunpack.c.h.b16 %v2927
        %v3080 = vunpack.c.l.b16 %v2928
        %v3081 = vunpack.c.h.b16 %v2928
        %v3082 = vunpack.c.l.b16 %v2929
        %v3083 = vunpack.c.h.b16 %v2929
        %v3084 = vunpack.c.l.b16 %v2930
        %v3085 = vunpack.c.h.b16 %v2930
        %v3086 = vunpack.c.l.b16 %v2931
        %v3087 = vunpack.c.h.b16 %v2931
        %v3088 = vunpack.c.l.b16 %v2932
        %v3089 = vunpack.c.h.b16 %v2932
        %v3090 = vunpack.c.l.b16 %v2933
        %v3091 = vunpack.c.h.b16 %v2933
        %v3092 = vunpack.c.l.b16 %v2934
        %v3093 = vunpack.c.h.b16 %v2934
        %v3094 = vunpack.c.l.b16 %v2935
        %v3095 = vunpack.c.h.b16 %v2935
        %v3096 = vunpack.c.l.b16 %v2936
        %v3097 = vunpack.c.h.b16 %v2936
        %v3098 = vunpack.c.l.b16 %v2937
        %v3099 = vunpack.c.h.b16 %v2937
        %v3100 = vunpack.c.l.b16 %v2938
        %v3101 = vunpack.c.h.b16 %v2938
        %v3102 = vunpack.c.l.b16 %v2939
        %v3103 = vunpack.c.h.b16 %v2939
        %v3104 = vunpack.c.l.b16 %v2940
        %v3105 = vunpack.c.h.b16 %v2940
        %v3106 = vunpack.c.l.b16 %v2941
        %v3107 = vunpack.c.h.b16 %v2941
        %v3108 = vunpack.c.l.b16 %v2942
        %v3109 = vunpack.c.h.b16 %v2942
        %v3110 = vunpack.c.l.b16 %v2943
        %v3111 = vunpack.c.h.b16 %v2943
        %v3112 = vunpack.c.l.b16 %v2944
        %v3113 = vunpack.c.h.b16 %v2944
        %v3114 = vunpack.c.l.b16 %v2945
        %v3115 = vunpack.c.h.b16 %v2945
        %v3116 = vunpack.c.l.b16 %v2946
        %v3117 = vunpack.c.h.b16 %v2946
        %v3118 = vunpack.c.l.b16 %v2947
        %v3119 = vunpack.c.h.b16 %v2947
        %v3120 = vunpack.c.l.b16 %v2948
        %v3121 = vunpack.c.h.b16 %v2948
        %v3122 = vunpack.c.l.b16 %v2949
        %v3123 = vunpack.c.h.b16 %v2949
        %v3124 = vunpack.c.l.b16 %v2950
        %v3125 = vunpack.c.h.b16 %v2950
        %v3126 = vunpack.c.l.b16 %v2951
        %v3127 = vunpack.c.h.b16 %v2951
        %v3128 = vunpack.c.l.b16 %v2952
        %v3129 = vunpack.c.h.b16 %v2952
        %v3130 = vunpack.c.l.b16 %v2953
        %v3131 = vunpack.c.h.b16 %v2953
        %v3132 = vunpack.c.l.b16 %v2954
        %v3133 = vunpack.c.h.b16 %v2954
        %v3134 = vunpack.c.l.b16 %v2955
        %v3135 = vunpack.c.h.b16 %v2955
        %v3136 = vunpack.c.l.b16 %v2956
        %v3137 = vunpack.c.h.b16 %v2956
        %v3138 = vunpack.c.l.b16 %v2957
        %v3139 = vunpack.c.h.b16 %v2957
        %v3140 = vunpack.c.l.b16 %v2958
        %v3141 = vunpack.c.h.b16 %v2958
        %v3142 = vunpack.c.l.b16 %v2959
        %v3143 = vunpack.c.h.b16 %v2959
        %v3144 = vunpack.c.l.b16 %v2960
        %v3145 = vunpack.c.h.b16 %v2960
        %v3146 = vunpack.c.l.b16 %v2961
        %v3147 = vunpack.c.h.b16 %v2961
        %v3148 = vunpack.c.l.b16 %v2962
        %v3149 = vunpack.c.h.b16 %v2962
        %v3150 = vunpack.c.l.b16 %v2963
        %v3151 = vunpack.c.h.b16 %v2963
        %v3152 = vunpack.c.l.b16 %v2964
        %v3153 = vunpack.c.h.b16 %v2964
        %v3154 = vunpack.c.l.b16 %v2965
        %v3155 = vunpack.c.h.b16 %v2965
        %v3156 = vunpack.c.l.b16 %v2966
        %v3157 = vunpack.c.h.b16 %v2966
        %v3158 = vunpack.c.l.b16 %v2967
        %v3159 = vunpack.c.h.b16 %v2967
        %v3160 = vunpack.c.l.b16 %v2968
        %v3161 = vunpack.c.h.b16 %v2968
        %v3162 = vunpack.c.l.b16 %v2969
        %v3163 = vunpack.c.h.b16 %v2969
        %v3164 = vunpack.c.l.b16 %v2970
        %v3165 = vunpack.c.h.b16 %v2970
        %v3166 = vunpack.c.l.b16 %v2971
        %v3167 = vunpack.c.h.b16 %v2971
        %v3168 = vunpack.c.l.b16 %v2972
        %v3169 = vunpack.c.h.b16 %v2972
        %v3170 = vunpack.c.l.b16 %v2973
        %v3171 = vunpack.c.h.b16 %v2973
        %v3172 = vunpack.c.l.b16 %v2974
        %v3173 = vunpack.c.h.b16 %v2974
        %v3174 = vunpack.c.l.b16 %v2975
        %v3175 = vunpack.c.h.b16 %v2975
        %v3176 = vunpack.c.l.b16 %v2976
        %v3177 = vunpack.c.h.b16 %v2976
        %v3178 = vunpack.c.l.b16 %v2977
        %v3179 = vunpack.c.h.b16 %v2977
        %v3180 = vunpack.c.l.b16 %v2978
        %v3181 = vunpack.c.h.b16 %v2978
        %v3182 = vunpack.c.l.b16 %v2979
        %v3183 = vunpack.c.h.b16 %v2979
        %v3184 = vunpack.c.l.b16 %v2980
        %v3185 = vunpack.c.h.b16 %v2980
        %v3186 = vunpack.c.l.b16 %v2981
        %v3187 = vunpack.c.h.b16 %v2981
        %v3188 = vunpack.c.l.b16 %v2982
        %v3189 = vunpack.c.h.b16 %v2982
        %v3190 = vunpack.c.l.b16 %v2983
        %v3191 = vunpack.c.h.b16 %v2983
        %v3192 = vunpack.c.l.b16 %v2984
        %v3193 = vunpack.c.h.b16 %v2984
        %v3194 = vunpack.c.l.b16 %v2985
        %v3195 = vunpack.c.h.b16 %v2985
        %v3196 = vunpack.c.l.b16 %v2986
        %v3197 = vunpack.c.h.b16 %v2986
        %v3198 = vunpack.c.l.b16 %v2987
        %v3199 = vunpack.c.h.b16 %v2987
        %v3200 = vunpack.c.l.b16 %v2988
        %v3201 = vunpack.c.h.b16 %v2988
        %v3202 = vunpack.c.l.b16 %v2989
        %v3203 = vunpack.c.h.b16 %v2989
        %v3204 = vpack.c.b16 %v3080, %v3076
        %v3205 = vpack.c.b16 %v3081, %v3077
        %v3206 = vpack.c.b16 %v3082, %v3078
        %v3207 = vpack.c.b16 %v3083, %v3079
        %v3208 = vpack.c.b16 %v3088, %v3084
        %v3209 = vpack.c.b16 %v3089, %v3085
        %v3210 = vpack.c.b16 %v3090, %v3086
        %v3211 = vpack.c.b16 %v3091, %v3087
        %v3212 = vpack.c.b16 %v3096, %v3092
        %v3213 = vpack.c.b16 %v3097, %v3093
        %v3214 = vpack.c.b16 %v3098, %v3094
        %v3215 = vpack.c.b16 %v3099, %v3095
        %v3216 = vpack.c.b16 %v3104, %v3100
        %v3217 = vpack.c.b16 %v3105, %v3101
        %v3218 = vpack.c.b16 %v3106, %v3102
        %v3219 = vpack.c.b16 %v3107, %v3103
        %v3220 = vpack.c.b16 %v3112, %v3108
        %v3221 = vpack.c.b16 %v3113, %v3109
        %v3222 = vpack.c.b16 %v3114, %v3110
        %v3223 = vpack.c.b16 %v3115, %v3111
        %v3224 = vpack.c.b16 %v3120, %v3116
        %v3225 = vpack.c.b16 %v3121, %v3117
        %v3226 = vpack.c.b16 %v3122, %v3118
        %v3227 = vpack.c.b16 %v3123, %v3119
        %v3228 = vpack.c.b16 %v3128, %v3124
        %v3229 = vpack.c.b16 %v3129, %v3125
        %v3230 = vpack.c.b16 %v3130, %v3126
        %v3231 = vpack.c.b16 %v3131, %v3127
        %v3232 = vpack.c.b16 %v3136, %v3132
        %v3233 = vpack.c.b16 %v3137, %v3133
        %v3234 = vpack.c.b16 %v3138, %v3134
        %v3235 = vpack.c.b16 %v3139, %v3135
        %v3236 = vpack.c.b16 %v3144, %v3140
        %v3237 = vpack.c.b16 %v3145, %v3141
        %v3238 = vpack.c.b16 %v3146, %v3142
        %v3239 = vpack.c.b16 %v3147, %v3143
        %v3240 = vpack.c.b16 %v3152, %v3148
        %v3241 = vpack.c.b16 %v3153, %v3149
        %v3242 = vpack.c.b16 %v3154, %v3150
        %v3243 = vpack.c.b16 %v3155, %v3151
        %v3244 = vpack.c.b16 %v3160, %v3156
        %v3245 = vpack.c.b16 %v3161, %v3157
        %v3246 = vpack.c.b16 %v3162, %v3158
        %v3247 = vpack.c.b16 %v3163, %v3159
        %v3248 = vpack.c.b16 %v3168, %v3164
        %v3249 = vpack.c.b16 %v3169, %v3165
        %v3250 = vpack.c.b16 %v3170, %v3166
        %v3251 = vpack.c.b16 %v3171, %v3167
        %v3252 = vpack.c.b16 %v3176, %v3172
        %v3253 = vpack.c.b16 %v3177, %v3173
        %v3254 = vpack.c.b16 %v3178, %v3174
        %v3255 = vpack.c.b16 %v3179, %v3175
        %v3256 = vpack.c.b16 %v3184, %v3180
        %v3257 = vpack.c.b16 %v3185, %v3181
        %v3258 = vpack.c.b16 %v3186, %v3182
        %v3259 = vpack.c.b16 %v3187, %v3183
        %v3260 = vpack.c.b16 %v3192, %v3188
        %v3261 = vpack.c.b16 %v3193, %v3189
        %v3262 = vpack.c.b16 %v3194, %v3190
        %v3263 = vpack.c.b16 %v3195, %v3191
        %v3264 = vpack.c.b16 %v3200, %v3196
        %v3265 = vpack.c.b16 %v3201, %v3197
        %v3266 = vpack.c.b16 %v3202, %v3198
        %v3267 = vpack.c.b16 %v3203, %v3199
        %3332 = vmatprep.subr.bf16.mxu0 %v3233
        %3333 = vmatpush1.bf16.msra.mxu0 %v3232
        %3334 = vmatprep.subr.bf16.mxu0 %v3229
        %3335 = vmatpush1.bf16.msra.mxu0 %v3228
        %3336 = vmatprep.subr.bf16.mxu0 %v3225
        %3337 = vmatpush1.bf16.msra.mxu0 %v3224
        %3338 = vmatprep.subr.bf16.mxu0 %v3221
        %3339 = vmatpush1.bf16.msra.mxu0 %v3220
        %3340 = vmatprep.subr.bf16.mxu0 %v3217
        %3341 = vmatpush1.bf16.msra.mxu0 %v3216
        %3342 = vmatprep.subr.bf16.mxu0 %v3213
        %3343 = vmatpush1.bf16.msra.mxu0 %v3212
        %3344 = vmatprep.subr.bf16.mxu0 %v3209
        %3345 = vmatpush1.bf16.msra.mxu0 %v3208
        %3346 = vmatprep.subr.bf16.mxu0 %v3205
        %3347 = vmatpush1.bf16.msra.mxu0 %v3204
        %3348 = vmatprep.subr.bf16.mxu0 %v3265
        %3349 = vmatpush2.bf16.msra.mxu0 %v3264
        %3350 = vmatprep.subr.bf16.mxu0 %v3261
        %3351 = vmatpush2.bf16.msra.mxu0 %v3260
        %3352 = vmatprep.subr.bf16.mxu0 %v3257
        %3353 = vmatpush2.bf16.msra.mxu0 %v3256
        %3354 = vmatprep.subr.bf16.mxu0 %v3253
        %3355 = vmatpush2.bf16.msra.mxu0 %v3252
        %3356 = vmatprep.subr.bf16.mxu0 %v3249
        %3357 = vmatpush2.bf16.msra.mxu0 %v3248
        %3358 = vmatprep.subr.bf16.mxu0 %v3245
        %3359 = vmatpush2.bf16.msra.mxu0 %v3244
        %3360 = vmatprep.subr.bf16.mxu0 %v3241
        %3361 = vmatpush2.bf16.msra.mxu0 %v3240
        %3362 = vmatprep.subr.bf16.mxu0 %v3237
        %3363 = vmatpush2.bf16.msra.mxu0 %v3236
        %3364 = vmatprep.mubr.bf16.mxu0 %v2925
        %3365 = vmatmul.mubr.bf16.gmra.mxu0 %v2924
        %v3366 = vpop.f32.mrf.mxu0
        %v3367 = vadd.f32 %v2995, %v3366
        %v3368 = vpop.f32.mrf.mxu0
        %v3369 = vadd.f32 %v2999, %v3368
        %v3370 = vpop.f32.mrf.mxu0
        %v3371 = vadd.f32 %v2995, %v3370
        %v3372 = vpop.f32.mrf.mxu0
        %v3373 = vadd.f32 %v2999, %v3372
        %3374 = vdwg.mxu0
        %3375 = vmatprep.subr.bf16.mxu0 %v3235
        %3376 = vmatpush1.bf16.msra.mxu0 %v3234
        %3377 = vmatprep.subr.bf16.mxu0 %v3231
        %3378 = vmatpush1.bf16.msra.mxu0 %v3230
        %3379 = vmatprep.subr.bf16.mxu0 %v3227
        %3380 = vmatpush1.bf16.msra.mxu0 %v3226
        %3381 = vmatprep.subr.bf16.mxu0 %v3223
        %3382 = vmatpush1.bf16.msra.mxu0 %v3222
        %3383 = vmatprep.subr.bf16.mxu0 %v3219
        %3384 = vmatpush1.bf16.msra.mxu0 %v3218
        %3385 = vmatprep.subr.bf16.mxu0 %v3215
        %3386 = vmatpush1.bf16.msra.mxu0 %v3214
        %3387 = vmatprep.subr.bf16.mxu0 %v3211
        %3388 = vmatpush1.bf16.msra.mxu0 %v3210
        %3389 = vmatprep.subr.bf16.mxu0 %v3207
        %3390 = vmatpush1.bf16.msra.mxu0 %v3206
        %3391 = vmatprep.subr.bf16.mxu0 %v3267
        %3392 = vmatpush2.bf16.msra.mxu0 %v3266
        %3393 = vmatprep.subr.bf16.mxu0 %v3263
        %3394 = vmatpush2.bf16.msra.mxu0 %v3262
        %3395 = vmatprep.subr.bf16.mxu0 %v3259
        %3396 = vmatpush2.bf16.msra.mxu0 %v3258
        %3397 = vmatprep.subr.bf16.mxu0 %v3255
        %3398 = vmatpush2.bf16.msra.mxu0 %v3254
        %3399 = vmatprep.subr.bf16.mxu0 %v3251
        %3400 = vmatpush2.bf16.msra.mxu0 %v3250
        %3401 = vmatprep.subr.bf16.mxu0 %v3247
        %3402 = vmatpush2.bf16.msra.mxu0 %v3246
        %3403 = vmatprep.subr.bf16.mxu0 %v3243
        %3404 = vmatpush2.bf16.msra.mxu0 %v3242
        %3405 = vmatprep.subr.bf16.mxu0 %v3239
        %3406 = vmatpush2.bf16.msra.mxu0 %v3238
        %3407 = vmatprep.mubr.bf16.mxu0 %v2925
        %3408 = vmatmul.mubr.bf16.gmra.mxu0 %v2924
        %v3409 = vpop.f32.mrf.mxu0
        %v3410 = vadd.f32 %v3003, %v3409
        %v3411 = vpop.f32.mrf.mxu0
        %v3412 = vadd.f32 %v3007, %v3411
        %v3413 = vpop.f32.mrf.mxu0
        %v3414 = vadd.f32 %v3003, %v3413
        %v3415 = vpop.f32.mrf.mxu0
        %v3416 = vadd.f32 %v3007, %v3415
        %3417 = vdwg.mxu0
        %v3418 = vmax.f32 %v3367, 0.0
        %v3419 = vmax.f32 %v3369, 0.0
        %v3420 = vmax.f32 %v3410, 0.0
        %v3421 = vmax.f32 %v3412, 0.0
        %v3422 = vmax.f32 %v3371, 0.0
        %v3423 = vmax.f32 %v3373, 0.0
        %v3424 = vmax.f32 %v3414, 0.0
        %v3425 = vmax.f32 %v3416, 0.0
        %v3426 = vpack.c.bf16 %v3422, %v3418
        %v3427 = vpack.c.bf16 %v3423, %v3419
        %v3428 = vpack.c.bf16 %v3424, %v3420
        %v3429 = vpack.c.bf16 %v3425, %v3421
        %v3430 = vld [vmem:[%s833] sm:$0xff]
        %v3431 = vld [vmem:[%s833 + $0x8] sm:$0xff]
        %v3432 = vld [vmem:[%s833 + $0x10] sm:$0xff]
        %v3433 = vld [vmem:[%s833 + $0x18] sm:$0xff]
        %v3434 = vld [vmem:[%s833 + $0x20] sm:$0xff]
        %v3435 = vld [vmem:[%s833 + $0x28] sm:$0xff]
        %v3436 = vld [vmem:[%s833 + $0x30] sm:$0xff]
        %v3437 = vld [vmem:[%s833 + $0x38] sm:$0xff]
        %v3438 = vld [vmem:[%s833 + $0x40] sm:$0xff]
        %v3439 = vld [vmem:[%s833 + $0x48] sm:$0xff]
        %v3440 = vld [vmem:[%s833 + $0x50] sm:$0xff]
        %v3441 = vld [vmem:[%s833 + $0x58] sm:$0xff]
        %v3442 = vld [vmem:[%s833 + $0x60] sm:$0xff]
        %v3443 = vld [vmem:[%s833 + $0x68] sm:$0xff]
        %v3444 = vld [vmem:[%s833 + $0x70] sm:$0xff]
        %v3445 = vld [vmem:[%s833 + $0x78] sm:$0xff]
        %v3446 = vld [vmem:[%s833 + $0x80] sm:$0xff]
        %v3447 = vld [vmem:[%s833 + $0x88] sm:$0xff]
        %v3448 = vld [vmem:[%s833 + $0x90] sm:$0xff]
        %v3449 = vld [vmem:[%s833 + $0x98] sm:$0xff]
        %v3450 = vld [vmem:[%s833 + $0xa0] sm:$0xff]
        %v3451 = vld [vmem:[%s833 + $0xa8] sm:$0xff]
        %v3452 = vld [vmem:[%s833 + $0xb0] sm:$0xff]
        %v3453 = vld [vmem:[%s833 + $0xb8] sm:$0xff]
        %v3454 = vld [vmem:[%s833 + $0xc0] sm:$0xff]
        %v3455 = vld [vmem:[%s833 + $0xc8] sm:$0xff]
        %v3456 = vld [vmem:[%s833 + $0xd0] sm:$0xff]
        %v3457 = vld [vmem:[%s833 + $0xd8] sm:$0xff]
        %v3458 = vld [vmem:[%s833 + $0xe0] sm:$0xff]
        %v3459 = vld [vmem:[%s833 + $0xe8] sm:$0xff]
        %v3460 = vld [vmem:[%s833 + $0xf0] sm:$0xff]
        %v3461 = vld [vmem:[%s833 + $0xf8] sm:$0xff]
        %v3462 = vld [vmem:[%s833 + $0x100] sm:$0xff]
        %v3463 = vld [vmem:[%s833 + $0x108] sm:$0xff]
        %v3464 = vld [vmem:[%s833 + $0x110] sm:$0xff]
        %v3465 = vld [vmem:[%s833 + $0x118] sm:$0xff]
        %v3466 = vld [vmem:[%s833 + $0x120] sm:$0xff]
        %v3467 = vld [vmem:[%s833 + $0x128] sm:$0xff]
        %v3468 = vld [vmem:[%s833 + $0x130] sm:$0xff]
        %v3469 = vld [vmem:[%s833 + $0x138] sm:$0xff]
        %v3470 = vld [vmem:[%s833 + $0x140] sm:$0xff]
        %v3471 = vld [vmem:[%s833 + $0x148] sm:$0xff]
        %v3472 = vld [vmem:[%s833 + $0x150] sm:$0xff]
        %v3473 = vld [vmem:[%s833 + $0x158] sm:$0xff]
        %v3474 = vld [vmem:[%s833 + $0x160] sm:$0xff]
        %v3475 = vld [vmem:[%s833 + $0x168] sm:$0xff]
        %v3476 = vld [vmem:[%s833 + $0x170] sm:$0xff]
        %v3477 = vld [vmem:[%s833 + $0x178] sm:$0xff]
        %v3478 = vld [vmem:[%s833 + $0x180] sm:$0xff]
        %v3479 = vld [vmem:[%s833 + $0x188] sm:$0xff]
        %v3480 = vld [vmem:[%s833 + $0x190] sm:$0xff]
        %v3481 = vld [vmem:[%s833 + $0x198] sm:$0xff]
        %v3482 = vld [vmem:[%s833 + $0x1a0] sm:$0xff]
        %v3483 = vld [vmem:[%s833 + $0x1a8] sm:$0xff]
        %v3484 = vld [vmem:[%s833 + $0x1b0] sm:$0xff]
        %v3485 = vld [vmem:[%s833 + $0x1b8] sm:$0xff]
        %v3486 = vld [vmem:[%s833 + $0x1c0] sm:$0xff]
        %v3487 = vld [vmem:[%s833 + $0x1c8] sm:$0xff]
        %v3488 = vld [vmem:[%s833 + $0x1d0] sm:$0xff]
        %v3489 = vld [vmem:[%s833 + $0x1d8] sm:$0xff]
        %v3490 = vld [vmem:[%s833 + $0x1e0] sm:$0xff]
        %v3491 = vld [vmem:[%s833 + $0x1e8] sm:$0xff]
        %v3492 = vld [vmem:[%s833 + $0x1f0] sm:$0xff]
        %v3493 = vld [vmem:[%s833 + $0x1f8] sm:$0xff]
        %v3494 = vld [vmem:[%s842] sm:$0x3]
        %v3496 = vlaneseq
        %v3497 = vshrl.u32 %v3496, 7
        %v3498 = vsub.s32 0, %v3497
        %v3499 = vrot.slane %v3494, %v3498
        %v3500 = vlaneseq
        %v3501 = vshrl.u32 %v3500, 7
        %v3502 = vsub.s32 1, %v3501
        %v3503 = vrot.slane %v3494, %v3502
        %v3570 = vunpack.c.l.b16 %v3430
        %v3571 = vunpack.c.h.b16 %v3430
        %v3572 = vunpack.c.l.b16 %v3431
        %v3573 = vunpack.c.h.b16 %v3431
        %v3574 = vunpack.c.l.b16 %v3432
        %v3575 = vunpack.c.h.b16 %v3432
        %v3576 = vunpack.c.l.b16 %v3433
        %v3577 = vunpack.c.h.b16 %v3433
        %v3578 = vunpack.c.l.b16 %v3434
        %v3579 = vunpack.c.h.b16 %v3434
        %v3580 = vunpack.c.l.b16 %v3435
        %v3581 = vunpack.c.h.b16 %v3435
        %v3582 = vunpack.c.l.b16 %v3436
        %v3583 = vunpack.c.h.b16 %v3436
        %v3584 = vunpack.c.l.b16 %v3437
        %v3585 = vunpack.c.h.b16 %v3437
        %v3586 = vunpack.c.l.b16 %v3438
        %v3587 = vunpack.c.h.b16 %v3438
        %v3588 = vunpack.c.l.b16 %v3439
        %v3589 = vunpack.c.h.b16 %v3439
        %v3590 = vunpack.c.l.b16 %v3440
        %v3591 = vunpack.c.h.b16 %v3440
        %v3592 = vunpack.c.l.b16 %v3441
        %v3593 = vunpack.c.h.b16 %v3441
        %v3594 = vunpack.c.l.b16 %v3442
        %v3595 = vunpack.c.h.b16 %v3442
        %v3596 = vunpack.c.l.b16 %v3443
        %v3597 = vunpack.c.h.b16 %v3443
        %v3598 = vunpack.c.l.b16 %v3444
        %v3599 = vunpack.c.h.b16 %v3444
        %v3600 = vunpack.c.l.b16 %v3445
        %v3601 = vunpack.c.h.b16 %v3445
        %v3602 = vunpack.c.l.b16 %v3446
        %v3603 = vunpack.c.h.b16 %v3446
        %v3604 = vunpack.c.l.b16 %v3447
        %v3605 = vunpack.c.h.b16 %v3447
        %v3606 = vunpack.c.l.b16 %v3448
        %v3607 = vunpack.c.h.b16 %v3448
        %v3608 = vunpack.c.l.b16 %v3449
        %v3609 = vunpack.c.h.b16 %v3449
        %v3610 = vunpack.c.l.b16 %v3450
        %v3611 = vunpack.c.h.b16 %v3450
        %v3612 = vunpack.c.l.b16 %v3451
        %v3613 = vunpack.c.h.b16 %v3451
        %v3614 = vunpack.c.l.b16 %v3452
        %v3615 = vunpack.c.h.b16 %v3452
        %v3616 = vunpack.c.l.b16 %v3453
        %v3617 = vunpack.c.h.b16 %v3453
        %v3618 = vunpack.c.l.b16 %v3454
        %v3619 = vunpack.c.h.b16 %v3454
        %v3620 = vunpack.c.l.b16 %v3455
        %v3621 = vunpack.c.h.b16 %v3455
        %v3622 = vunpack.c.l.b16 %v3456
        %v3623 = vunpack.c.h.b16 %v3456
        %v3624 = vunpack.c.l.b16 %v3457
        %v3625 = vunpack.c.h.b16 %v3457
        %v3626 = vunpack.c.l.b16 %v3458
        %v3627 = vunpack.c.h.b16 %v3458
        %v3628 = vunpack.c.l.b16 %v3459
        %v3629 = vunpack.c.h.b16 %v3459
        %v3630 = vunpack.c.l.b16 %v3460
        %v3631 = vunpack.c.h.b16 %v3460
        %v3632 = vunpack.c.l.b16 %v3461
        %v3633 = vunpack.c.h.b16 %v3461
        %v3634 = vunpack.c.l.b16 %v3462
        %v3635 = vunpack.c.h.b16 %v3462
        %v3636 = vunpack.c.l.b16 %v3463
        %v3637 = vunpack.c.h.b16 %v3463
        %v3638 = vunpack.c.l.b16 %v3464
        %v3639 = vunpack.c.h.b16 %v3464
        %v3640 = vunpack.c.l.b16 %v3465
        %v3641 = vunpack.c.h.b16 %v3465
        %v3642 = vunpack.c.l.b16 %v3466
        %v3643 = vunpack.c.h.b16 %v3466
        %v3644 = vunpack.c.l.b16 %v3467
        %v3645 = vunpack.c.h.b16 %v3467
        %v3646 = vunpack.c.l.b16 %v3468
        %v3647 = vunpack.c.h.b16 %v3468
        %v3648 = vunpack.c.l.b16 %v3469
        %v3649 = vunpack.c.h.b16 %v3469
        %v3650 = vunpack.c.l.b16 %v3470
        %v3651 = vunpack.c.h.b16 %v3470
        %v3652 = vunpack.c.l.b16 %v3471
        %v3653 = vunpack.c.h.b16 %v3471
        %v3654 = vunpack.c.l.b16 %v3472
        %v3655 = vunpack.c.h.b16 %v3472
        %v3656 = vunpack.c.l.b16 %v3473
        %v3657 = vunpack.c.h.b16 %v3473
        %v3658 = vunpack.c.l.b16 %v3474
        %v3659 = vunpack.c.h.b16 %v3474
        %v3660 = vunpack.c.l.b16 %v3475
        %v3661 = vunpack.c.h.b16 %v3475
        %v3662 = vunpack.c.l.b16 %v3476
        %v3663 = vunpack.c.h.b16 %v3476
        %v3664 = vunpack.c.l.b16 %v3477
        %v3665 = vunpack.c.h.b16 %v3477
        %v3666 = vunpack.c.l.b16 %v3478
        %v3667 = vunpack.c.h.b16 %v3478
        %v3668 = vunpack.c.l.b16 %v3479
        %v3669 = vunpack.c.h.b16 %v3479
        %v3670 = vunpack.c.l.b16 %v3480
        %v3671 = vunpack.c.h.b16 %v3480
        %v3672 = vunpack.c.l.b16 %v3481
        %v3673 = vunpack.c.h.b16 %v3481
        %v3674 = vunpack.c.l.b16 %v3482
        %v3675 = vunpack.c.h.b16 %v3482
        %v3676 = vunpack.c.l.b16 %v3483
        %v3677 = vunpack.c.h.b16 %v3483
        %v3678 = vunpack.c.l.b16 %v3484
        %v3679 = vunpack.c.h.b16 %v3484
        %v3680 = vunpack.c.l.b16 %v3485
        %v3681 = vunpack.c.h.b16 %v3485
        %v3682 = vunpack.c.l.b16 %v3486
        %v3683 = vunpack.c.h.b16 %v3486
        %v3684 = vunpack.c.l.b16 %v3487
        %v3685 = vunpack.c.h.b16 %v3487
        %v3686 = vunpack.c.l.b16 %v3488
        %v3687 = vunpack.c.h.b16 %v3488
        %v3688 = vunpack.c.l.b16 %v3489
        %v3689 = vunpack.c.h.b16 %v3489
        %v3690 = vunpack.c.l.b16 %v3490
        %v3691 = vunpack.c.h.b16 %v3490
        %v3692 = vunpack.c.l.b16 %v3491
        %v3693 = vunpack.c.h.b16 %v3491
        %v3694 = vunpack.c.l.b16 %v3492
        %v3695 = vunpack.c.h.b16 %v3492
        %v3696 = vunpack.c.l.b16 %v3493
        %v3697 = vunpack.c.h.b16 %v3493
        %v3698 = vpack.c.b16 %v3572, %v3570
        %v3699 = vpack.c.b16 %v3573, %v3571
        %v3700 = vpack.c.b16 %v3576, %v3574
        %v3701 = vpack.c.b16 %v3577, %v3575
        %v3702 = vpack.c.b16 %v3580, %v3578
        %v3703 = vpack.c.b16 %v3581, %v3579
        %v3704 = vpack.c.b16 %v3584, %v3582
        %v3705 = vpack.c.b16 %v3585, %v3583
        %v3706 = vpack.c.b16 %v3588, %v3586
        %v3707 = vpack.c.b16 %v3589, %v3587
        %v3708 = vpack.c.b16 %v3592, %v3590
        %v3709 = vpack.c.b16 %v3593, %v3591
        %v3710 = vpack.c.b16 %v3596, %v3594
        %v3711 = vpack.c.b16 %v3597, %v3595
        %v3712 = vpack.c.b16 %v3600, %v3598
        %v3713 = vpack.c.b16 %v3601, %v3599
        %v3714 = vpack.c.b16 %v3604, %v3602
        %v3715 = vpack.c.b16 %v3605, %v3603
        %v3716 = vpack.c.b16 %v3608, %v3606
        %v3717 = vpack.c.b16 %v3609, %v3607
        %v3718 = vpack.c.b16 %v3612, %v3610
        %v3719 = vpack.c.b16 %v3613, %v3611
        %v3720 = vpack.c.b16 %v3616, %v3614
        %v3721 = vpack.c.b16 %v3617, %v3615
        %v3722 = vpack.c.b16 %v3620, %v3618
        %v3723 = vpack.c.b16 %v3621, %v3619
        %v3724 = vpack.c.b16 %v3624, %v3622
        %v3725 = vpack.c.b16 %v3625, %v3623
        %v3726 = vpack.c.b16 %v3628, %v3626
        %v3727 = vpack.c.b16 %v3629, %v3627
        %v3728 = vpack.c.b16 %v3632, %v3630
        %v3729 = vpack.c.b16 %v3633, %v3631
        %v3730 = vpack.c.b16 %v3636, %v3634
        %v3731 = vpack.c.b16 %v3637, %v3635
        %v3732 = vpack.c.b16 %v3640, %v3638
        %v3733 = vpack.c.b16 %v3641, %v3639
        %v3734 = vpack.c.b16 %v3644, %v3642
        %v3735 = vpack.c.b16 %v3645, %v3643
        %v3736 = vpack.c.b16 %v3648, %v3646
        %v3737 = vpack.c.b16 %v3649, %v3647
        %v3738 = vpack.c.b16 %v3652, %v3650
        %v3739 = vpack.c.b16 %v3653, %v3651
        %v3740 = vpack.c.b16 %v3656, %v3654
        %v3741 = vpack.c.b16 %v3657, %v3655
        %v3742 = vpack.c.b16 %v3660, %v3658
        %v3743 = vpack.c.b16 %v3661, %v3659
        %v3744 = vpack.c.b16 %v3664, %v3662
        %v3745 = vpack.c.b16 %v3665, %v3663
        %v3746 = vpack.c.b16 %v3668, %v3666
        %v3747 = vpack.c.b16 %v3669, %v3667
        %v3748 = vpack.c.b16 %v3672, %v3670
        %v3749 = vpack.c.b16 %v3673, %v3671
        %v3750 = vpack.c.b16 %v3676, %v3674
        %v3751 = vpack.c.b16 %v3677, %v3675
        %v3752 = vpack.c.b16 %v3680, %v3678
        %v3753 = vpack.c.b16 %v3681, %v3679
        %v3754 = vpack.c.b16 %v3684, %v3682
        %v3755 = vpack.c.b16 %v3685, %v3683
        %v3756 = vpack.c.b16 %v3688, %v3686
        %v3757 = vpack.c.b16 %v3689, %v3687
        %v3758 = vpack.c.b16 %v3692, %v3690
        %v3759 = vpack.c.b16 %v3693, %v3691
        %v3760 = vpack.c.b16 %v3696, %v3694
        %v3761 = vpack.c.b16 %v3697, %v3695
        %3826 = vmatprep.subr.bf16.mxu0 %v3713
        %3827 = vmatpush1.bf16.msra.mxu0 %v3712
        %3828 = vmatprep.subr.bf16.mxu0 %v3711
        %3829 = vmatpush1.bf16.msra.mxu0 %v3710
        %3830 = vmatprep.subr.bf16.mxu0 %v3709
        %3831 = vmatpush1.bf16.msra.mxu0 %v3708
        %3832 = vmatprep.subr.bf16.mxu0 %v3707
        %3833 = vmatpush1.bf16.msra.mxu0 %v3706
        %3834 = vmatprep.subr.bf16.mxu0 %v3705
        %3835 = vmatpush1.bf16.msra.mxu0 %v3704
        %3836 = vmatprep.subr.bf16.mxu0 %v3703
        %3837 = vmatpush1.bf16.msra.mxu0 %v3702
        %3838 = vmatprep.subr.bf16.mxu0 %v3701
        %3839 = vmatpush1.bf16.msra.mxu0 %v3700
        %3840 = vmatprep.subr.bf16.mxu0 %v3699
        %3841 = vmatpush1.bf16.msra.mxu0 %v3698
        %3842 = vmatprep.subr.bf16.mxu0 %v3729
        %3843 = vmatpush2.bf16.msra.mxu0 %v3728
        %3844 = vmatprep.subr.bf16.mxu0 %v3727
        %3845 = vmatpush2.bf16.msra.mxu0 %v3726
        %3846 = vmatprep.subr.bf16.mxu0 %v3725
        %3847 = vmatpush2.bf16.msra.mxu0 %v3724
        %3848 = vmatprep.subr.bf16.mxu0 %v3723
        %3849 = vmatpush2.bf16.msra.mxu0 %v3722
        %3850 = vmatprep.subr.bf16.mxu0 %v3721
        %3851 = vmatpush2.bf16.msra.mxu0 %v3720
        %3852 = vmatprep.subr.bf16.mxu0 %v3719
        %3853 = vmatpush2.bf16.msra.mxu0 %v3718
        %3854 = vmatprep.subr.bf16.mxu0 %v3717
        %3855 = vmatpush2.bf16.msra.mxu0 %v3716
        %3856 = vmatprep.subr.bf16.mxu0 %v3715
        %3857 = vmatpush2.bf16.msra.mxu0 %v3714
        %3858 = vmatprep.mubr.bf16.mxu0 %v3427
        %3859 = vmatmul.mubr.bf16.gmra.mxu0 %v3426
        %v3860 = vpop.f32.mrf.mxu0
        %v3861 = vadd.f32 %v3499, %v3860
        %v3862 = vpop.f32.mrf.mxu0
        %v3863 = vadd.f32 %v3503, %v3862
        %v3864 = vpop.f32.mrf.mxu0
        %v3865 = vadd.f32 %v3499, %v3864
        %v3866 = vpop.f32.mrf.mxu0
        %v3867 = vadd.f32 %v3503, %v3866
        %3868 = vdwg.mxu0
        %3869 = vmatprep.subr.bf16.mxu0 %v3745
        %3870 = vmatpush1.bf16.msra.mxu0 %v3744
        %3871 = vmatprep.subr.bf16.mxu0 %v3743
        %3872 = vmatpush1.bf16.msra.mxu0 %v3742
        %3873 = vmatprep.subr.bf16.mxu0 %v3741
        %3874 = vmatpush1.bf16.msra.mxu0 %v3740
        %3875 = vmatprep.subr.bf16.mxu0 %v3739
        %3876 = vmatpush1.bf16.msra.mxu0 %v3738
        %3877 = vmatprep.subr.bf16.mxu0 %v3737
        %3878 = vmatpush1.bf16.msra.mxu0 %v3736
        %3879 = vmatprep.subr.bf16.mxu0 %v3735
        %3880 = vmatpush1.bf16.msra.mxu0 %v3734
        %3881 = vmatprep.subr.bf16.mxu0 %v3733
        %3882 = vmatpush1.bf16.msra.mxu0 %v3732
        %3883 = vmatprep.subr.bf16.mxu0 %v3731
        %3884 = vmatpush1.bf16.msra.mxu0 %v3730
        %3885 = vmatprep.subr.bf16.mxu0 %v3761
        %3886 = vmatpush2.bf16.msra.mxu0 %v3760
        %3887 = vmatprep.subr.bf16.mxu0 %v3759
        %3888 = vmatpush2.bf16.msra.mxu0 %v3758
        %3889 = vmatprep.subr.bf16.mxu0 %v3757
        %3890 = vmatpush2.bf16.msra.mxu0 %v3756
        %3891 = vmatprep.subr.bf16.mxu0 %v3755
        %3892 = vmatpush2.bf16.msra.mxu0 %v3754
        %3893 = vmatprep.subr.bf16.mxu0 %v3753
        %3894 = vmatpush2.bf16.msra.mxu0 %v3752
        %3895 = vmatprep.subr.bf16.mxu0 %v3751
        %3896 = vmatpush2.bf16.msra.mxu0 %v3750
        %3897 = vmatprep.subr.bf16.mxu0 %v3749
        %3898 = vmatpush2.bf16.msra.mxu0 %v3748
        %3899 = vmatprep.subr.bf16.mxu0 %v3747
        %3900 = vmatpush2.bf16.msra.mxu0 %v3746
        %3901 = vmatprep.mubr.bf16.mxu0 %v3429
        %3902 = vmatmul.mubr.bf16.gmra.mxu0 %v3428
        %v3903 = vpop.f32.mrf.mxu0
        %v3904 = vadd.f32 %v3861, %v3903
        %v3905 = vpop.f32.mrf.mxu0
        %v3906 = vadd.f32 %v3863, %v3905
        %v3907 = vpop.f32.mrf.mxu0
        %v3908 = vadd.f32 %v3865, %v3907
        %v3909 = vpop.f32.mrf.mxu0
        %v3910 = vadd.f32 %v3867, %v3909
        %3911 = vdwg.mxu0
        %v3912 = vadd.f32 %v2920, %v3904
        %v3913 = vadd.f32 %v2921, %v3906
        %v3914 = vadd.f32 %v2922, %v3908
        %v3915 = vadd.f32 %v2923, %v3910
        %v3916 = vld [vmem:[%s797] sm:$0x3]
        %v3917 = vld [vmem:[%s806] sm:$0x3]
        %v3918 = vadd.f32 %v3912, %v3913
        %3919 = vadd.xlane.f32.xlu0 %v3918
        %v3920 = vpop.xlane.xlu0 %3919
        %v3921 = vadd.f32 %v3914, %v3915
        %3922 = vadd.xlane.f32.xlu0 %v3921
        %v3923 = vpop.xlane.xlu0 %3922
        %v3924 = vmul.f32 %v3920, %v2867
        %v3925 = vmul.f32 %v3923, %v2867
        %v3926 = vsub.f32 %v3912, %v3924
        %v3927 = vsub.f32 %v3913, %v3924
        %v3928 = vsub.f32 %v3914, %v3925
        %v3929 = vsub.f32 %v3915, %v3925
        %v3930 = vmul.f32 %v3926, %v3926
        %v3931 = vmul.f32 %v3927, %v3927
        %v3932 = vmul.f32 %v3928, %v3928
        %v3933 = vmul.f32 %v3929, %v3929
        %v3934 = vadd.f32 %v3930, %v3931
        %3935 = vadd.xlane.f32.xlu0 %v3934
        %v3936 = vpop.xlane.xlu0 %3935
        %v3937 = vadd.f32 %v3932, %v3933
        %3938 = vadd.xlane.f32.xlu0 %v3937
        %v3939 = vpop.xlane.xlu0 %3938
        %v3940 = vmul.f32 %v3936, %v2867
        %v3941 = vmul.f32 %v3939, %v2867
        %v3942 = vadd.f32 %v3940, 1e-05
        %v3943 = vadd.f32 %v3941, 1e-05
        %v3944 = vrsqrt.pop %v3942
        %v3945 = vrsqrt.pop %v3943
        %v3946 = vmul.f32 %v3926, %v3944
        %v3947 = vmul.f32 %v3927, %v3944
        %v3948 = vmul.f32 %v3928, %v3945
        %v3949 = vmul.f32 %v3929, %v3945
        %v3951 = vlaneseq
        %v3952 = vshrl.u32 %v3951, 7
        %v3953 = vsub.s32 0, %v3952
        %v3954 = vrot.slane %v3916, %v3953
        %v3955 = vlaneseq
        %v3956 = vshrl.u32 %v3955, 7
        %v3957 = vsub.s32 1, %v3956
        %v3958 = vrot.slane %v3916, %v3957
        %v3961 = vmul.f32 %v3946, %v3954
        %v3962 = vmul.f32 %v3947, %v3958
        %v3963 = vmul.f32 %v3948, %v3954
        %v3964 = vmul.f32 %v3949, %v3958
        %v3966 = vlaneseq
        %v3967 = vshrl.u32 %v3966, 7
        %v3968 = vsub.s32 0, %v3967
        %v3969 = vrot.slane %v3917, %v3968
        %v3970 = vlaneseq
        %v3971 = vshrl.u32 %v3970, 7
        %v3972 = vsub.s32 1, %v3971
        %v3973 = vrot.slane %v3917, %v3972
        %v3976 = vadd.f32 %v3961, %v3969
        %v3977 = vadd.f32 %v3962, %v3973
        %v3978 = vadd.f32 %v3963, %v3969
        %v3979 = vadd.f32 %v3964, %v3973
        %p3980 = scmp.lt.s32.totalorder %s47, 2
        // Predicated region
        $region145: #{tpu_custom_call.1} parent=79 // pred_check
          %p3981 = pneg %p3980
        $region146: #{tpu_custom_call.1} parent=79 // pred_check_branch
          %3983 = sbr.rel (%p3981) target = $region148
        $region147: #{tpu_custom_call.1} parent=79 // pred_region
          %3984 = vst [vmem:[#allocation26] sm:$0xff] %v3976
          %3985 = vst [vmem:[#allocation26 + $0x8] sm:$0xff] %v3977
          %3986 = vst [vmem:[#allocation26 + $0x10] sm:$0xff] %v3978
          %3987 = vst [vmem:[#allocation26 + $0x18] sm:$0xff] %v3979
        $region148: #{tpu_custom_call.1} parent=79 // pred_fallthru
          _
        %p3988 = scmp.eq.s32.totalorder %s47, 2
        // Predicated region
        $region149: #{tpu_custom_call.1} parent=79 // pred_check
          %p3989 = pneg %p3988
        $region150: #{tpu_custom_call.1} parent=79 // pred_check_branch
          %3991 = sbr.rel (%p3989) target = $region152
        $region151: #{tpu_custom_call.1} parent=79 // pred_region
          %v3992 = vld [vmem:[#allocation23] sm:$0x3]
          %v3993 = vld [vmem:[#allocation25] sm:$0x3]
          %v3994 = vadd.f32 %v3976, %v3977
          %3995 = vadd.xlane.f32.xlu0 %v3994
          %v3996 = vpop.xlane.xlu0 %3995
          %v3997 = vadd.f32 %v3978, %v3979
          %3998 = vadd.xlane.f32.xlu0 %v3997
          %v3999 = vpop.xlane.xlu0 %3998
          %v4000 = vmul.f32 %v3996, %v2867
          %v4001 = vmul.f32 %v3999, %v2867
          %v4002 = vsub.f32 %v3976, %v4000
          %v4003 = vsub.f32 %v3977, %v4000
          %v4004 = vsub.f32 %v3978, %v4001
          %v4005 = vsub.f32 %v3979, %v4001
          %v4006 = vmul.f32 %v4002, %v4002
          %v4007 = vmul.f32 %v4003, %v4003
          %v4008 = vmul.f32 %v4004, %v4004
          %v4009 = vmul.f32 %v4005, %v4005
          %v4010 = vadd.f32 %v4006, %v4007
          %4011 = vadd.xlane.f32.xlu0 %v4010
          %v4012 = vpop.xlane.xlu0 %4011
          %v4013 = vadd.f32 %v4008, %v4009
          %4014 = vadd.xlane.f32.xlu0 %v4013
          %v4015 = vpop.xlane.xlu0 %4014
          %v4016 = vmul.f32 %v4012, %v2867
          %v4017 = vmul.f32 %v4015, %v2867
          %v4018 = vadd.f32 %v4016, 1e-05
          %v4019 = vadd.f32 %v4017, 1e-05
          %v4020 = vrsqrt.pop %v4018
          %v4021 = vrsqrt.pop %v4019
          %v4022 = vmul.f32 %v4002, %v4020
          %v4023 = vmul.f32 %v4003, %v4020
          %v4024 = vmul.f32 %v4004, %v4021
          %v4025 = vmul.f32 %v4005, %v4021
          %v4027 = vlaneseq
          %v4028 = vshrl.u32 %v4027, 7
          %v4029 = vsub.s32 0, %v4028
          %v4030 = vrot.slane %v3992, %v4029
          %v4031 = vlaneseq
          %v4032 = vshrl.u32 %v4031, 7
          %v4033 = vsub.s32 1, %v4032
          %v4034 = vrot.slane %v3992, %v4033
          %v4037 = vmul.f32 %v4022, %v4030
          %v4038 = vmul.f32 %v4023, %v4034
          %v4039 = vmul.f32 %v4024, %v4030
          %v4040 = vmul.f32 %v4025, %v4034
          %v4042 = vlaneseq
          %v4043 = vshrl.u32 %v4042, 7
          %v4044 = vsub.s32 0, %v4043
          %v4045 = vrot.slane %v3993, %v4044
          %v4046 = vlaneseq
          %v4047 = vshrl.u32 %v4046, 7
          %v4048 = vsub.s32 1, %v4047
          %v4049 = vrot.slane %v3993, %v4048
          %v4052 = vadd.f32 %v4037, %v4045
          %v4053 = vadd.f32 %v4038, %v4049
          %v4054 = vadd.f32 %v4039, %v4045
          %v4055 = vadd.f32 %v4040, %v4049
          %4056 = vst [vmem:[#allocation26] sm:$0xff] %v4052
          %4057 = vst [vmem:[#allocation26 + $0x8] sm:$0xff] %v4053
          %4058 = vst [vmem:[#allocation26 + $0x10] sm:$0xff] %v4054
          %4059 = vst [vmem:[#allocation26 + $0x18] sm:$0xff] %v4055
        $region152: #{tpu_custom_call.1} parent=79 // pred_fallthru
          _
        // Predicated region
        $region153: #{tpu_custom_call.1} parent=79 // pred_check
          %p4060 = pneg %p435
        $region154: #{tpu_custom_call.1} parent=79 // pred_check_branch
          %4062 = sbr.rel (%p4060) target = $region156
        $region155: #{tpu_custom_call.1} parent=79 // pred_region
          %s4064 = ssub.s32 512, 512
          %4065 = vsyncadd [#allocation4], %s4064
          %s4066 = sshll.u32 [#allocation26], 4
          %s4067 = int_to_ptr.vmem [resolvable:$true] %s4066
          %4072 = dma.vmem_to_hbm [thread:$0]  %s4067, 512, %s15, [#allocation4], 256, 256, 16
        $region156: #{tpu_custom_call.1} parent=79 // pred_fallthru
          _
        // Predicated region
        $region157: #{tpu_custom_call.1} parent=79 // pred_check
          %p4073 = pneg %p435
        $region158: #{tpu_custom_call.1} parent=79 // pred_check_branch
          %4075 = sbr.rel (%p4073) target = $region160
        $region159: #{tpu_custom_call.1} parent=79 // pred_region
          %4076 = dma.done [#allocation4], 512
        $region160: #{tpu_custom_call.1} parent=79 // pred_fallthru
          _
      $region80: #{tpu_custom_call.1} parent=5 // pred_fallthru
        _
      %p4077 = scmp.le.s32.totalorder 2, %s42
      // Predicated region
      $region161: #{tpu_custom_call.1} parent=5 // pred_check
        %p4078 = pneg %p4077
      $region162: #{tpu_custom_call.1} parent=5 // pred_check_branch
        %4080 = sbr.rel (%p4078) target = $region164
      $region163: #{tpu_custom_call.1} parent=5 // pred_region
        %s4081 = ssub.s32 %s42, 2
      $region164: #{tpu_custom_call.1} parent=5 // pred_fallthru
        _
    $region6: #{tpu_custom_call.1} parent=1 // loop_footer
      %s46 = sadd.s32 1, %s42
    $region7: #{tpu_custom_call.1} parent=1 // loop_footer_branch
      %41 = sbr.rel target = $region3
    $region8: #{tpu_custom_call.1} parent=1 // loop_exit
      _
    %4082 = vsyncpa [#allocation3], 1
    %s4083 = scalar_lea.sflag [#allocation3], 1
    %4084 = vsyncpa %s4083, 1
    %4085 = vsyncpa [#allocation6], 1
    %s4086 = scalar_lea.sflag [#allocation6], 1
    %4087 = vsyncpa %s4086, 1
    %4088 = vsyncpa [#allocation9], 1
    %s4089 = scalar_lea.sflag [#allocation9], 1
    %4090 = vsyncpa %s4089, 1
    %4091 = vsyncpa [#allocation12], 1
    %s4092 = scalar_lea.sflag [#allocation12], 1
    %4093 = vsyncpa %s4092, 1
    %4094 = vsyncpa [#allocation15], 1
    %s4095 = scalar_lea.sflag [#allocation15], 1
    %4096 = vsyncpa %s4095, 1
    %4097 = vsyncpa [#allocation18], 1
    %s4098 = scalar_lea.sflag [#allocation18], 1
    %4099 = vsyncpa %s4098, 1
    %4100 = vsyncpa [#allocation21], 1
    %s4101 = scalar_lea.sflag [#allocation21], 1
    %4102 = vsyncpa %s4101, 1
    %4103 = vsyncpa [#allocation24], 1
    %4104 = vsyncpa [#allocation4], 1
    %s4105 = scalar_lea.sflag [#allocation4], 1
    %4106 = vsyncpa %s4105, 1

</llo_original>
